<compile_context>
chip_gen: v7x
topology: tpu7x:2x2x1
jax: 0.10.0
libtpu: 0.0.40
codegen_flags: <defaults>
</compile_context>

<pallas_src>
import functools

import jax
import jax.numpy as jnp
from jax.experimental import pallas as pl
from jax.experimental.pallas import tpu as pltpu


HIDDEN = 256          # encoder feature width (synthesized VMo / AMo)
PROJ_OUT = 1024       # TotalModel.projector output width (matches reference)
SUBLANE_BF16 = 16     # bf16 sublane tile — pad batch to a multiple of this


# ----------------------------------------------------------------------------
# Shared per-layer helper used by both kernel bodies.
# ----------------------------------------------------------------------------
def _linear_relu(x_bf16, w_bf16, b_f32):
    acc = jnp.dot(x_bf16, w_bf16, preferred_element_type=jnp.float32)
    return jnp.maximum(acc + b_f32, 0.0)          # bias / ReLU in f32


# ----------------------------------------------------------------------------
# Kernel A (training): both encoders + all four projectors, one grid step.
# ----------------------------------------------------------------------------
def _fused_train_kernel(xv_ref, wv1_ref, bv1_ref, wv2_ref, bv2_ref,
                        xa_ref, wa1_ref, ba1_ref, wa2_ref, ba2_ref,
                        pw_ref, pb_ref,
                        mv_ref, ma_ref, zv_ref, za_ref):
    # Video encoder: Linear+ReLU -> Linear+ReLU
    lv = _linear_relu(xv_ref[...].astype(jnp.bfloat16), wv1_ref[...], bv1_ref[...])
    hv = _linear_relu(lv.astype(jnp.bfloat16), wv2_ref[...], bv2_ref[...])
    # Audio encoder: Linear+ReLU -> Linear+ReLU
    la = _linear_relu(xa_ref[...].astype(jnp.bfloat16), wa1_ref[...], ba1_ref[...])
    ha = _linear_relu(la.astype(jnp.bfloat16), wa2_ref[...], ba2_ref[...])

    # Four independent projectors (fresh Linear each call in the reference):
    # order [l_v, l_a, h_v, h_a] -> [m_v, m_a, z_v, z_a]
    mv_ref[...] = _linear_relu(lv.astype(jnp.bfloat16), pw_ref[0], pb_ref[0])
    ma_ref[...] = _linear_relu(la.astype(jnp.bfloat16), pw_ref[1], pb_ref[1])
    zv_ref[...] = _linear_relu(hv.astype(jnp.bfloat16), pw_ref[2], pb_ref[2])
    za_ref[...] = _linear_relu(ha.astype(jnp.bfloat16), pw_ref[3], pb_ref[3])


# ----------------------------------------------------------------------------
# Kernel B (eval): encoders only, writes just h_v / h_a (no dead outputs).
# ----------------------------------------------------------------------------
def _fused_eval_kernel(xv_ref, wv1_ref, bv1_ref, wv2_ref, bv2_ref,
                       xa_ref, wa1_ref, ba1_ref, wa2_ref, ba2_ref,
                       hv_ref, ha_ref):
    lv = _linear_relu(xv_ref[...].astype(jnp.bfloat16), wv1_ref[...], bv1_ref[...])
    hv_ref[...] = _linear_relu(lv.astype(jnp.bfloat16), wv2_ref[...], bv2_ref[...])
    la = _linear_relu(xa_ref[...].astype(jnp.bfloat16), wa1_ref[...], ba1_ref[...])
    ha_ref[...] = _linear_relu(la.astype(jnp.bfloat16), wa2_ref[...], ba2_ref[...])


def _full_spec(shape):
    """Full-array block (single grid step) — whole tensor resident in VMEM."""
    nd = len(shape)
    return pl.BlockSpec(shape, lambda i, _nd=nd: (0,) * _nd)


def total_forward_train(xv, xa, vparams, aparams, proj_w, proj_b):
    """xv:(M,Kv) f32, xa:(M,Ka) f32, weights bf16, biases f32.
    Returns (m_v, m_a, z_v, z_a), each (M, PROJ_OUT) f32."""
    wv1, bv1, wv2, bv2 = vparams
    wa1, ba1, wa2, ba2 = aparams
    M, Kv = xv.shape
    Ka = xa.shape[1]
    H = wv1.shape[1]
    N = proj_w.shape[-1]

    return pl.pallas_call(
        _fused_train_kernel,
        out_shape=tuple(
            jax.ShapeDtypeStruct((M, N), jnp.float32) for _ in range(4)
        ),
        grid=(1,),
        in_specs=[
            _full_spec((M, Kv)), _full_spec((Kv, H)), _full_spec((1, H)),
            _full_spec((H, H)), _full_spec((1, H)),
            _full_spec((M, Ka)), _full_spec((Ka, H)), _full_spec((1, H)),
            _full_spec((H, H)), _full_spec((1, H)),
            _full_spec((4, H, N)), _full_spec((4, 1, N)),
        ],
        out_specs=tuple(_full_spec((M, N)) for _ in range(4)),
        compiler_params=pltpu.CompilerParams(
            dimension_semantics=("arbitrary",)
        ),
    )(xv, wv1, bv1, wv2, bv2, xa, wa1, ba1, wa2, ba2, proj_w, proj_b)


def total_forward_eval(xv, xa, vparams, aparams):
    """Eval path: returns (h_v, h_a), each (M, HIDDEN) f32."""
    wv1, bv1, wv2, bv2 = vparams
    wa1, ba1, wa2, ba2 = aparams
    M, Kv = xv.shape
    Ka = xa.shape[1]
    H = wv1.shape[1]

    return pl.pallas_call(
        _fused_eval_kernel,
        out_shape=tuple(
            jax.ShapeDtypeStruct((M, H), jnp.float32) for _ in range(2)
        ),
        grid=(1,),
        in_specs=[
            _full_spec((M, Kv)), _full_spec((Kv, H)), _full_spec((1, H)),
            _full_spec((H, H)), _full_spec((1, H)),
            _full_spec((M, Ka)), _full_spec((Ka, H)), _full_spec((1, H)),
            _full_spec((H, H)), _full_spec((1, H)),
        ],
        out_specs=tuple(_full_spec((M, H)) for _ in range(2)),
        compiler_params=pltpu.CompilerParams(
            dimension_semantics=("arbitrary",)
        ),
    )(xv, wv1, bv1, wv2, bv2, xa, wa1, ba1, wa2, ba2)


# ----------------------------------------------------------------------------
# Deterministic parameter construction (weights bf16, biases f32)
# ----------------------------------------------------------------------------
def _make_linear_params(key, in_dim, out_dim):
    kw, kb = jax.random.split(key)
    scale = 1.0 / jnp.sqrt(jnp.float32(in_dim))
    w = jax.random.uniform(kw, (in_dim, out_dim), jnp.float32, -scale, scale)
    b = jax.random.uniform(kb, (out_dim,), jnp.float32, -scale, scale)
    return w.astype(jnp.bfloat16), b


# ----------------------------------------------------------------------------
# Whole forward pass, jitted (ONE pallas_call + pad/flatten glue)
# ----------------------------------------------------------------------------
@functools.partial(jax.jit, static_argnames=("is_train",))
def _total_model_forward(params, mels, video, is_train):
    B = video.shape[0]
    m_pad = max(SUBLANE_BF16,
                ((B + SUBLANE_BF16 - 1) // SUBLANE_BF16) * SUBLANE_BF16)

    xv = video.reshape(B, -1)
    xa = mels.reshape(B, -1)
    xv = jnp.pad(xv, ((0, m_pad - B), (0, 0)))
    xa = jnp.pad(xa, ((0, m_pad - B), (0, 0)))

    if not is_train:
        h_v, h_a = total_forward_eval(xv, xa, params["video"], params["audio"])
        return h_v[:B], h_a[:B]

    m_v, m_a, z_v, z_a = total_forward_train(
        xv, xa, params["video"], params["audio"],
        params["proj_w"], params["proj_b"],
    )
    # reference training return order: (m_a, m_v, z_a, z_v)
    return m_a[:B], m_v[:B], z_a[:B], z_v[:B]


class TotalModelPallas:
    def __init__(self, video_flat_dim, audio_flat_dim, dropout=0.0,
                 is_train=True, seed=0):
        # TODO(synk): dropout from the PyTorch reference is not applied.
        del dropout
        self.is_train = is_train
        keys = jax.random.split(jax.random.PRNGKey(seed), 8)
        # Video encoder (VMo stand-in): two Linear+ReLU -> (l_v, h_v)
        vw1, vb1 = _make_linear_params(keys[0], video_flat_dim, HIDDEN)
        vw2, vb2 = _make_linear_params(keys[1], HIDDEN, HIDDEN)
        # Audio encoder (AMo stand-in): two Linear+ReLU -> (l_a, h_a)
        aw1, ab1 = _make_linear_params(keys[2], audio_flat_dim, HIDDEN)
        aw2, ab2 = _make_linear_params(keys[3], HIDDEN, HIDDEN)
        # Four independent projector Linear(HIDDEN, 1024) layers, stacked.
        pws, pbs = zip(*[_make_linear_params(keys[4 + i], HIDDEN, PROJ_OUT)
                         for i in range(4)])
        self.params = {
            "video": (vw1, vb1.reshape(1, -1), vw2, vb2.reshape(1, -1)),
            "audio": (aw1, ab1.reshape(1, -1), aw2, ab2.reshape(1, -1)),
            "proj_w": jnp.stack(pws, axis=0),                         # (4,256,1024) bf16
            "proj_b": jnp.stack([b.reshape(1, -1) for b in pbs], 0),  # (4,1,1024) f32
        }

    def forward(self, mels, video):
        return _total_model_forward(self.params, mels, video, self.is_train)


# ----------------------------------------------------------------------------
# Main
# ----------------------------------------------------------------------------
if __name__ == "__main__":
    key = jax.random.PRNGKey(0)
    k_video, k_mels = jax.random.split(key)

    B, C, H, W = 2, 4, 16, 16          # video (NCHW)
    N_MELS, T = 16, 8                  # mel spectrogram

    video = jax.random.normal(k_video, (B, C, H, W), jnp.float32)
    mels = jax.random.normal(k_mels, (B, N_MELS, T), jnp.float32)

    model = TotalModelPallas(
        video_flat_dim=C * H * W, audio_flat_dim=N_MELS * T,
        dropout=0.1, is_train=True, seed=0,
    )

    m_a, m_v, z_a, z_v = model.forward(mels, video)
    jax.block_until_ready((m_a, m_v, z_a, z_v))

    # basic sanity checks
    assert m_a.shape == (B, PROJ_OUT) and m_v.shape == (B, PROJ_OUT)
    assert z_a.shape == (B, PROJ_OUT) and z_v.shape == (B, PROJ_OUT)
    assert bool(jnp.all(m_a >= 0)) and bool(jnp.all(z_v >= 0))  # ReLU outputs
    assert bool(jnp.all(jnp.isfinite(m_v))) and bool(jnp.all(jnp.isfinite(z_a)))

    # eval path returns the high-level features
    model_eval = TotalModelPallas(
        video_flat_dim=C * H * W, audio_flat_dim=N_MELS * T,
        dropout=0.1, is_train=False, seed=0,
    )
    h_v, h_a = model_eval.forward(mels, video)
    jax.block_until_ready((h_v, h_a))
    assert h_v.shape == (B, HIDDEN) and h_a.shape == (B, HIDDEN)
    assert bool(jnp.all(h_v >= 0)) and bool(jnp.all(h_a >= 0))

    print("KERNEL_OK")
</pallas_src>

<mosaic_0001>
module attributes {stable_mosaic.version = 11 : i64} {
  func.func @_fused_train_kernel(%arg0: i32, %arg1: memref<16x1024xf32, #tpu.memory_space<vmem>>, %arg2: memref<1024x256xbf16, #tpu.memory_space<vmem>>, %arg3: memref<1x256xf32, #tpu.memory_space<vmem>>, %arg4: memref<256x256xbf16, #tpu.memory_space<vmem>>, %arg5: memref<1x256xf32, #tpu.memory_space<vmem>>, %arg6: memref<16x128xf32, #tpu.memory_space<vmem>>, %arg7: memref<128x256xbf16, #tpu.memory_space<vmem>>, %arg8: memref<1x256xf32, #tpu.memory_space<vmem>>, %arg9: memref<256x256xbf16, #tpu.memory_space<vmem>>, %arg10: memref<1x256xf32, #tpu.memory_space<vmem>>, %arg11: memref<4x256x1024xbf16, #tpu.memory_space<vmem>>, %arg12: memref<4x1x1024xf32, #tpu.memory_space<vmem>>, %arg13: memref<16x1024xf32, #tpu.memory_space<vmem>>, %arg14: memref<16x1024xf32, #tpu.memory_space<vmem>>, %arg15: memref<16x1024xf32, #tpu.memory_space<vmem>>, %arg16: memref<16x1024xf32, #tpu.memory_space<vmem>>) attributes {dimension_semantics = [#tpu.dimension_semantics<arbitrary>], iteration_bounds = array<i64: 1>, scalar_prefetch = 0 : i64, scratch_operands = 0 : i64, tpu.core_type = #tpu.core_type<tc>, window_params = [{pipeline_mode = #tpu.pipeline_mode<synchronous>, transform_indices = @transform_0, window_bounds = array<i64: 16, 1024>}, {pipeline_mode = #tpu.pipeline_mode<synchronous>, transform_indices = @transform_1, window_bounds = array<i64: 1024, 256>}, {pipeline_mode = #tpu.pipeline_mode<synchronous>, transform_indices = @transform_2, window_bounds = array<i64: 1, 256>}, {pipeline_mode = #tpu.pipeline_mode<synchronous>, transform_indices = @transform_3, window_bounds = array<i64: 256, 256>}, {pipeline_mode = #tpu.pipeline_mode<synchronous>, transform_indices = @transform_4, window_bounds = array<i64: 1, 256>}, {pipeline_mode = #tpu.pipeline_mode<synchronous>, transform_indices = @transform_5, window_bounds = array<i64: 16, 128>}, {pipeline_mode = #tpu.pipeline_mode<synchronous>, transform_indices = @transform_6, window_bounds = array<i64: 128, 256>}, {pipeline_mode = #tpu.pipeline_mode<synchronous>, transform_indices = @transform_7, window_bounds = array<i64: 1, 256>}, {pipeline_mode = #tpu.pipeline_mode<synchronous>, transform_indices = @transform_8, window_bounds = array<i64: 256, 256>}, {pipeline_mode = #tpu.pipeline_mode<synchronous>, transform_indices = @transform_9, window_bounds = array<i64: 1, 256>}, {pipeline_mode = #tpu.pipeline_mode<synchronous>, transform_indices = @transform_10, window_bounds = array<i64: 4, 256, 1024>}, {pipeline_mode = #tpu.pipeline_mode<synchronous>, transform_indices = @transform_11, window_bounds = array<i64: 4, 1, 1024>}, {pipeline_mode = #tpu.pipeline_mode<synchronous>, transform_indices = @transform_12, window_bounds = array<i64: 16, 1024>}, {pipeline_mode = #tpu.pipeline_mode<synchronous>, transform_indices = @transform_13, window_bounds = array<i64: 16, 1024>}, {pipeline_mode = #tpu.pipeline_mode<synchronous>, transform_indices = @transform_14, window_bounds = array<i64: 16, 1024>}, {pipeline_mode = #tpu.pipeline_mode<synchronous>, transform_indices = @transform_15, window_bounds = array<i64: 16, 1024>}]} {
    %c0 = arith.constant 0 : index
    %c0_0 = arith.constant 0 : index
    %0 = vector.load %arg1[%c0, %c0_0] : memref<16x1024xf32, #tpu.memory_space<vmem>>, vector<16x1024xf32>
    %1 = arith.truncf %0 : vector<16x1024xf32> to vector<16x1024xbf16>
    %c0_1 = arith.constant 0 : index
    %c0_2 = arith.constant 0 : index
    %2 = vector.load %arg2[%c0_1, %c0_2] : memref<1024x256xbf16, #tpu.memory_space<vmem>>, vector<1024x256xbf16>
    %c0_3 = arith.constant 0 : index
    %c0_4 = arith.constant 0 : index
    %3 = vector.load %arg3[%c0_3, %c0_4] : memref<1x256xf32, #tpu.memory_space<vmem>>, vector<1x256xf32>
    %cst = arith.constant dense<0.000000e+00> : vector<16x256xf32>
    %4 = tpu.matmul %1, %2, %cst {dimension_numbers = #tpu.dot_dimension_numbers<[1], [0], [0], [1], [0, 0, 1, 1], [], []>} : vector<16x1024xbf16>, vector<1024x256xbf16>, vector<16x256xf32> -> vector<16x256xf32>
    %5 = vector.broadcast %3 : vector<1x256xf32> to vector<16x256xf32>
    %6 = arith.addf %4, %5 : vector<16x256xf32>
    %cst_5 = arith.constant 0.000000e+00 : f32
    %7 = vector.broadcast %cst_5 : f32 to vector<16x256xf32>
    %8 = arith.maximumf %6, %7 : vector<16x256xf32>
    %9 = arith.truncf %8 : vector<16x256xf32> to vector<16x256xbf16>
    %c0_6 = arith.constant 0 : index
    %c0_7 = arith.constant 0 : index
    %10 = vector.load %arg4[%c0_6, %c0_7] : memref<256x256xbf16, #tpu.memory_space<vmem>>, vector<256x256xbf16>
    %c0_8 = arith.constant 0 : index
    %c0_9 = arith.constant 0 : index
    %11 = vector.load %arg5[%c0_8, %c0_9] : memref<1x256xf32, #tpu.memory_space<vmem>>, vector<1x256xf32>
    %cst_10 = arith.constant dense<0.000000e+00> : vector<16x256xf32>
    %12 = tpu.matmul %9, %10, %cst_10 {dimension_numbers = #tpu.dot_dimension_numbers<[1], [0], [0], [1], [0, 0, 1, 1], [], []>} : vector<16x256xbf16>, vector<256x256xbf16>, vector<16x256xf32> -> vector<16x256xf32>
    %13 = vector.broadcast %11 : vector<1x256xf32> to vector<16x256xf32>
    %14 = arith.addf %12, %13 : vector<16x256xf32>
    %cst_11 = arith.constant 0.000000e+00 : f32
    %15 = vector.broadcast %cst_11 : f32 to vector<16x256xf32>
    %16 = arith.maximumf %14, %15 : vector<16x256xf32>
    %c0_12 = arith.constant 0 : index
    %c0_13 = arith.constant 0 : index
    %17 = vector.load %arg6[%c0_12, %c0_13] : memref<16x128xf32, #tpu.memory_space<vmem>>, vector<16x128xf32>
    %18 = arith.truncf %17 : vector<16x128xf32> to vector<16x128xbf16>
    %c0_14 = arith.constant 0 : index
    %c0_15 = arith.constant 0 : index
    %19 = vector.load %arg7[%c0_14, %c0_15] : memref<128x256xbf16, #tpu.memory_space<vmem>>, vector<128x256xbf16>
    %c0_16 = arith.constant 0 : index
    %c0_17 = arith.constant 0 : index
    %20 = vector.load %arg8[%c0_16, %c0_17] : memref<1x256xf32, #tpu.memory_space<vmem>>, vector<1x256xf32>
    %cst_18 = arith.constant dense<0.000000e+00> : vector<16x256xf32>
    %21 = tpu.matmul %18, %19, %cst_18 {dimension_numbers = #tpu.dot_dimension_numbers<[1], [0], [0], [1], [0, 0, 1, 1], [], []>} : vector<16x128xbf16>, vector<128x256xbf16>, vector<16x256xf32> -> vector<16x256xf32>
    %22 = vector.broadcast %20 : vector<1x256xf32> to vector<16x256xf32>
    %23 = arith.addf %21, %22 : vector<16x256xf32>
    %cst_19 = arith.constant 0.000000e+00 : f32
    %24 = vector.broadcast %cst_19 : f32 to vector<16x256xf32>
    %25 = arith.maximumf %23, %24 : vector<16x256xf32>
    %26 = arith.truncf %25 : vector<16x256xf32> to vector<16x256xbf16>
    %c0_20 = arith.constant 0 : index
    %c0_21 = arith.constant 0 : index
    %27 = vector.load %arg9[%c0_20, %c0_21] : memref<256x256xbf16, #tpu.memory_space<vmem>>, vector<256x256xbf16>
    %c0_22 = arith.constant 0 : index
    %c0_23 = arith.constant 0 : index
    %28 = vector.load %arg10[%c0_22, %c0_23] : memref<1x256xf32, #tpu.memory_space<vmem>>, vector<1x256xf32>
    %cst_24 = arith.constant dense<0.000000e+00> : vector<16x256xf32>
    %29 = tpu.matmul %26, %27, %cst_24 {dimension_numbers = #tpu.dot_dimension_numbers<[1], [0], [0], [1], [0, 0, 1, 1], [], []>} : vector<16x256xbf16>, vector<256x256xbf16>, vector<16x256xf32> -> vector<16x256xf32>
    %30 = vector.broadcast %28 : vector<1x256xf32> to vector<16x256xf32>
    %31 = arith.addf %29, %30 : vector<16x256xf32>
    %cst_25 = arith.constant 0.000000e+00 : f32
    %32 = vector.broadcast %cst_25 : f32 to vector<16x256xf32>
    %33 = arith.maximumf %31, %32 : vector<16x256xf32>
    %34 = arith.truncf %8 : vector<16x256xf32> to vector<16x256xbf16>
    %c0_26 = arith.constant 0 : index
    %c0_27 = arith.constant 0 : index
    %c0_28 = arith.constant 0 : index
    %35 = vector.load %arg11[%c0_26, %c0_27, %c0_28] : memref<4x256x1024xbf16, #tpu.memory_space<vmem>>, vector<1x256x1024xbf16>
    %36 = vector.shape_cast %35 : vector<1x256x1024xbf16> to vector<256x1024xbf16>
    %c0_29 = arith.constant 0 : index
    %c0_30 = arith.constant 0 : index
    %c0_31 = arith.constant 0 : index
    %37 = vector.load %arg12[%c0_29, %c0_30, %c0_31] : memref<4x1x1024xf32, #tpu.memory_space<vmem>>, vector<1x1x1024xf32>
    %38 = vector.shape_cast %37 : vector<1x1x1024xf32> to vector<1x1024xf32>
    %cst_32 = arith.constant dense<0.000000e+00> : vector<16x1024xf32>
    %39 = tpu.matmul %34, %36, %cst_32 {dimension_numbers = #tpu.dot_dimension_numbers<[1], [0], [0], [1], [0, 0, 1, 1], [], []>} : vector<16x256xbf16>, vector<256x1024xbf16>, vector<16x1024xf32> -> vector<16x1024xf32>
    %40 = vector.broadcast %38 : vector<1x1024xf32> to vector<16x1024xf32>
    %41 = arith.addf %39, %40 : vector<16x1024xf32>
    %cst_33 = arith.constant 0.000000e+00 : f32
    %42 = vector.broadcast %cst_33 : f32 to vector<16x1024xf32>
    %43 = arith.maximumf %41, %42 : vector<16x1024xf32>
    %c0_34 = arith.constant 0 : index
    %c0_35 = arith.constant 0 : index
    %44 = vector.load %arg13[%c0_34, %c0_35] : memref<16x1024xf32, #tpu.memory_space<vmem>>, vector<16x1024xf32>
    tpu.vector_store %arg13[%c0_34, %c0_35], %43 {strides = array<i32>} : memref<16x1024xf32, #tpu.memory_space<vmem>>, vector<16x1024xf32>,
    %45 = arith.truncf %25 : vector<16x256xf32> to vector<16x256xbf16>
    %c1 = arith.constant 1 : index
    %c0_36 = arith.constant 0 : index
    %c0_37 = arith.constant 0 : index
    %46 = vector.load %arg11[%c1, %c0_36, %c0_37] : memref<4x256x1024xbf16, #tpu.memory_space<vmem>>, vector<1x256x1024xbf16>
    %47 = vector.shape_cast %46 : vector<1x256x1024xbf16> to vector<256x1024xbf16>
    %c1_38 = arith.constant 1 : index
    %c0_39 = arith.constant 0 : index
    %c0_40 = arith.constant 0 : index
    %48 = vector.load %arg12[%c1_38, %c0_39, %c0_40] : memref<4x1x1024xf32, #tpu.memory_space<vmem>>, vector<1x1x1024xf32>
    %49 = vector.shape_cast %48 : vector<1x1x1024xf32> to vector<1x1024xf32>
    %cst_41 = arith.constant dense<0.000000e+00> : vector<16x1024xf32>
    %50 = tpu.matmul %45, %47, %cst_41 {dimension_numbers = #tpu.dot_dimension_numbers<[1], [0], [0], [1], [0, 0, 1, 1], [], []>} : vector<16x256xbf16>, vector<256x1024xbf16>, vector<16x1024xf32> -> vector<16x1024xf32>
    %51 = vector.broadcast %49 : vector<1x1024xf32> to vector<16x1024xf32>
    %52 = arith.addf %50, %51 : vector<16x1024xf32>
    %cst_42 = arith.constant 0.000000e+00 : f32
    %53 = vector.broadcast %cst_42 : f32 to vector<16x1024xf32>
    %54 = arith.maximumf %52, %53 : vector<16x1024xf32>
    %c0_43 = arith.constant 0 : index
    %c0_44 = arith.constant 0 : index
    %55 = vector.load %arg14[%c0_43, %c0_44] : memref<16x1024xf32, #tpu.memory_space<vmem>>, vector<16x1024xf32>
    tpu.vector_store %arg14[%c0_43, %c0_44], %54 {strides = array<i32>} : memref<16x1024xf32, #tpu.memory_space<vmem>>, vector<16x1024xf32>,
    %56 = arith.truncf %16 : vector<16x256xf32> to vector<16x256xbf16>
    %c2 = arith.constant 2 : index
    %c0_45 = arith.constant 0 : index
    %c0_46 = arith.constant 0 : index
    %57 = vector.load %arg11[%c2, %c0_45, %c0_46] : memref<4x256x1024xbf16, #tpu.memory_space<vmem>>, vector<1x256x1024xbf16>
    %58 = vector.shape_cast %57 : vector<1x256x1024xbf16> to vector<256x1024xbf16>
    %c2_47 = arith.constant 2 : index
    %c0_48 = arith.constant 0 : index
    %c0_49 = arith.constant 0 : index
    %59 = vector.load %arg12[%c2_47, %c0_48, %c0_49] : memref<4x1x1024xf32, #tpu.memory_space<vmem>>, vector<1x1x1024xf32>
    %60 = vector.shape_cast %59 : vector<1x1x1024xf32> to vector<1x1024xf32>
    %cst_50 = arith.constant dense<0.000000e+00> : vector<16x1024xf32>
    %61 = tpu.matmul %56, %58, %cst_50 {dimension_numbers = #tpu.dot_dimension_numbers<[1], [0], [0], [1], [0, 0, 1, 1], [], []>} : vector<16x256xbf16>, vector<256x1024xbf16>, vector<16x1024xf32> -> vector<16x1024xf32>
    %62 = vector.broadcast %60 : vector<1x1024xf32> to vector<16x1024xf32>
    %63 = arith.addf %61, %62 : vector<16x1024xf32>
    %cst_51 = arith.constant 0.000000e+00 : f32
    %64 = vector.broadcast %cst_51 : f32 to vector<16x1024xf32>
    %65 = arith.maximumf %63, %64 : vector<16x1024xf32>
    %c0_52 = arith.constant 0 : index
    %c0_53 = arith.constant 0 : index
    %66 = vector.load %arg15[%c0_52, %c0_53] : memref<16x1024xf32, #tpu.memory_space<vmem>>, vector<16x1024xf32>
    tpu.vector_store %arg15[%c0_52, %c0_53], %65 {strides = array<i32>} : memref<16x1024xf32, #tpu.memory_space<vmem>>, vector<16x1024xf32>,
    %67 = arith.truncf %33 : vector<16x256xf32> to vector<16x256xbf16>
    %c3 = arith.constant 3 : index
    %c0_54 = arith.constant 0 : index
    %c0_55 = arith.constant 0 : index
    %68 = vector.load %arg11[%c3, %c0_54, %c0_55] : memref<4x256x1024xbf16, #tpu.memory_space<vmem>>, vector<1x256x1024xbf16>
    %69 = vector.shape_cast %68 : vector<1x256x1024xbf16> to vector<256x1024xbf16>
    %c3_56 = arith.constant 3 : index
    %c0_57 = arith.constant 0 : index
    %c0_58 = arith.constant 0 : index
    %70 = vector.load %arg12[%c3_56, %c0_57, %c0_58] : memref<4x1x1024xf32, #tpu.memory_space<vmem>>, vector<1x1x1024xf32>
    %71 = vector.shape_cast %70 : vector<1x1x1024xf32> to vector<1x1024xf32>
    %cst_59 = arith.constant dense<0.000000e+00> : vector<16x1024xf32>
    %72 = tpu.matmul %67, %69, %cst_59 {dimension_numbers = #tpu.dot_dimension_numbers<[1], [0], [0], [1], [0, 0, 1, 1], [], []>} : vector<16x256xbf16>, vector<256x1024xbf16>, vector<16x1024xf32> -> vector<16x1024xf32>
    %73 = vector.broadcast %71 : vector<1x1024xf32> to vector<16x1024xf32>
    %74 = arith.addf %72, %73 : vector<16x1024xf32>
    %cst_60 = arith.constant 0.000000e+00 : f32
    %75 = vector.broadcast %cst_60 : f32 to vector<16x1024xf32>
    %76 = arith.maximumf %74, %75 : vector<16x1024xf32>
    %c0_61 = arith.constant 0 : index
    %c0_62 = arith.constant 0 : index
    %77 = vector.load %arg16[%c0_61, %c0_62] : memref<16x1024xf32, #tpu.memory_space<vmem>>, vector<16x1024xf32>
    tpu.vector_store %arg16[%c0_61, %c0_62], %76 {strides = array<i32>} : memref<16x1024xf32, #tpu.memory_space<vmem>>, vector<16x1024xf32>,
    return
  }
  func.func @transform_0(%arg0: i32) -> (i32, i32) {
    %c0_i32 = arith.constant 0 : i32
    %c0_i32_0 = arith.constant 0 : i32
    %c0_i32_1 = arith.constant 0 : i32
    return %c0_i32, %c0_i32_0 : i32, i32
  }
  func.func @transform_1(%arg0: i32) -> (i32, i32) {
    %c0_i32 = arith.constant 0 : i32
    %c0_i32_0 = arith.constant 0 : i32
    %c0_i32_1 = arith.constant 0 : i32
    return %c0_i32, %c0_i32_0 : i32, i32
  }
  func.func @transform_2(%arg0: i32) -> (i32, i32) {
    %c0_i32 = arith.constant 0 : i32
    %c0_i32_0 = arith.constant 0 : i32
    %c0_i32_1 = arith.constant 0 : i32
    return %c0_i32, %c0_i32_0 : i32, i32
  }
  func.func @transform_3(%arg0: i32) -> (i32, i32) {
    %c0_i32 = arith.constant 0 : i32
    %c0_i32_0 = arith.constant 0 : i32
    %c0_i32_1 = arith.constant 0 : i32
    return %c0_i32, %c0_i32_0 : i32, i32
  }
  func.func @transform_4(%arg0: i32) -> (i32, i32) {
    %c0_i32 = arith.constant 0 : i32
    %c0_i32_0 = arith.constant 0 : i32
    %c0_i32_1 = arith.constant 0 : i32
    return %c0_i32, %c0_i32_0 : i32, i32
  }
  func.func @transform_5(%arg0: i32) -> (i32, i32) {
    %c0_i32 = arith.constant 0 : i32
    %c0_i32_0 = arith.constant 0 : i32
    %c0_i32_1 = arith.constant 0 : i32
    return %c0_i32, %c0_i32_0 : i32, i32
  }
  func.func @transform_6(%arg0: i32) -> (i32, i32) {
    %c0_i32 = arith.constant 0 : i32
    %c0_i32_0 = arith.constant 0 : i32
    %c0_i32_1 = arith.constant 0 : i32
    return %c0_i32, %c0_i32_0 : i32, i32
  }
  func.func @transform_7(%arg0: i32) -> (i32, i32) {
    %c0_i32 = arith.constant 0 : i32
    %c0_i32_0 = arith.constant 0 : i32
    %c0_i32_1 = arith.constant 0 : i32
    return %c0_i32, %c0_i32_0 : i32, i32
  }
  func.func @transform_8(%arg0: i32) -> (i32, i32) {
    %c0_i32 = arith.constant 0 : i32
    %c0_i32_0 = arith.constant 0 : i32
    %c0_i32_1 = arith.constant 0 : i32
    return %c0_i32, %c0_i32_0 : i32, i32
  }
  func.func @transform_9(%arg0: i32) -> (i32, i32) {
    %c0_i32 = arith.constant 0 : i32
    %c0_i32_0 = arith.constant 0 : i32
    %c0_i32_1 = arith.constant 0 : i32
    return %c0_i32, %c0_i32_0 : i32, i32
  }
  func.func @transform_10(%arg0: i32) -> (i32, i32, i32) {
    %c0_i32 = arith.constant 0 : i32
    %c0_i32_0 = arith.constant 0 : i32
    %c0_i32_1 = arith.constant 0 : i32
    %c0_i32_2 = arith.constant 0 : i32
    return %c0_i32, %c0_i32_0, %c0_i32_1 : i32, i32, i32
  }
  func.func @transform_11(%arg0: i32) -> (i32, i32, i32) {
    %c0_i32 = arith.constant 0 : i32
    %c0_i32_0 = arith.constant 0 : i32
    %c0_i32_1 = arith.constant 0 : i32
    %c0_i32_2 = arith.constant 0 : i32
    return %c0_i32, %c0_i32_0, %c0_i32_1 : i32, i32, i32
  }
  func.func @transform_12(%arg0: i32) -> (i32, i32) {
    %c0_i32 = arith.constant 0 : i32
    %c0_i32_0 = arith.constant 0 : i32
    %c0_i32_1 = arith.constant 0 : i32
    return %c0_i32, %c0_i32_0 : i32, i32
  }
  func.func @transform_13(%arg0: i32) -> (i32, i32) {
    %c0_i32 = arith.constant 0 : i32
    %c0_i32_0 = arith.constant 0 : i32
    %c0_i32_1 = arith.constant 0 : i32
    return %c0_i32, %c0_i32_0 : i32, i32
  }
  func.func @transform_14(%arg0: i32) -> (i32, i32) {
    %c0_i32 = arith.constant 0 : i32
    %c0_i32_0 = arith.constant 0 : i32
    %c0_i32_1 = arith.constant 0 : i32
    return %c0_i32, %c0_i32_0 : i32, i32
  }
  func.func @transform_15(%arg0: i32) -> (i32, i32) {
    %c0_i32 = arith.constant 0 : i32
    %c0_i32_0 = arith.constant 0 : i32
    %c0_i32_1 = arith.constant 0 : i32
    return %c0_i32, %c0_i32_0 : i32, i32
  }
}

</mosaic_0001>

<llo_original>
// kernel: _total_model_forward.1
$region0: #{_total_model_forward.1}
  #allocation0 [shape = 'u32[]', space=smem, size = 0x4, offset = 0x4, fixed_abs, tag = 'smem constant byte address 0x4 - core index']
  #allocation1 [shape = 'u32[144,128]{1,0:T(1,128)}', space=vmem, size = 0x12000, scoped, tag = 'internal scratch']
  %s0 = inlined_call_operand.vmem [shape: f32[16,1024], index: 0, kind: input, shape index: {}]
  %s1 = inlined_call_operand.hbm [shape: bf16[1024,256], index: 1, kind: input, shape index: {}]
  %s2 = inlined_call_operand.hbm [shape: f32[1,256], index: 2, kind: input, shape index: {}]
  %s3 = inlined_call_operand.hbm [shape: bf16[256,256], index: 3, kind: input, shape index: {}]
  %s4 = inlined_call_operand.hbm [shape: f32[1,256], index: 4, kind: input, shape index: {}]
  %s5 = inlined_call_operand.vmem [shape: f32[16,128], index: 5, kind: input, shape index: {}]
  %s6 = inlined_call_operand.hbm [shape: bf16[128,256], index: 6, kind: input, shape index: {}]
  %s7 = inlined_call_operand.hbm [shape: f32[1,256], index: 7, kind: input, shape index: {}]
  %s8 = inlined_call_operand.hbm [shape: bf16[256,256], index: 8, kind: input, shape index: {}]
  %s9 = inlined_call_operand.hbm [shape: f32[1,256], index: 9, kind: input, shape index: {}]
  %s10 = inlined_call_operand.hbm [shape: bf16[4,256,1024], index: 10, kind: input, shape index: {}]
  %s11 = inlined_call_operand.hbm [shape: f32[4,1,1024], index: 11, kind: input, shape index: {}]
  %s12 = inlined_call_operand.vmem [shape: f32[16,1024], index: 12, kind: output, shape index: {0}]
  %s13 = inlined_call_operand.vmem [shape: f32[16,1024], index: 13, kind: output, shape index: {1}]
  %s14 = inlined_call_operand.vmem [shape: f32[16,1024], index: 14, kind: output, shape index: {2}]
  %s15 = inlined_call_operand.vmem [shape: f32[16,1024], index: 15, kind: output, shape index: {3}]
  %16 = xla_tuple %s12, %s13, %s14, %s15
  %s17 = sld [smem:[#allocation0]]
  $region122: #{_total_model_forward.1} parent=0
    _
  %s19 = ssub.s32 1, %s17
  %s20 = scalar_select 0, %s19, %s17
  $region1: #{_total_model_forward.1} parent=0
    #allocation2 [shape = 'u8[524288]{0}', space=vmem, size = 0x80000, scoped, tag = 'input window, operand 1, single buffered']
    #allocation3 [shape = 's32[1]{0}', space=sflag, size = 0x4, scoped, tag = 'scoped memory for _total_model_forward.1']
    #allocation4 [shape = 'u8[1024]{0}', space=vmem, size = 0x400, scoped, tag = 'input window, operand 2, single buffered']
    #allocation5 [shape = 's32[1]{0}', space=sflag, size = 0x4, scoped, tag = 'scoped memory for _total_model_forward.1']
    #allocation6 [shape = 'u8[131072]{0}', space=vmem, size = 0x20000, scoped, tag = 'input window, operand 3, single buffered']
    #allocation7 [shape = 'u8[1024]{0}', space=vmem, size = 0x400, scoped, tag = 'input window, operand 4, single buffered']
    #allocation8 [shape = 's32[1]{0}', space=sflag, size = 0x4, scoped, tag = 'scoped memory for _total_model_forward.1']
    #allocation9 [shape = 'u8[65536]{0}', space=vmem, size = 0x10000, scoped, tag = 'input window, operand 6, single buffered']
    #allocation10 [shape = 'u8[1024]{0}', space=vmem, size = 0x400, scoped, tag = 'input window, operand 7, single buffered']
    #allocation11 [shape = 's32[1]{0}', space=sflag, size = 0x4, scoped, tag = 'scoped memory for _total_model_forward.1']
    #allocation12 [shape = 'u8[131072]{0}', space=vmem, size = 0x20000, scoped, tag = 'input window, operand 8, single buffered']
    #allocation13 [shape = 'u8[1024]{0}', space=vmem, size = 0x400, scoped, tag = 'input window, operand 9, single buffered']
    #allocation14 [shape = 's32[1]{0}', space=sflag, size = 0x4, scoped, tag = 'scoped memory for _total_model_forward.1']
    #allocation15 [shape = 'u8[2097152]{0}', space=vmem, size = 0x200000, scoped, tag = 'input window, operand 10, single buffered']
    #allocation16 [shape = 'u8[16384]{0}', space=vmem, size = 0x4000, scoped, tag = 'input window, operand 11, single buffered']
    #allocation17 [shape = 's32[1]{0}', space=sflag, size = 0x4, scoped, tag = 'scoped memory for _total_model_forward.1']
    %21 = vsyncpa [#allocation3], 0
    %22 = vsyncpa [#allocation5], 0
    %23 = vsyncpa [#allocation8], 0
    %24 = vsyncpa [#allocation11], 0
    %25 = vsyncpa [#allocation14], 0
    %26 = vsyncpa [#allocation17], 0
    // Predicated region
    $region2: #{_total_model_forward.1} parent=1 // pred_check
      _
    $region3: #{_total_model_forward.1} parent=1 // pred_check_branch
      %28 = sbr.rel (0) target = $region5
    $region4: #{_total_model_forward.1} parent=1 // pred_region
      _
    $region5: #{_total_model_forward.1} parent=1 // pred_fallthru
      _
    // Predicated region
    $region6: #{_total_model_forward.1} parent=1 // pred_check
      _
    $region7: #{_total_model_forward.1} parent=1 // pred_check_branch
      %30 = sbr.rel (0) target = $region9
    $region8: #{_total_model_forward.1} parent=1 // pred_region
      %s32 = ssub.s32 16384, 16384
      %33 = vsyncadd [#allocation3], %s32
      %s34 = sshll.u32 [#allocation2], 4
      %s35 = int_to_ptr.vmem [resolvable:$true] %s34
      %40 = dma.hbm_to_vmem [thread:$0]  %s1, 16384, %s35, [#allocation3], 128, 128, 8
    $region9: #{_total_model_forward.1} parent=1 // pred_fallthru
      _
    // Predicated region
    $region10: #{_total_model_forward.1} parent=1 // pred_check
      _
    $region11: #{_total_model_forward.1} parent=1 // pred_check_branch
      %42 = sbr.rel (0) target = $region13
    $region12: #{_total_model_forward.1} parent=1 // pred_region
      %s44 = ssub.s32 32, 32
      %45 = vsyncadd [#allocation5], %s44
      %s47 = sshll.u32 [#allocation4], 4
      %s48 = int_to_ptr.vmem [resolvable:$true] %s47
      %50 = dma.hbm_to_vmem [thread:$0]  %s2, 32, %s48, [#allocation5]
    $region13: #{_total_model_forward.1} parent=1 // pred_fallthru
      _
    // Predicated region
    $region14: #{_total_model_forward.1} parent=1 // pred_check
      _
    $region15: #{_total_model_forward.1} parent=1 // pred_check_branch
      %52 = sbr.rel (0) target = $region17
    $region16: #{_total_model_forward.1} parent=1 // pred_region
      %s54 = ssub.s32 4096, 4096
      %55 = vsyncadd [#allocation5], %s54
      %s56 = sshll.u32 [#allocation6], 4
      %s57 = int_to_ptr.vmem [resolvable:$true] %s56
      %62 = dma.hbm_to_vmem [thread:$0]  %s3, 4096, %s57, [#allocation5], 128, 128, 8
    $region17: #{_total_model_forward.1} parent=1 // pred_fallthru
      _
    // Predicated region
    $region18: #{_total_model_forward.1} parent=1 // pred_check
      _
    $region19: #{_total_model_forward.1} parent=1 // pred_check_branch
      %64 = sbr.rel (0) target = $region21
    $region20: #{_total_model_forward.1} parent=1 // pred_region
      %s66 = ssub.s32 32, 32
      %67 = vsyncadd [#allocation8], %s66
      %s69 = sshll.u32 [#allocation7], 4
      %s70 = int_to_ptr.vmem [resolvable:$true] %s69
      %72 = dma.hbm_to_vmem [thread:$0]  %s4, 32, %s70, [#allocation8]
    $region21: #{_total_model_forward.1} parent=1 // pred_fallthru
      _
    // Predicated region
    $region22: #{_total_model_forward.1} parent=1 // pred_check
      _
    $region23: #{_total_model_forward.1} parent=1 // pred_check_branch
      %74 = sbr.rel (0) target = $region25
    $region24: #{_total_model_forward.1} parent=1 // pred_region
      _
    $region25: #{_total_model_forward.1} parent=1 // pred_fallthru
      _
    // Predicated region
    $region26: #{_total_model_forward.1} parent=1 // pred_check
      _
    $region27: #{_total_model_forward.1} parent=1 // pred_check_branch
      %76 = sbr.rel (0) target = $region29
    $region28: #{_total_model_forward.1} parent=1 // pred_region
      %s78 = ssub.s32 2048, 2048
      %79 = vsyncadd [#allocation8], %s78
      %s80 = sshll.u32 [#allocation9], 4
      %s81 = int_to_ptr.vmem [resolvable:$true] %s80
      %86 = dma.hbm_to_vmem [thread:$0]  %s6, 2048, %s81, [#allocation8], 128, 128, 8
    $region29: #{_total_model_forward.1} parent=1 // pred_fallthru
      _
    // Predicated region
    $region30: #{_total_model_forward.1} parent=1 // pred_check
      _
    $region31: #{_total_model_forward.1} parent=1 // pred_check_branch
      %88 = sbr.rel (0) target = $region33
    $region32: #{_total_model_forward.1} parent=1 // pred_region
      %s90 = ssub.s32 32, 32
      %91 = vsyncadd [#allocation11], %s90
      %s93 = sshll.u32 [#allocation10], 4
      %s94 = int_to_ptr.vmem [resolvable:$true] %s93
      %96 = dma.hbm_to_vmem [thread:$0]  %s7, 32, %s94, [#allocation11]
    $region33: #{_total_model_forward.1} parent=1 // pred_fallthru
      _
    // Predicated region
    $region34: #{_total_model_forward.1} parent=1 // pred_check
      _
    $region35: #{_total_model_forward.1} parent=1 // pred_check_branch
      %98 = sbr.rel (0) target = $region37
    $region36: #{_total_model_forward.1} parent=1 // pred_region
      %s100 = ssub.s32 4096, 4096
      %101 = vsyncadd [#allocation11], %s100
      %s102 = sshll.u32 [#allocation12], 4
      %s103 = int_to_ptr.vmem [resolvable:$true] %s102
      %108 = dma.hbm_to_vmem [thread:$0]  %s8, 4096, %s103, [#allocation11], 128, 128, 8
    $region37: #{_total_model_forward.1} parent=1 // pred_fallthru
      _
    // Predicated region
    $region38: #{_total_model_forward.1} parent=1 // pred_check
      _
    $region39: #{_total_model_forward.1} parent=1 // pred_check_branch
      %110 = sbr.rel (0) target = $region41
    $region40: #{_total_model_forward.1} parent=1 // pred_region
      %s112 = ssub.s32 32, 32
      %113 = vsyncadd [#allocation14], %s112
      %s115 = sshll.u32 [#allocation13], 4
      %s116 = int_to_ptr.vmem [resolvable:$true] %s115
      %118 = dma.hbm_to_vmem [thread:$0]  %s9, 32, %s116, [#allocation14]
    $region41: #{_total_model_forward.1} parent=1 // pred_fallthru
      _
    // Predicated region
    $region42: #{_total_model_forward.1} parent=1 // pred_check
      _
    $region43: #{_total_model_forward.1} parent=1 // pred_check_branch
      %120 = sbr.rel (0) target = $region45
    $region44: #{_total_model_forward.1} parent=1 // pred_region
      %s122 = ssub.s32 65536, 65536
      %123 = vsyncadd [#allocation14], %s122
      %s124 = sshll.u32 [#allocation15], 4
      %s125 = int_to_ptr.vmem [resolvable:$true] %s124
      %130 = dma.hbm_to_vmem [thread:$0]  %s10, 65536, %s125, [#allocation14], 512, 512, 32
    $region45: #{_total_model_forward.1} parent=1 // pred_fallthru
      _
    // Predicated region
    $region46: #{_total_model_forward.1} parent=1 // pred_check
      _
    $region47: #{_total_model_forward.1} parent=1 // pred_check_branch
      %132 = sbr.rel (0) target = $region49
    $region48: #{_total_model_forward.1} parent=1 // pred_region
      %s134 = ssub.s32 512, 512
      %135 = vsyncadd [#allocation17], %s134
      %s136 = sshll.u32 [#allocation16], 4
      %s137 = int_to_ptr.vmem [resolvable:$true] %s136
      %142 = dma.hbm_to_vmem [thread:$0]  %s11, 512, %s137, [#allocation17], 128, 128, 8
    $region49: #{_total_model_forward.1} parent=1 // pred_fallthru
      _
    // Predicated region
    $region50: #{_total_model_forward.1} parent=1 // pred_check
      _
    $region51: #{_total_model_forward.1} parent=1 // pred_check_branch
      %144 = sbr.rel (0) target = $region53
    $region52: #{_total_model_forward.1} parent=1 // pred_region
      %145 = dma.done [#allocation3], 16384
    $region53: #{_total_model_forward.1} parent=1 // pred_fallthru
      _
    // Predicated region
    $region54: #{_total_model_forward.1} parent=1 // pred_check
      _
    $region55: #{_total_model_forward.1} parent=1 // pred_check_branch
      %147 = sbr.rel (0) target = $region57
    $region56: #{_total_model_forward.1} parent=1 // pred_region
      %148 = dma.done [#allocation5], 32
    $region57: #{_total_model_forward.1} parent=1 // pred_fallthru
      _
    // Predicated region
    $region58: #{_total_model_forward.1} parent=1 // pred_check
      _
    $region59: #{_total_model_forward.1} parent=1 // pred_check_branch
      %150 = sbr.rel (0) target = $region61
    $region60: #{_total_model_forward.1} parent=1 // pred_region
      %151 = dma.done [#allocation5], 4096
    $region61: #{_total_model_forward.1} parent=1 // pred_fallthru
      _
    // Predicated region
    $region62: #{_total_model_forward.1} parent=1 // pred_check
      _
    $region63: #{_total_model_forward.1} parent=1 // pred_check_branch
      %153 = sbr.rel (0) target = $region65
    $region64: #{_total_model_forward.1} parent=1 // pred_region
      %154 = dma.done [#allocation8], 32
    $region65: #{_total_model_forward.1} parent=1 // pred_fallthru
      _
    // Predicated region
    $region66: #{_total_model_forward.1} parent=1 // pred_check
      _
    $region67: #{_total_model_forward.1} parent=1 // pred_check_branch
      %156 = sbr.rel (0) target = $region69
    $region68: #{_total_model_forward.1} parent=1 // pred_region
      %157 = dma.done [#allocation8], 2048
    $region69: #{_total_model_forward.1} parent=1 // pred_fallthru
      _
    // Predicated region
    $region70: #{_total_model_forward.1} parent=1 // pred_check
      _
    $region71: #{_total_model_forward.1} parent=1 // pred_check_branch
      %159 = sbr.rel (0) target = $region73
    $region72: #{_total_model_forward.1} parent=1 // pred_region
      %160 = dma.done [#allocation11], 32
    $region73: #{_total_model_forward.1} parent=1 // pred_fallthru
      _
    // Predicated region
    $region74: #{_total_model_forward.1} parent=1 // pred_check
      _
    $region75: #{_total_model_forward.1} parent=1 // pred_check_branch
      %162 = sbr.rel (0) target = $region77
    $region76: #{_total_model_forward.1} parent=1 // pred_region
      %163 = dma.done [#allocation11], 4096
    $region77: #{_total_model_forward.1} parent=1 // pred_fallthru
      _
    // Predicated region
    $region78: #{_total_model_forward.1} parent=1 // pred_check
      _
    $region79: #{_total_model_forward.1} parent=1 // pred_check_branch
      %165 = sbr.rel (0) target = $region81
    $region80: #{_total_model_forward.1} parent=1 // pred_region
      %166 = dma.done [#allocation14], 32
    $region81: #{_total_model_forward.1} parent=1 // pred_fallthru
      _
    // Predicated region
    $region82: #{_total_model_forward.1} parent=1 // pred_check
      _
    $region83: #{_total_model_forward.1} parent=1 // pred_check_branch
      %168 = sbr.rel (0) target = $region85
    $region84: #{_total_model_forward.1} parent=1 // pred_region
      %169 = dma.done [#allocation14], 65536
    $region85: #{_total_model_forward.1} parent=1 // pred_fallthru
      _
    // Predicated region
    $region86: #{_total_model_forward.1} parent=1 // pred_check
      _
    $region87: #{_total_model_forward.1} parent=1 // pred_check_branch
      %171 = sbr.rel (0) target = $region89
    $region88: #{_total_model_forward.1} parent=1 // pred_region
      %172 = dma.done [#allocation17], 512
    $region89: #{_total_model_forward.1} parent=1 // pred_fallthru
      _
    %v174 = vld [vmem:[%s0] sm:$0xff]
    %v175 = vld [vmem:[%s0 + $0x8] sm:$0xff]
    %v176 = vld [vmem:[%s0 + $0x10] sm:$0xff]
    %v177 = vld [vmem:[%s0 + $0x18] sm:$0xff]
    %v178 = vld [vmem:[%s0 + $0x20] sm:$0xff]
    %v179 = vld [vmem:[%s0 + $0x28] sm:$0xff]
    %v180 = vld [vmem:[%s0 + $0x30] sm:$0xff]
    %v181 = vld [vmem:[%s0 + $0x38] sm:$0xff]
    %v182 = vld [vmem:[%s0 + $0x40] sm:$0xff]
    %v183 = vld [vmem:[%s0 + $0x48] sm:$0xff]
    %v184 = vld [vmem:[%s0 + $0x50] sm:$0xff]
    %v185 = vld [vmem:[%s0 + $0x58] sm:$0xff]
    %v186 = vld [vmem:[%s0 + $0x60] sm:$0xff]
    %v187 = vld [vmem:[%s0 + $0x68] sm:$0xff]
    %v188 = vld [vmem:[%s0 + $0x70] sm:$0xff]
    %v189 = vld [vmem:[%s0 + $0x78] sm:$0xff]
    %v190 = vpack.c.bf16 %v182, %v174
    %v191 = vpack.c.bf16 %v183, %v175
    %v192 = vpack.c.bf16 %v184, %v176
    %v193 = vpack.c.bf16 %v185, %v177
    %v194 = vpack.c.bf16 %v186, %v178
    %v195 = vpack.c.bf16 %v187, %v179
    %v196 = vpack.c.bf16 %v188, %v180
    %v197 = vpack.c.bf16 %v189, %v181
    %v198 = vld [vmem:[#allocation2] sm:$0xff]
    %v199 = vld [vmem:[#allocation2 + $0x8] sm:$0xff]
    %v200 = vld [vmem:[#allocation2 + $0x10] sm:$0xff]
    %v201 = vld [vmem:[#allocation2 + $0x18] sm:$0xff]
    %v202 = vld [vmem:[#allocation2 + $0x20] sm:$0xff]
    %v203 = vld [vmem:[#allocation2 + $0x28] sm:$0xff]
    %v204 = vld [vmem:[#allocation2 + $0x30] sm:$0xff]
    %v205 = vld [vmem:[#allocation2 + $0x38] sm:$0xff]
    %v206 = vld [vmem:[#allocation2 + $0x40] sm:$0xff]
    %v207 = vld [vmem:[#allocation2 + $0x48] sm:$0xff]
    %v208 = vld [vmem:[#allocation2 + $0x50] sm:$0xff]
    %v209 = vld [vmem:[#allocation2 + $0x58] sm:$0xff]
    %v210 = vld [vmem:[#allocation2 + $0x60] sm:$0xff]
    %v211 = vld [vmem:[#allocation2 + $0x68] sm:$0xff]
    %v212 = vld [vmem:[#allocation2 + $0x70] sm:$0xff]
    %v213 = vld [vmem:[#allocation2 + $0x78] sm:$0xff]
    %v214 = vld [vmem:[#allocation2 + $0x80] sm:$0xff]
    %v215 = vld [vmem:[#allocation2 + $0x88] sm:$0xff]
    %v216 = vld [vmem:[#allocation2 + $0x90] sm:$0xff]
    %v217 = vld [vmem:[#allocation2 + $0x98] sm:$0xff]
    %v218 = vld [vmem:[#allocation2 + $0xa0] sm:$0xff]
    %v219 = vld [vmem:[#allocation2 + $0xa8] sm:$0xff]
    %v220 = vld [vmem:[#allocation2 + $0xb0] sm:$0xff]
    %v221 = vld [vmem:[#allocation2 + $0xb8] sm:$0xff]
    %v222 = vld [vmem:[#allocation2 + $0xc0] sm:$0xff]
    %v223 = vld [vmem:[#allocation2 + $0xc8] sm:$0xff]
    %v224 = vld [vmem:[#allocation2 + $0xd0] sm:$0xff]
    %v225 = vld [vmem:[#allocation2 + $0xd8] sm:$0xff]
    %v226 = vld [vmem:[#allocation2 + $0xe0] sm:$0xff]
    %v227 = vld [vmem:[#allocation2 + $0xe8] sm:$0xff]
    %v228 = vld [vmem:[#allocation2 + $0xf0] sm:$0xff]
    %v229 = vld [vmem:[#allocation2 + $0xf8] sm:$0xff]
    %v230 = vld [vmem:[#allocation2 + $0x100] sm:$0xff]
    %v231 = vld [vmem:[#allocation2 + $0x108] sm:$0xff]
    %v232 = vld [vmem:[#allocation2 + $0x110] sm:$0xff]
    %v233 = vld [vmem:[#allocation2 + $0x118] sm:$0xff]
    %v234 = vld [vmem:[#allocation2 + $0x120] sm:$0xff]
    %v235 = vld [vmem:[#allocation2 + $0x128] sm:$0xff]
    %v236 = vld [vmem:[#allocation2 + $0x130] sm:$0xff]
    %v237 = vld [vmem:[#allocation2 + $0x138] sm:$0xff]
    %v238 = vld [vmem:[#allocation2 + $0x140] sm:$0xff]
    %v239 = vld [vmem:[#allocation2 + $0x148] sm:$0xff]
    %v240 = vld [vmem:[#allocation2 + $0x150] sm:$0xff]
    %v241 = vld [vmem:[#allocation2 + $0x158] sm:$0xff]
    %v242 = vld [vmem:[#allocation2 + $0x160] sm:$0xff]
    %v243 = vld [vmem:[#allocation2 + $0x168] sm:$0xff]
    %v244 = vld [vmem:[#allocation2 + $0x170] sm:$0xff]
    %v245 = vld [vmem:[#allocation2 + $0x178] sm:$0xff]
    %v246 = vld [vmem:[#allocation2 + $0x180] sm:$0xff]
    %v247 = vld [vmem:[#allocation2 + $0x188] sm:$0xff]
    %v248 = vld [vmem:[#allocation2 + $0x190] sm:$0xff]
    %v249 = vld [vmem:[#allocation2 + $0x198] sm:$0xff]
    %v250 = vld [vmem:[#allocation2 + $0x1a0] sm:$0xff]
    %v251 = vld [vmem:[#allocation2 + $0x1a8] sm:$0xff]
    %v252 = vld [vmem:[#allocation2 + $0x1b0] sm:$0xff]
    %v253 = vld [vmem:[#allocation2 + $0x1b8] sm:$0xff]
    %v254 = vld [vmem:[#allocation2 + $0x1c0] sm:$0xff]
    %v255 = vld [vmem:[#allocation2 + $0x1c8] sm:$0xff]
    %v256 = vld [vmem:[#allocation2 + $0x1d0] sm:$0xff]
    %v257 = vld [vmem:[#allocation2 + $0x1d8] sm:$0xff]
    %v258 = vld [vmem:[#allocation2 + $0x1e0] sm:$0xff]
    %v259 = vld [vmem:[#allocation2 + $0x1e8] sm:$0xff]
    %v260 = vld [vmem:[#allocation2 + $0x1f0] sm:$0xff]
    %v261 = vld [vmem:[#allocation2 + $0x1f8] sm:$0xff]
    %v262 = vld [vmem:[#allocation2 + $0x200] sm:$0xff]
    %v263 = vld [vmem:[#allocation2 + $0x208] sm:$0xff]
    %v264 = vld [vmem:[#allocation2 + $0x210] sm:$0xff]
    %v265 = vld [vmem:[#allocation2 + $0x218] sm:$0xff]
    %v266 = vld [vmem:[#allocation2 + $0x220] sm:$0xff]
    %v267 = vld [vmem:[#allocation2 + $0x228] sm:$0xff]
    %v268 = vld [vmem:[#allocation2 + $0x230] sm:$0xff]
    %v269 = vld [vmem:[#allocation2 + $0x238] sm:$0xff]
    %v270 = vld [vmem:[#allocation2 + $0x240] sm:$0xff]
    %v271 = vld [vmem:[#allocation2 + $0x248] sm:$0xff]
    %v272 = vld [vmem:[#allocation2 + $0x250] sm:$0xff]
    %v273 = vld [vmem:[#allocation2 + $0x258] sm:$0xff]
    %v274 = vld [vmem:[#allocation2 + $0x260] sm:$0xff]
    %v275 = vld [vmem:[#allocation2 + $0x268] sm:$0xff]
    %v276 = vld [vmem:[#allocation2 + $0x270] sm:$0xff]
    %v277 = vld [vmem:[#allocation2 + $0x278] sm:$0xff]
    %v278 = vld [vmem:[#allocation2 + $0x280] sm:$0xff]
    %v279 = vld [vmem:[#allocation2 + $0x288] sm:$0xff]
    %v280 = vld [vmem:[#allocation2 + $0x290] sm:$0xff]
    %v281 = vld [vmem:[#allocation2 + $0x298] sm:$0xff]
    %v282 = vld [vmem:[#allocation2 + $0x2a0] sm:$0xff]
    %v283 = vld [vmem:[#allocation2 + $0x2a8] sm:$0xff]
    %v284 = vld [vmem:[#allocation2 + $0x2b0] sm:$0xff]
    %v285 = vld [vmem:[#allocation2 + $0x2b8] sm:$0xff]
    %v286 = vld [vmem:[#allocation2 + $0x2c0] sm:$0xff]
    %v287 = vld [vmem:[#allocation2 + $0x2c8] sm:$0xff]
    %v288 = vld [vmem:[#allocation2 + $0x2d0] sm:$0xff]
    %v289 = vld [vmem:[#allocation2 + $0x2d8] sm:$0xff]
    %v290 = vld [vmem:[#allocation2 + $0x2e0] sm:$0xff]
    %v291 = vld [vmem:[#allocation2 + $0x2e8] sm:$0xff]
    %v292 = vld [vmem:[#allocation2 + $0x2f0] sm:$0xff]
    %v293 = vld [vmem:[#allocation2 + $0x2f8] sm:$0xff]
    %v294 = vld [vmem:[#allocation2 + $0x300] sm:$0xff]
    %v295 = vld [vmem:[#allocation2 + $0x308] sm:$0xff]
    %v296 = vld [vmem:[#allocation2 + $0x310] sm:$0xff]
    %v297 = vld [vmem:[#allocation2 + $0x318] sm:$0xff]
    %v298 = vld [vmem:[#allocation2 + $0x320] sm:$0xff]
    %v299 = vld [vmem:[#allocation2 + $0x328] sm:$0xff]
    %v300 = vld [vmem:[#allocation2 + $0x330] sm:$0xff]
    %v301 = vld [vmem:[#allocation2 + $0x338] sm:$0xff]
    %v302 = vld [vmem:[#allocation2 + $0x340] sm:$0xff]
    %v303 = vld [vmem:[#allocation2 + $0x348] sm:$0xff]
    %v304 = vld [vmem:[#allocation2 + $0x350] sm:$0xff]
    %v305 = vld [vmem:[#allocation2 + $0x358] sm:$0xff]
    %v306 = vld [vmem:[#allocation2 + $0x360] sm:$0xff]
    %v307 = vld [vmem:[#allocation2 + $0x368] sm:$0xff]
    %v308 = vld [vmem:[#allocation2 + $0x370] sm:$0xff]
    %v309 = vld [vmem:[#allocation2 + $0x378] sm:$0xff]
    %v310 = vld [vmem:[#allocation2 + $0x380] sm:$0xff]
    %v311 = vld [vmem:[#allocation2 + $0x388] sm:$0xff]
    %v312 = vld [vmem:[#allocation2 + $0x390] sm:$0xff]
    %v313 = vld [vmem:[#allocation2 + $0x398] sm:$0xff]
    %v314 = vld [vmem:[#allocation2 + $0x3a0] sm:$0xff]
    %v315 = vld [vmem:[#allocation2 + $0x3a8] sm:$0xff]
    %v316 = vld [vmem:[#allocation2 + $0x3b0] sm:$0xff]
    %v317 = vld [vmem:[#allocation2 + $0x3b8] sm:$0xff]
    %v318 = vld [vmem:[#allocation2 + $0x3c0] sm:$0xff]
    %v319 = vld [vmem:[#allocation2 + $0x3c8] sm:$0xff]
    %v320 = vld [vmem:[#allocation2 + $0x3d0] sm:$0xff]
    %v321 = vld [vmem:[#allocation2 + $0x3d8] sm:$0xff]
    %v322 = vld [vmem:[#allocation2 + $0x3e0] sm:$0xff]
    %v323 = vld [vmem:[#allocation2 + $0x3e8] sm:$0xff]
    %v324 = vld [vmem:[#allocation2 + $0x3f0] sm:$0xff]
    %v325 = vld [vmem:[#allocation2 + $0x3f8] sm:$0xff]
    %v326 = vld [vmem:[#allocation4] sm:$0x3]
    %v328 = vlaneseq
    %v329 = vshrl.u32 %v328, 7
    %v330 = vsub.s32 0, %v329
    %v331 = vrot.slane %v326, %v330
    %v332 = vlaneseq
    %v333 = vshrl.u32 %v332, 7
    %v334 = vsub.s32 1, %v333
    %v335 = vrot.slane %v326, %v334
    %v466 = vunpack.c.l.b16 %v198
    %v467 = vunpack.c.h.b16 %v198
    %v468 = vunpack.c.l.b16 %v199
    %v469 = vunpack.c.h.b16 %v199
    %v470 = vunpack.c.l.b16 %v200
    %v471 = vunpack.c.h.b16 %v200
    %v472 = vunpack.c.l.b16 %v201
    %v473 = vunpack.c.h.b16 %v201
    %v474 = vunpack.c.l.b16 %v202
    %v475 = vunpack.c.h.b16 %v202
    %v476 = vunpack.c.l.b16 %v203
    %v477 = vunpack.c.h.b16 %v203
    %v478 = vunpack.c.l.b16 %v204
    %v479 = vunpack.c.h.b16 %v204
    %v480 = vunpack.c.l.b16 %v205
    %v481 = vunpack.c.h.b16 %v205
    %v482 = vunpack.c.l.b16 %v206
    %v483 = vunpack.c.h.b16 %v206
    %v484 = vunpack.c.l.b16 %v207
    %v485 = vunpack.c.h.b16 %v207
    %v486 = vunpack.c.l.b16 %v208
    %v487 = vunpack.c.h.b16 %v208
    %v488 = vunpack.c.l.b16 %v209
    %v489 = vunpack.c.h.b16 %v209
    %v490 = vunpack.c.l.b16 %v210
    %v491 = vunpack.c.h.b16 %v210
    %v492 = vunpack.c.l.b16 %v211
    %v493 = vunpack.c.h.b16 %v211
    %v494 = vunpack.c.l.b16 %v212
    %v495 = vunpack.c.h.b16 %v212
    %v496 = vunpack.c.l.b16 %v213
    %v497 = vunpack.c.h.b16 %v213
    %v498 = vunpack.c.l.b16 %v214
    %v499 = vunpack.c.h.b16 %v214
    %v500 = vunpack.c.l.b16 %v215
    %v501 = vunpack.c.h.b16 %v215
    %v502 = vunpack.c.l.b16 %v216
    %v503 = vunpack.c.h.b16 %v216
    %v504 = vunpack.c.l.b16 %v217
    %v505 = vunpack.c.h.b16 %v217
    %v506 = vunpack.c.l.b16 %v218
    %v507 = vunpack.c.h.b16 %v218
    %v508 = vunpack.c.l.b16 %v219
    %v509 = vunpack.c.h.b16 %v219
    %v510 = vunpack.c.l.b16 %v220
    %v511 = vunpack.c.h.b16 %v220
    %v512 = vunpack.c.l.b16 %v221
    %v513 = vunpack.c.h.b16 %v221
    %v514 = vunpack.c.l.b16 %v222
    %v515 = vunpack.c.h.b16 %v222
    %v516 = vunpack.c.l.b16 %v223
    %v517 = vunpack.c.h.b16 %v223
    %v518 = vunpack.c.l.b16 %v224
    %v519 = vunpack.c.h.b16 %v224
    %v520 = vunpack.c.l.b16 %v225
    %v521 = vunpack.c.h.b16 %v225
    %v522 = vunpack.c.l.b16 %v226
    %v523 = vunpack.c.h.b16 %v226
    %v524 = vunpack.c.l.b16 %v227
    %v525 = vunpack.c.h.b16 %v227
    %v526 = vunpack.c.l.b16 %v228
    %v527 = vunpack.c.h.b16 %v228
    %v528 = vunpack.c.l.b16 %v229
    %v529 = vunpack.c.h.b16 %v229
    %v530 = vunpack.c.l.b16 %v230
    %v531 = vunpack.c.h.b16 %v230
    %v532 = vunpack.c.l.b16 %v231
    %v533 = vunpack.c.h.b16 %v231
    %v534 = vunpack.c.l.b16 %v232
    %v535 = vunpack.c.h.b16 %v232
    %v536 = vunpack.c.l.b16 %v233
    %v537 = vunpack.c.h.b16 %v233
    %v538 = vunpack.c.l.b16 %v234
    %v539 = vunpack.c.h.b16 %v234
    %v540 = vunpack.c.l.b16 %v235
    %v541 = vunpack.c.h.b16 %v235
    %v542 = vunpack.c.l.b16 %v236
    %v543 = vunpack.c.h.b16 %v236
    %v544 = vunpack.c.l.b16 %v237
    %v545 = vunpack.c.h.b16 %v237
    %v546 = vunpack.c.l.b16 %v238
    %v547 = vunpack.c.h.b16 %v238
    %v548 = vunpack.c.l.b16 %v239
    %v549 = vunpack.c.h.b16 %v239
    %v550 = vunpack.c.l.b16 %v240
    %v551 = vunpack.c.h.b16 %v240
    %v552 = vunpack.c.l.b16 %v241
    %v553 = vunpack.c.h.b16 %v241
    %v554 = vunpack.c.l.b16 %v242
    %v555 = vunpack.c.h.b16 %v242
    %v556 = vunpack.c.l.b16 %v243
    %v557 = vunpack.c.h.b16 %v243
    %v558 = vunpack.c.l.b16 %v244
    %v559 = vunpack.c.h.b16 %v244
    %v560 = vunpack.c.l.b16 %v245
    %v561 = vunpack.c.h.b16 %v245
    %v562 = vunpack.c.l.b16 %v246
    %v563 = vunpack.c.h.b16 %v246
    %v564 = vunpack.c.l.b16 %v247
    %v565 = vunpack.c.h.b16 %v247
    %v566 = vunpack.c.l.b16 %v248
    %v567 = vunpack.c.h.b16 %v248
    %v568 = vunpack.c.l.b16 %v249
    %v569 = vunpack.c.h.b16 %v249
    %v570 = vunpack.c.l.b16 %v250
    %v571 = vunpack.c.h.b16 %v250
    %v572 = vunpack.c.l.b16 %v251
    %v573 = vunpack.c.h.b16 %v251
    %v574 = vunpack.c.l.b16 %v252
    %v575 = vunpack.c.h.b16 %v252
    %v576 = vunpack.c.l.b16 %v253
    %v577 = vunpack.c.h.b16 %v253
    %v578 = vunpack.c.l.b16 %v254
    %v579 = vunpack.c.h.b16 %v254
    %v580 = vunpack.c.l.b16 %v255
    %v581 = vunpack.c.h.b16 %v255
    %v582 = vunpack.c.l.b16 %v256
    %v583 = vunpack.c.h.b16 %v256
    %v584 = vunpack.c.l.b16 %v257
    %v585 = vunpack.c.h.b16 %v257
    %v586 = vunpack.c.l.b16 %v258
    %v587 = vunpack.c.h.b16 %v258
    %v588 = vunpack.c.l.b16 %v259
    %v589 = vunpack.c.h.b16 %v259
    %v590 = vunpack.c.l.b16 %v260
    %v591 = vunpack.c.h.b16 %v260
    %v592 = vunpack.c.l.b16 %v261
    %v593 = vunpack.c.h.b16 %v261
    %v594 = vunpack.c.l.b16 %v262
    %v595 = vunpack.c.h.b16 %v262
    %v596 = vunpack.c.l.b16 %v263
    %v597 = vunpack.c.h.b16 %v263
    %v598 = vunpack.c.l.b16 %v264
    %v599 = vunpack.c.h.b16 %v264
    %v600 = vunpack.c.l.b16 %v265
    %v601 = vunpack.c.h.b16 %v265
    %v602 = vunpack.c.l.b16 %v266
    %v603 = vunpack.c.h.b16 %v266
    %v604 = vunpack.c.l.b16 %v267
    %v605 = vunpack.c.h.b16 %v267
    %v606 = vunpack.c.l.b16 %v268
    %v607 = vunpack.c.h.b16 %v268
    %v608 = vunpack.c.l.b16 %v269
    %v609 = vunpack.c.h.b16 %v269
    %v610 = vunpack.c.l.b16 %v270
    %v611 = vunpack.c.h.b16 %v270
    %v612 = vunpack.c.l.b16 %v271
    %v613 = vunpack.c.h.b16 %v271
    %v614 = vunpack.c.l.b16 %v272
    %v615 = vunpack.c.h.b16 %v272
    %v616 = vunpack.c.l.b16 %v273
    %v617 = vunpack.c.h.b16 %v273
    %v618 = vunpack.c.l.b16 %v274
    %v619 = vunpack.c.h.b16 %v274
    %v620 = vunpack.c.l.b16 %v275
    %v621 = vunpack.c.h.b16 %v275
    %v622 = vunpack.c.l.b16 %v276
    %v623 = vunpack.c.h.b16 %v276
    %v624 = vunpack.c.l.b16 %v277
    %v625 = vunpack.c.h.b16 %v277
    %v626 = vunpack.c.l.b16 %v278
    %v627 = vunpack.c.h.b16 %v278
    %v628 = vunpack.c.l.b16 %v279
    %v629 = vunpack.c.h.b16 %v279
    %v630 = vunpack.c.l.b16 %v280
    %v631 = vunpack.c.h.b16 %v280
    %v632 = vunpack.c.l.b16 %v281
    %v633 = vunpack.c.h.b16 %v281
    %v634 = vunpack.c.l.b16 %v282
    %v635 = vunpack.c.h.b16 %v282
    %v636 = vunpack.c.l.b16 %v283
    %v637 = vunpack.c.h.b16 %v283
    %v638 = vunpack.c.l.b16 %v284
    %v639 = vunpack.c.h.b16 %v284
    %v640 = vunpack.c.l.b16 %v285
    %v641 = vunpack.c.h.b16 %v285
    %v642 = vunpack.c.l.b16 %v286
    %v643 = vunpack.c.h.b16 %v286
    %v644 = vunpack.c.l.b16 %v287
    %v645 = vunpack.c.h.b16 %v287
    %v646 = vunpack.c.l.b16 %v288
    %v647 = vunpack.c.h.b16 %v288
    %v648 = vunpack.c.l.b16 %v289
    %v649 = vunpack.c.h.b16 %v289
    %v650 = vunpack.c.l.b16 %v290
    %v651 = vunpack.c.h.b16 %v290
    %v652 = vunpack.c.l.b16 %v291
    %v653 = vunpack.c.h.b16 %v291
    %v654 = vunpack.c.l.b16 %v292
    %v655 = vunpack.c.h.b16 %v292
    %v656 = vunpack.c.l.b16 %v293
    %v657 = vunpack.c.h.b16 %v293
    %v658 = vunpack.c.l.b16 %v294
    %v659 = vunpack.c.h.b16 %v294
    %v660 = vunpack.c.l.b16 %v295
    %v661 = vunpack.c.h.b16 %v295
    %v662 = vunpack.c.l.b16 %v296
    %v663 = vunpack.c.h.b16 %v296
    %v664 = vunpack.c.l.b16 %v297
    %v665 = vunpack.c.h.b16 %v297
    %v666 = vunpack.c.l.b16 %v298
    %v667 = vunpack.c.h.b16 %v298
    %v668 = vunpack.c.l.b16 %v299
    %v669 = vunpack.c.h.b16 %v299
    %v670 = vunpack.c.l.b16 %v300
    %v671 = vunpack.c.h.b16 %v300
    %v672 = vunpack.c.l.b16 %v301
    %v673 = vunpack.c.h.b16 %v301
    %v674 = vunpack.c.l.b16 %v302
    %v675 = vunpack.c.h.b16 %v302
    %v676 = vunpack.c.l.b16 %v303
    %v677 = vunpack.c.h.b16 %v303
    %v678 = vunpack.c.l.b16 %v304
    %v679 = vunpack.c.h.b16 %v304
    %v680 = vunpack.c.l.b16 %v305
    %v681 = vunpack.c.h.b16 %v305
    %v682 = vunpack.c.l.b16 %v306
    %v683 = vunpack.c.h.b16 %v306
    %v684 = vunpack.c.l.b16 %v307
    %v685 = vunpack.c.h.b16 %v307
    %v686 = vunpack.c.l.b16 %v308
    %v687 = vunpack.c.h.b16 %v308
    %v688 = vunpack.c.l.b16 %v309
    %v689 = vunpack.c.h.b16 %v309
    %v690 = vunpack.c.l.b16 %v310
    %v691 = vunpack.c.h.b16 %v310
    %v692 = vunpack.c.l.b16 %v311
    %v693 = vunpack.c.h.b16 %v311
    %v694 = vunpack.c.l.b16 %v312
    %v695 = vunpack.c.h.b16 %v312
    %v696 = vunpack.c.l.b16 %v313
    %v697 = vunpack.c.h.b16 %v313
    %v698 = vunpack.c.l.b16 %v314
    %v699 = vunpack.c.h.b16 %v314
    %v700 = vunpack.c.l.b16 %v315
    %v701 = vunpack.c.h.b16 %v315
    %v702 = vunpack.c.l.b16 %v316
    %v703 = vunpack.c.h.b16 %v316
    %v704 = vunpack.c.l.b16 %v317
    %v705 = vunpack.c.h.b16 %v317
    %v706 = vunpack.c.l.b16 %v318
    %v707 = vunpack.c.h.b16 %v318
    %v708 = vunpack.c.l.b16 %v319
    %v709 = vunpack.c.h.b16 %v319
    %v710 = vunpack.c.l.b16 %v320
    %v711 = vunpack.c.h.b16 %v320
    %v712 = vunpack.c.l.b16 %v321
    %v713 = vunpack.c.h.b16 %v321
    %v714 = vunpack.c.l.b16 %v322
    %v715 = vunpack.c.h.b16 %v322
    %v716 = vunpack.c.l.b16 %v323
    %v717 = vunpack.c.h.b16 %v323
    %v718 = vunpack.c.l.b16 %v324
    %v719 = vunpack.c.h.b16 %v324
    %v720 = vunpack.c.l.b16 %v325
    %v721 = vunpack.c.h.b16 %v325
    %v722 = vpack.c.b16 %v468, %v466
    %v723 = vpack.c.b16 %v469, %v467
    %v724 = vpack.c.b16 %v472, %v470
    %v725 = vpack.c.b16 %v473, %v471
    %v726 = vpack.c.b16 %v476, %v474
    %v727 = vpack.c.b16 %v477, %v475
    %v728 = vpack.c.b16 %v480, %v478
    %v729 = vpack.c.b16 %v481, %v479
    %v730 = vpack.c.b16 %v484, %v482
    %v731 = vpack.c.b16 %v485, %v483
    %v732 = vpack.c.b16 %v488, %v486
    %v733 = vpack.c.b16 %v489, %v487
    %v734 = vpack.c.b16 %v492, %v490
    %v735 = vpack.c.b16 %v493, %v491
    %v736 = vpack.c.b16 %v496, %v494
    %v737 = vpack.c.b16 %v497, %v495
    %v738 = vpack.c.b16 %v500, %v498
    %v739 = vpack.c.b16 %v501, %v499
    %v740 = vpack.c.b16 %v504, %v502
    %v741 = vpack.c.b16 %v505, %v503
    %v742 = vpack.c.b16 %v508, %v506
    %v743 = vpack.c.b16 %v509, %v507
    %v744 = vpack.c.b16 %v512, %v510
    %v745 = vpack.c.b16 %v513, %v511
    %v746 = vpack.c.b16 %v516, %v514
    %v747 = vpack.c.b16 %v517, %v515
    %v748 = vpack.c.b16 %v520, %v518
    %v749 = vpack.c.b16 %v521, %v519
    %v750 = vpack.c.b16 %v524, %v522
    %v751 = vpack.c.b16 %v525, %v523
    %v752 = vpack.c.b16 %v528, %v526
    %v753 = vpack.c.b16 %v529, %v527
    %v754 = vpack.c.b16 %v532, %v530
    %v755 = vpack.c.b16 %v533, %v531
    %v756 = vpack.c.b16 %v536, %v534
    %v757 = vpack.c.b16 %v537, %v535
    %v758 = vpack.c.b16 %v540, %v538
    %v759 = vpack.c.b16 %v541, %v539
    %v760 = vpack.c.b16 %v544, %v542
    %v761 = vpack.c.b16 %v545, %v543
    %v762 = vpack.c.b16 %v548, %v546
    %v763 = vpack.c.b16 %v549, %v547
    %v764 = vpack.c.b16 %v552, %v550
    %v765 = vpack.c.b16 %v553, %v551
    %v766 = vpack.c.b16 %v556, %v554
    %v767 = vpack.c.b16 %v557, %v555
    %v768 = vpack.c.b16 %v560, %v558
    %v769 = vpack.c.b16 %v561, %v559
    %v770 = vpack.c.b16 %v564, %v562
    %v771 = vpack.c.b16 %v565, %v563
    %v772 = vpack.c.b16 %v568, %v566
    %v773 = vpack.c.b16 %v569, %v567
    %v774 = vpack.c.b16 %v572, %v570
    %v775 = vpack.c.b16 %v573, %v571
    %v776 = vpack.c.b16 %v576, %v574
    %v777 = vpack.c.b16 %v577, %v575
    %v778 = vpack.c.b16 %v580, %v578
    %v779 = vpack.c.b16 %v581, %v579
    %v780 = vpack.c.b16 %v584, %v582
    %v781 = vpack.c.b16 %v585, %v583
    %v782 = vpack.c.b16 %v588, %v586
    %v783 = vpack.c.b16 %v589, %v587
    %v784 = vpack.c.b16 %v592, %v590
    %v785 = vpack.c.b16 %v593, %v591
    %v786 = vpack.c.b16 %v596, %v594
    %v787 = vpack.c.b16 %v597, %v595
    %v788 = vpack.c.b16 %v600, %v598
    %v789 = vpack.c.b16 %v601, %v599
    %v790 = vpack.c.b16 %v604, %v602
    %v791 = vpack.c.b16 %v605, %v603
    %v792 = vpack.c.b16 %v608, %v606
    %v793 = vpack.c.b16 %v609, %v607
    %v794 = vpack.c.b16 %v612, %v610
    %v795 = vpack.c.b16 %v613, %v611
    %v796 = vpack.c.b16 %v616, %v614
    %v797 = vpack.c.b16 %v617, %v615
    %v798 = vpack.c.b16 %v620, %v618
    %v799 = vpack.c.b16 %v621, %v619
    %v800 = vpack.c.b16 %v624, %v622
    %v801 = vpack.c.b16 %v625, %v623
    %v802 = vpack.c.b16 %v628, %v626
    %v803 = vpack.c.b16 %v629, %v627
    %v804 = vpack.c.b16 %v632, %v630
    %v805 = vpack.c.b16 %v633, %v631
    %v806 = vpack.c.b16 %v636, %v634
    %v807 = vpack.c.b16 %v637, %v635
    %v808 = vpack.c.b16 %v640, %v638
    %v809 = vpack.c.b16 %v641, %v639
    %v810 = vpack.c.b16 %v644, %v642
    %v811 = vpack.c.b16 %v645, %v643
    %v812 = vpack.c.b16 %v648, %v646
    %v813 = vpack.c.b16 %v649, %v647
    %v814 = vpack.c.b16 %v652, %v650
    %v815 = vpack.c.b16 %v653, %v651
    %v816 = vpack.c.b16 %v656, %v654
    %v817 = vpack.c.b16 %v657, %v655
    %v818 = vpack.c.b16 %v660, %v658
    %v819 = vpack.c.b16 %v661, %v659
    %v820 = vpack.c.b16 %v664, %v662
    %v821 = vpack.c.b16 %v665, %v663
    %v822 = vpack.c.b16 %v668, %v666
    %v823 = vpack.c.b16 %v669, %v667
    %v824 = vpack.c.b16 %v672, %v670
    %v825 = vpack.c.b16 %v673, %v671
    %v826 = vpack.c.b16 %v676, %v674
    %v827 = vpack.c.b16 %v677, %v675
    %v828 = vpack.c.b16 %v680, %v678
    %v829 = vpack.c.b16 %v681, %v679
    %v830 = vpack.c.b16 %v684, %v682
    %v831 = vpack.c.b16 %v685, %v683
    %v832 = vpack.c.b16 %v688, %v686
    %v833 = vpack.c.b16 %v689, %v687
    %v834 = vpack.c.b16 %v692, %v690
    %v835 = vpack.c.b16 %v693, %v691
    %v836 = vpack.c.b16 %v696, %v694
    %v837 = vpack.c.b16 %v697, %v695
    %v838 = vpack.c.b16 %v700, %v698
    %v839 = vpack.c.b16 %v701, %v699
    %v840 = vpack.c.b16 %v704, %v702
    %v841 = vpack.c.b16 %v705, %v703
    %v842 = vpack.c.b16 %v708, %v706
    %v843 = vpack.c.b16 %v709, %v707
    %v844 = vpack.c.b16 %v712, %v710
    %v845 = vpack.c.b16 %v713, %v711
    %v846 = vpack.c.b16 %v716, %v714
    %v847 = vpack.c.b16 %v717, %v715
    %v848 = vpack.c.b16 %v720, %v718
    %v849 = vpack.c.b16 %v721, %v719
    %978 = vmatprep.subr.bf16.mxu0 %v723
    %979 = vmatpush1.bf16.msra.mxu0 %v722
    %980 = vmatprep.subr.bf16.mxu0 %v725
    %981 = vmatpush1.bf16.msra.mxu0 %v724
    %982 = vmatprep.subr.bf16.mxu0 %v727
    %983 = vmatpush1.bf16.msra.mxu0 %v726
    %984 = vmatprep.subr.bf16.mxu0 %v729
    %985 = vmatpush1.bf16.msra.mxu0 %v728
    %986 = vmatprep.subr.bf16.mxu0 %v731
    %987 = vmatpush1.bf16.msra.mxu0 %v730
    %988 = vmatprep.subr.bf16.mxu0 %v733
    %989 = vmatpush1.bf16.msra.mxu0 %v732
    %990 = vmatprep.subr.bf16.mxu0 %v735
    %991 = vmatpush1.bf16.msra.mxu0 %v734
    %992 = vmatprep.subr.bf16.mxu0 %v737
    %993 = vmatpush1.bf16.msra.mxu0 %v736
    %994 = vmatprep.subr.bf16.mxu0 %v739
    %995 = vmatpush1.bf16.msra.mxu0 %v738
    %996 = vmatprep.subr.bf16.mxu0 %v741
    %997 = vmatpush1.bf16.msra.mxu0 %v740
    %998 = vmatprep.subr.bf16.mxu0 %v743
    %999 = vmatpush1.bf16.msra.mxu0 %v742
    %1000 = vmatprep.subr.bf16.mxu0 %v745
    %1001 = vmatpush1.bf16.msra.mxu0 %v744
    %1002 = vmatprep.subr.bf16.mxu0 %v747
    %1003 = vmatpush1.bf16.msra.mxu0 %v746
    %1004 = vmatprep.subr.bf16.mxu0 %v749
    %1005 = vmatpush1.bf16.msra.mxu0 %v748
    %1006 = vmatprep.subr.bf16.mxu0 %v751
    %1007 = vmatpush1.bf16.msra.mxu0 %v750
    %1008 = vmatprep.subr.bf16.mxu0 %v753
    %1009 = vmatpush1.bf16.msra.mxu0 %v752
    %1010 = vmatprep.mubr.bf16.mxu0 %v191
    %1011 = vmatmul.mubr.bf16.gmra.mrb[0].mxu0 %v190
    %v1012 = vpop.f32.mrb[0].mxu0
    %v1013 = vadd.f32 %v331, %v1012
    %v1014 = vpop.f32.mrb[0].mxu0
    %v1015 = vadd.f32 %v335, %v1014
    %v1016 = vpop.f32.mrb[0].mxu0
    %v1017 = vadd.f32 %v331, %v1016
    %v1018 = vpop.f32.mrb[0].mxu0
    %v1019 = vadd.f32 %v335, %v1018
    %1020 = vdwg.mxu0
    %1021 = vmatprep.subr.bf16.mxu0 %v755
    %1022 = vmatpush1.bf16.msra.mxu0 %v754
    %1023 = vmatprep.subr.bf16.mxu0 %v757
    %1024 = vmatpush1.bf16.msra.mxu0 %v756
    %1025 = vmatprep.subr.bf16.mxu0 %v759
    %1026 = vmatpush1.bf16.msra.mxu0 %v758
    %1027 = vmatprep.subr.bf16.mxu0 %v761
    %1028 = vmatpush1.bf16.msra.mxu0 %v760
    %1029 = vmatprep.subr.bf16.mxu0 %v763
    %1030 = vmatpush1.bf16.msra.mxu0 %v762
    %1031 = vmatprep.subr.bf16.mxu0 %v765
    %1032 = vmatpush1.bf16.msra.mxu0 %v764
    %1033 = vmatprep.subr.bf16.mxu0 %v767
    %1034 = vmatpush1.bf16.msra.mxu0 %v766
    %1035 = vmatprep.subr.bf16.mxu0 %v769
    %1036 = vmatpush1.bf16.msra.mxu0 %v768
    %1037 = vmatprep.subr.bf16.mxu0 %v771
    %1038 = vmatpush1.bf16.msra.mxu0 %v770
    %1039 = vmatprep.subr.bf16.mxu0 %v773
    %1040 = vmatpush1.bf16.msra.mxu0 %v772
    %1041 = vmatprep.subr.bf16.mxu0 %v775
    %1042 = vmatpush1.bf16.msra.mxu0 %v774
    %1043 = vmatprep.subr.bf16.mxu0 %v777
    %1044 = vmatpush1.bf16.msra.mxu0 %v776
    %1045 = vmatprep.subr.bf16.mxu0 %v779
    %1046 = vmatpush1.bf16.msra.mxu0 %v778
    %1047 = vmatprep.subr.bf16.mxu0 %v781
    %1048 = vmatpush1.bf16.msra.mxu0 %v780
    %1049 = vmatprep.subr.bf16.mxu0 %v783
    %1050 = vmatpush1.bf16.msra.mxu0 %v782
    %1051 = vmatprep.subr.bf16.mxu0 %v785
    %1052 = vmatpush1.bf16.msra.mxu0 %v784
    %1053 = vmatprep.mubr.bf16.mxu0 %v193
    %1054 = vmatmul.mubr.bf16.gmra.mrb[0].mxu0 %v192
    %v1055 = vpop.f32.mrb[0].mxu0
    %v1056 = vadd.f32 %v1013, %v1055
    %v1057 = vpop.f32.mrb[0].mxu0
    %v1058 = vadd.f32 %v1015, %v1057
    %v1059 = vpop.f32.mrb[0].mxu0
    %v1060 = vadd.f32 %v1017, %v1059
    %v1061 = vpop.f32.mrb[0].mxu0
    %v1062 = vadd.f32 %v1019, %v1061
    %1063 = vdwg.mxu0
    %1064 = vmatprep.subr.bf16.mxu0 %v787
    %1065 = vmatpush1.bf16.msra.mxu0 %v786
    %1066 = vmatprep.subr.bf16.mxu0 %v789
    %1067 = vmatpush1.bf16.msra.mxu0 %v788
    %1068 = vmatprep.subr.bf16.mxu0 %v791
    %1069 = vmatpush1.bf16.msra.mxu0 %v790
    %1070 = vmatprep.subr.bf16.mxu0 %v793
    %1071 = vmatpush1.bf16.msra.mxu0 %v792
    %1072 = vmatprep.subr.bf16.mxu0 %v795
    %1073 = vmatpush1.bf16.msra.mxu0 %v794
    %1074 = vmatprep.subr.bf16.mxu0 %v797
    %1075 = vmatpush1.bf16.msra.mxu0 %v796
    %1076 = vmatprep.subr.bf16.mxu0 %v799
    %1077 = vmatpush1.bf16.msra.mxu0 %v798
    %1078 = vmatprep.subr.bf16.mxu0 %v801
    %1079 = vmatpush1.bf16.msra.mxu0 %v800
    %1080 = vmatprep.subr.bf16.mxu0 %v803
    %1081 = vmatpush1.bf16.msra.mxu0 %v802
    %1082 = vmatprep.subr.bf16.mxu0 %v805
    %1083 = vmatpush1.bf16.msra.mxu0 %v804
    %1084 = vmatprep.subr.bf16.mxu0 %v807
    %1085 = vmatpush1.bf16.msra.mxu0 %v806
    %1086 = vmatprep.subr.bf16.mxu0 %v809
    %1087 = vmatpush1.bf16.msra.mxu0 %v808
    %1088 = vmatprep.subr.bf16.mxu0 %v811
    %1089 = vmatpush1.bf16.msra.mxu0 %v810
    %1090 = vmatprep.subr.bf16.mxu0 %v813
    %1091 = vmatpush1.bf16.msra.mxu0 %v812
    %1092 = vmatprep.subr.bf16.mxu0 %v815
    %1093 = vmatpush1.bf16.msra.mxu0 %v814
    %1094 = vmatprep.subr.bf16.mxu0 %v817
    %1095 = vmatpush1.bf16.msra.mxu0 %v816
    %1096 = vmatprep.mubr.bf16.mxu0 %v195
    %1097 = vmatmul.mubr.bf16.gmra.mrb[0].mxu0 %v194
    %v1098 = vpop.f32.mrb[0].mxu0
    %v1099 = vadd.f32 %v1056, %v1098
    %v1100 = vpop.f32.mrb[0].mxu0
    %v1101 = vadd.f32 %v1058, %v1100
    %v1102 = vpop.f32.mrb[0].mxu0
    %v1103 = vadd.f32 %v1060, %v1102
    %v1104 = vpop.f32.mrb[0].mxu0
    %v1105 = vadd.f32 %v1062, %v1104
    %1106 = vdwg.mxu0
    %1107 = vmatprep.subr.bf16.mxu0 %v819
    %1108 = vmatpush1.bf16.msra.mxu0 %v818
    %1109 = vmatprep.subr.bf16.mxu0 %v821
    %1110 = vmatpush1.bf16.msra.mxu0 %v820
    %1111 = vmatprep.subr.bf16.mxu0 %v823
    %1112 = vmatpush1.bf16.msra.mxu0 %v822
    %1113 = vmatprep.subr.bf16.mxu0 %v825
    %1114 = vmatpush1.bf16.msra.mxu0 %v824
    %1115 = vmatprep.subr.bf16.mxu0 %v827
    %1116 = vmatpush1.bf16.msra.mxu0 %v826
    %1117 = vmatprep.subr.bf16.mxu0 %v829
    %1118 = vmatpush1.bf16.msra.mxu0 %v828
    %1119 = vmatprep.subr.bf16.mxu0 %v831
    %1120 = vmatpush1.bf16.msra.mxu0 %v830
    %1121 = vmatprep.subr.bf16.mxu0 %v833
    %1122 = vmatpush1.bf16.msra.mxu0 %v832
    %1123 = vmatprep.subr.bf16.mxu0 %v835
    %1124 = vmatpush1.bf16.msra.mxu0 %v834
    %1125 = vmatprep.subr.bf16.mxu0 %v837
    %1126 = vmatpush1.bf16.msra.mxu0 %v836
    %1127 = vmatprep.subr.bf16.mxu0 %v839
    %1128 = vmatpush1.bf16.msra.mxu0 %v838
    %1129 = vmatprep.subr.bf16.mxu0 %v841
    %1130 = vmatpush1.bf16.msra.mxu0 %v840
    %1131 = vmatprep.subr.bf16.mxu0 %v843
    %1132 = vmatpush1.bf16.msra.mxu0 %v842
    %1133 = vmatprep.subr.bf16.mxu0 %v845
    %1134 = vmatpush1.bf16.msra.mxu0 %v844
    %1135 = vmatprep.subr.bf16.mxu0 %v847
    %1136 = vmatpush1.bf16.msra.mxu0 %v846
    %1137 = vmatprep.subr.bf16.mxu0 %v849
    %1138 = vmatpush1.bf16.msra.mxu0 %v848
    %1139 = vmatprep.mubr.bf16.mxu0 %v197
    %1140 = vmatmul.mubr.bf16.gmra.mrb[0].mxu0 %v196
    %v1141 = vpop.f32.mrb[0].mxu0
    %v1142 = vadd.f32 %v1099, %v1141
    %v1143 = vpop.f32.mrb[0].mxu0
    %v1144 = vadd.f32 %v1101, %v1143
    %v1145 = vpop.f32.mrb[0].mxu0
    %v1146 = vadd.f32 %v1103, %v1145
    %v1147 = vpop.f32.mrb[0].mxu0
    %v1148 = vadd.f32 %v1105, %v1147
    %1149 = vdwg.mxu0
    %v1150 = vmax.f32 %v1142, 0.0
    %v1151 = vmax.f32 %v1144, 0.0
    %v1152 = vmax.f32 %v1146, 0.0
    %v1153 = vmax.f32 %v1148, 0.0
    %v1154 = vpack.c.bf16 %v1152, %v1150
    %v1155 = vpack.c.bf16 %v1153, %v1151
    %v1156 = vld [vmem:[#allocation6] sm:$0xff]
    %v1157 = vld [vmem:[#allocation6 + $0x8] sm:$0xff]
    %v1158 = vld [vmem:[#allocation6 + $0x10] sm:$0xff]
    %v1159 = vld [vmem:[#allocation6 + $0x18] sm:$0xff]
    %v1160 = vld [vmem:[#allocation6 + $0x20] sm:$0xff]
    %v1161 = vld [vmem:[#allocation6 + $0x28] sm:$0xff]
    %v1162 = vld [vmem:[#allocation6 + $0x30] sm:$0xff]
    %v1163 = vld [vmem:[#allocation6 + $0x38] sm:$0xff]
    %v1164 = vld [vmem:[#allocation6 + $0x40] sm:$0xff]
    %v1165 = vld [vmem:[#allocation6 + $0x48] sm:$0xff]
    %v1166 = vld [vmem:[#allocation6 + $0x50] sm:$0xff]
    %v1167 = vld [vmem:[#allocation6 + $0x58] sm:$0xff]
    %v1168 = vld [vmem:[#allocation6 + $0x60] sm:$0xff]
    %v1169 = vld [vmem:[#allocation6 + $0x68] sm:$0xff]
    %v1170 = vld [vmem:[#allocation6 + $0x70] sm:$0xff]
    %v1171 = vld [vmem:[#allocation6 + $0x78] sm:$0xff]
    %v1172 = vld [vmem:[#allocation6 + $0x80] sm:$0xff]
    %v1173 = vld [vmem:[#allocation6 + $0x88] sm:$0xff]
    %v1174 = vld [vmem:[#allocation6 + $0x90] sm:$0xff]
    %v1175 = vld [vmem:[#allocation6 + $0x98] sm:$0xff]
    %v1176 = vld [vmem:[#allocation6 + $0xa0] sm:$0xff]
    %v1177 = vld [vmem:[#allocation6 + $0xa8] sm:$0xff]
    %v1178 = vld [vmem:[#allocation6 + $0xb0] sm:$0xff]
    %v1179 = vld [vmem:[#allocation6 + $0xb8] sm:$0xff]
    %v1180 = vld [vmem:[#allocation6 + $0xc0] sm:$0xff]
    %v1181 = vld [vmem:[#allocation6 + $0xc8] sm:$0xff]
    %v1182 = vld [vmem:[#allocation6 + $0xd0] sm:$0xff]
    %v1183 = vld [vmem:[#allocation6 + $0xd8] sm:$0xff]
    %v1184 = vld [vmem:[#allocation6 + $0xe0] sm:$0xff]
    %v1185 = vld [vmem:[#allocation6 + $0xe8] sm:$0xff]
    %v1186 = vld [vmem:[#allocation6 + $0xf0] sm:$0xff]
    %v1187 = vld [vmem:[#allocation6 + $0xf8] sm:$0xff]
    %v1188 = vld [vmem:[#allocation7] sm:$0x3]
    %v1190 = vlaneseq
    %v1191 = vshrl.u32 %v1190, 7
    %v1192 = vsub.s32 0, %v1191
    %v1193 = vrot.slane %v1188, %v1192
    %v1194 = vlaneseq
    %v1195 = vshrl.u32 %v1194, 7
    %v1196 = vsub.s32 1, %v1195
    %v1197 = vrot.slane %v1188, %v1196
    %v1232 = vunpack.c.l.b16 %v1156
    %v1233 = vunpack.c.h.b16 %v1156
    %v1234 = vunpack.c.l.b16 %v1157
    %v1235 = vunpack.c.h.b16 %v1157
    %v1236 = vunpack.c.l.b16 %v1158
    %v1237 = vunpack.c.h.b16 %v1158
    %v1238 = vunpack.c.l.b16 %v1159
    %v1239 = vunpack.c.h.b16 %v1159
    %v1240 = vunpack.c.l.b16 %v1160
    %v1241 = vunpack.c.h.b16 %v1160
    %v1242 = vunpack.c.l.b16 %v1161
    %v1243 = vunpack.c.h.b16 %v1161
    %v1244 = vunpack.c.l.b16 %v1162
    %v1245 = vunpack.c.h.b16 %v1162
    %v1246 = vunpack.c.l.b16 %v1163
    %v1247 = vunpack.c.h.b16 %v1163
    %v1248 = vunpack.c.l.b16 %v1164
    %v1249 = vunpack.c.h.b16 %v1164
    %v1250 = vunpack.c.l.b16 %v1165
    %v1251 = vunpack.c.h.b16 %v1165
    %v1252 = vunpack.c.l.b16 %v1166
    %v1253 = vunpack.c.h.b16 %v1166
    %v1254 = vunpack.c.l.b16 %v1167
    %v1255 = vunpack.c.h.b16 %v1167
    %v1256 = vunpack.c.l.b16 %v1168
    %v1257 = vunpack.c.h.b16 %v1168
    %v1258 = vunpack.c.l.b16 %v1169
    %v1259 = vunpack.c.h.b16 %v1169
    %v1260 = vunpack.c.l.b16 %v1170
    %v1261 = vunpack.c.h.b16 %v1170
    %v1262 = vunpack.c.l.b16 %v1171
    %v1263 = vunpack.c.h.b16 %v1171
    %v1264 = vunpack.c.l.b16 %v1172
    %v1265 = vunpack.c.h.b16 %v1172
    %v1266 = vunpack.c.l.b16 %v1173
    %v1267 = vunpack.c.h.b16 %v1173
    %v1268 = vunpack.c.l.b16 %v1174
    %v1269 = vunpack.c.h.b16 %v1174
    %v1270 = vunpack.c.l.b16 %v1175
    %v1271 = vunpack.c.h.b16 %v1175
    %v1272 = vunpack.c.l.b16 %v1176
    %v1273 = vunpack.c.h.b16 %v1176
    %v1274 = vunpack.c.l.b16 %v1177
    %v1275 = vunpack.c.h.b16 %v1177
    %v1276 = vunpack.c.l.b16 %v1178
    %v1277 = vunpack.c.h.b16 %v1178
    %v1278 = vunpack.c.l.b16 %v1179
    %v1279 = vunpack.c.h.b16 %v1179
    %v1280 = vunpack.c.l.b16 %v1180
    %v1281 = vunpack.c.h.b16 %v1180
    %v1282 = vunpack.c.l.b16 %v1181
    %v1283 = vunpack.c.h.b16 %v1181
    %v1284 = vunpack.c.l.b16 %v1182
    %v1285 = vunpack.c.h.b16 %v1182
    %v1286 = vunpack.c.l.b16 %v1183
    %v1287 = vunpack.c.h.b16 %v1183
    %v1288 = vunpack.c.l.b16 %v1184
    %v1289 = vunpack.c.h.b16 %v1184
    %v1290 = vunpack.c.l.b16 %v1185
    %v1291 = vunpack.c.h.b16 %v1185
    %v1292 = vunpack.c.l.b16 %v1186
    %v1293 = vunpack.c.h.b16 %v1186
    %v1294 = vunpack.c.l.b16 %v1187
    %v1295 = vunpack.c.h.b16 %v1187
    %v1296 = vpack.c.b16 %v1234, %v1232
    %v1297 = vpack.c.b16 %v1235, %v1233
    %v1298 = vpack.c.b16 %v1238, %v1236
    %v1299 = vpack.c.b16 %v1239, %v1237
    %v1300 = vpack.c.b16 %v1242, %v1240
    %v1301 = vpack.c.b16 %v1243, %v1241
    %v1302 = vpack.c.b16 %v1246, %v1244
    %v1303 = vpack.c.b16 %v1247, %v1245
    %v1304 = vpack.c.b16 %v1250, %v1248
    %v1305 = vpack.c.b16 %v1251, %v1249
    %v1306 = vpack.c.b16 %v1254, %v1252
    %v1307 = vpack.c.b16 %v1255, %v1253
    %v1308 = vpack.c.b16 %v1258, %v1256
    %v1309 = vpack.c.b16 %v1259, %v1257
    %v1310 = vpack.c.b16 %v1262, %v1260
    %v1311 = vpack.c.b16 %v1263, %v1261
    %v1312 = vpack.c.b16 %v1266, %v1264
    %v1313 = vpack.c.b16 %v1267, %v1265
    %v1314 = vpack.c.b16 %v1270, %v1268
    %v1315 = vpack.c.b16 %v1271, %v1269
    %v1316 = vpack.c.b16 %v1274, %v1272
    %v1317 = vpack.c.b16 %v1275, %v1273
    %v1318 = vpack.c.b16 %v1278, %v1276
    %v1319 = vpack.c.b16 %v1279, %v1277
    %v1320 = vpack.c.b16 %v1282, %v1280
    %v1321 = vpack.c.b16 %v1283, %v1281
    %v1322 = vpack.c.b16 %v1286, %v1284
    %v1323 = vpack.c.b16 %v1287, %v1285
    %v1324 = vpack.c.b16 %v1290, %v1288
    %v1325 = vpack.c.b16 %v1291, %v1289
    %v1326 = vpack.c.b16 %v1294, %v1292
    %v1327 = vpack.c.b16 %v1295, %v1293
    %1360 = vmatprep.subr.bf16.mxu0 %v1297
    %1361 = vmatpush1.bf16.msra.mxu0 %v1296
    %1362 = vmatprep.subr.bf16.mxu0 %v1299
    %1363 = vmatpush1.bf16.msra.mxu0 %v1298
    %1364 = vmatprep.subr.bf16.mxu0 %v1301
    %1365 = vmatpush1.bf16.msra.mxu0 %v1300
    %1366 = vmatprep.subr.bf16.mxu0 %v1303
    %1367 = vmatpush1.bf16.msra.mxu0 %v1302
    %1368 = vmatprep.subr.bf16.mxu0 %v1305
    %1369 = vmatpush1.bf16.msra.mxu0 %v1304
    %1370 = vmatprep.subr.bf16.mxu0 %v1307
    %1371 = vmatpush1.bf16.msra.mxu0 %v1306
    %1372 = vmatprep.subr.bf16.mxu0 %v1309
    %1373 = vmatpush1.bf16.msra.mxu0 %v1308
    %1374 = vmatprep.subr.bf16.mxu0 %v1311
    %1375 = vmatpush1.bf16.msra.mxu0 %v1310
    %1376 = vmatprep.subr.bf16.mxu0 %v1313
    %1377 = vmatpush1.bf16.msra.mxu0 %v1312
    %1378 = vmatprep.subr.bf16.mxu0 %v1315
    %1379 = vmatpush1.bf16.msra.mxu0 %v1314
    %1380 = vmatprep.subr.bf16.mxu0 %v1317
    %1381 = vmatpush1.bf16.msra.mxu0 %v1316
    %1382 = vmatprep.subr.bf16.mxu0 %v1319
    %1383 = vmatpush1.bf16.msra.mxu0 %v1318
    %1384 = vmatprep.subr.bf16.mxu0 %v1321
    %1385 = vmatpush1.bf16.msra.mxu0 %v1320
    %1386 = vmatprep.subr.bf16.mxu0 %v1323
    %1387 = vmatpush1.bf16.msra.mxu0 %v1322
    %1388 = vmatprep.subr.bf16.mxu0 %v1325
    %1389 = vmatpush1.bf16.msra.mxu0 %v1324
    %1390 = vmatprep.subr.bf16.mxu0 %v1327
    %1391 = vmatpush1.bf16.msra.mxu0 %v1326
    %1392 = vmatprep.mubr.bf16.mxu0 %v1155
    %1393 = vmatmul.mubr.bf16.gmra.mrb[0].mxu0 %v1154
    %v1394 = vpop.f32.mrb[0].mxu0
    %v1395 = vadd.f32 %v1193, %v1394
    %v1396 = vpop.f32.mrb[0].mxu0
    %v1397 = vadd.f32 %v1197, %v1396
    %v1398 = vpop.f32.mrb[0].mxu0
    %v1399 = vadd.f32 %v1193, %v1398
    %v1400 = vpop.f32.mrb[0].mxu0
    %v1401 = vadd.f32 %v1197, %v1400
    %1402 = vdwg.mxu0
    %v1403 = vmax.f32 %v1395, 0.0
    %v1404 = vmax.f32 %v1397, 0.0
    %v1405 = vmax.f32 %v1399, 0.0
    %v1406 = vmax.f32 %v1401, 0.0
    %v1407 = vld [vmem:[%s5] sm:$0xff]
    %v1408 = vld [vmem:[%s5 + $0x8] sm:$0xff]
    %v1409 = vpack.c.bf16 %v1408, %v1407
    %v1410 = vld [vmem:[#allocation9] sm:$0xff]
    %v1411 = vld [vmem:[#allocation9 + $0x8] sm:$0xff]
    %v1412 = vld [vmem:[#allocation9 + $0x10] sm:$0xff]
    %v1413 = vld [vmem:[#allocation9 + $0x18] sm:$0xff]
    %v1414 = vld [vmem:[#allocation9 + $0x20] sm:$0xff]
    %v1415 = vld [vmem:[#allocation9 + $0x28] sm:$0xff]
    %v1416 = vld [vmem:[#allocation9 + $0x30] sm:$0xff]
    %v1417 = vld [vmem:[#allocation9 + $0x38] sm:$0xff]
    %v1418 = vld [vmem:[#allocation9 + $0x40] sm:$0xff]
    %v1419 = vld [vmem:[#allocation9 + $0x48] sm:$0xff]
    %v1420 = vld [vmem:[#allocation9 + $0x50] sm:$0xff]
    %v1421 = vld [vmem:[#allocation9 + $0x58] sm:$0xff]
    %v1422 = vld [vmem:[#allocation9 + $0x60] sm:$0xff]
    %v1423 = vld [vmem:[#allocation9 + $0x68] sm:$0xff]
    %v1424 = vld [vmem:[#allocation9 + $0x70] sm:$0xff]
    %v1425 = vld [vmem:[#allocation9 + $0x78] sm:$0xff]
    %v1426 = vld [vmem:[#allocation10] sm:$0x3]
    %v1428 = vlaneseq
    %v1429 = vshrl.u32 %v1428, 7
    %v1430 = vsub.s32 0, %v1429
    %v1431 = vrot.slane %v1426, %v1430
    %v1432 = vlaneseq
    %v1433 = vshrl.u32 %v1432, 7
    %v1434 = vsub.s32 1, %v1433
    %v1435 = vrot.slane %v1426, %v1434
    %v1454 = vunpack.c.l.b16 %v1410
    %v1455 = vunpack.c.h.b16 %v1410
    %v1456 = vunpack.c.l.b16 %v1411
    %v1457 = vunpack.c.h.b16 %v1411
    %v1458 = vunpack.c.l.b16 %v1412
    %v1459 = vunpack.c.h.b16 %v1412
    %v1460 = vunpack.c.l.b16 %v1413
    %v1461 = vunpack.c.h.b16 %v1413
    %v1462 = vunpack.c.l.b16 %v1414
    %v1463 = vunpack.c.h.b16 %v1414
    %v1464 = vunpack.c.l.b16 %v1415
    %v1465 = vunpack.c.h.b16 %v1415
    %v1466 = vunpack.c.l.b16 %v1416
    %v1467 = vunpack.c.h.b16 %v1416
    %v1468 = vunpack.c.l.b16 %v1417
    %v1469 = vunpack.c.h.b16 %v1417
    %v1470 = vunpack.c.l.b16 %v1418
    %v1471 = vunpack.c.h.b16 %v1418
    %v1472 = vunpack.c.l.b16 %v1419
    %v1473 = vunpack.c.h.b16 %v1419
    %v1474 = vunpack.c.l.b16 %v1420
    %v1475 = vunpack.c.h.b16 %v1420
    %v1476 = vunpack.c.l.b16 %v1421
    %v1477 = vunpack.c.h.b16 %v1421
    %v1478 = vunpack.c.l.b16 %v1422
    %v1479 = vunpack.c.h.b16 %v1422
    %v1480 = vunpack.c.l.b16 %v1423
    %v1481 = vunpack.c.h.b16 %v1423
    %v1482 = vunpack.c.l.b16 %v1424
    %v1483 = vunpack.c.h.b16 %v1424
    %v1484 = vunpack.c.l.b16 %v1425
    %v1485 = vunpack.c.h.b16 %v1425
    %v1486 = vpack.c.b16 %v1456, %v1454
    %v1487 = vpack.c.b16 %v1457, %v1455
    %v1488 = vpack.c.b16 %v1460, %v1458
    %v1489 = vpack.c.b16 %v1461, %v1459
    %v1490 = vpack.c.b16 %v1464, %v1462
    %v1491 = vpack.c.b16 %v1465, %v1463
    %v1492 = vpack.c.b16 %v1468, %v1466
    %v1493 = vpack.c.b16 %v1469, %v1467
    %v1494 = vpack.c.b16 %v1472, %v1470
    %v1495 = vpack.c.b16 %v1473, %v1471
    %v1496 = vpack.c.b16 %v1476, %v1474
    %v1497 = vpack.c.b16 %v1477, %v1475
    %v1498 = vpack.c.b16 %v1480, %v1478
    %v1499 = vpack.c.b16 %v1481, %v1479
    %v1500 = vpack.c.b16 %v1484, %v1482
    %v1501 = vpack.c.b16 %v1485, %v1483
    %1518 = vmatprep.subr.bf16.mxu0 %v1487
    %1519 = vmatpush1.bf16.msra.mxu0 %v1486
    %1520 = vmatprep.subr.bf16.mxu0 %v1489
    %1521 = vmatpush1.bf16.msra.mxu0 %v1488
    %1522 = vmatprep.subr.bf16.mxu0 %v1491
    %1523 = vmatpush1.bf16.msra.mxu0 %v1490
    %1524 = vmatprep.subr.bf16.mxu0 %v1493
    %1525 = vmatpush1.bf16.msra.mxu0 %v1492
    %1526 = vmatprep.subr.bf16.mxu0 %v1495
    %1527 = vmatpush1.bf16.msra.mxu0 %v1494
    %1528 = vmatprep.subr.bf16.mxu0 %v1497
    %1529 = vmatpush1.bf16.msra.mxu0 %v1496
    %1530 = vmatprep.subr.bf16.mxu0 %v1499
    %1531 = vmatpush1.bf16.msra.mxu0 %v1498
    %1532 = vmatprep.subr.bf16.mxu0 %v1501
    %1533 = vmatpush1.bf16.msra.mxu0 %v1500
    %1534 = vmatprep.subr.bf16.mxu0 0
    %1535 = vmatpush1.bf16.msra.mxu0 0
    %1536 = vmatprep.subr.bf16.mxu0 0
    %1537 = vmatpush1.bf16.msra.mxu0 0
    %1538 = vmatprep.subr.bf16.mxu0 0
    %1539 = vmatpush1.bf16.msra.mxu0 0
    %1540 = vmatprep.subr.bf16.mxu0 0
    %1541 = vmatpush1.bf16.msra.mxu0 0
    %1542 = vmatprep.subr.bf16.mxu0 0
    %1543 = vmatpush1.bf16.msra.mxu0 0
    %1544 = vmatprep.subr.bf16.mxu0 0
    %1545 = vmatpush1.bf16.msra.mxu0 0
    %1546 = vmatprep.subr.bf16.mxu0 0
    %1547 = vmatpush1.bf16.msra.mxu0 0
    %1548 = vmatprep.subr.bf16.mxu0 0
    %1549 = vmatpush1.bf16.msra.mxu0 0
    %1550 = vmatprep.mubr.bf16.mxu0 0
    %1551 = vmatmul.mubr.bf16.gmra.mrb[0].mxu0 %v1409
    %v1552 = vpop.f32.mrb[0].mxu0
    %v1553 = vadd.f32 %v1431, %v1552
    %v1554 = vpop.f32.mrb[0].mxu0
    %v1555 = vadd.f32 %v1435, %v1554
    %v1556 = vpop.f32.mrb[0].mxu0
    %v1557 = vadd.f32 %v1431, %v1556
    %v1558 = vpop.f32.mrb[0].mxu0
    %v1559 = vadd.f32 %v1435, %v1558
    %1560 = vdwg.mxu0
    %v1561 = vmax.f32 %v1553, 0.0
    %v1562 = vmax.f32 %v1555, 0.0
    %v1563 = vmax.f32 %v1557, 0.0
    %v1564 = vmax.f32 %v1559, 0.0
    %v1565 = vpack.c.bf16 %v1563, %v1561
    %v1566 = vpack.c.bf16 %v1564, %v1562
    %v1567 = vld [vmem:[#allocation12] sm:$0xff]
    %v1568 = vld [vmem:[#allocation12 + $0x8] sm:$0xff]
    %v1569 = vld [vmem:[#allocation12 + $0x10] sm:$0xff]
    %v1570 = vld [vmem:[#allocation12 + $0x18] sm:$0xff]
    %v1571 = vld [vmem:[#allocation12 + $0x20] sm:$0xff]
    %v1572 = vld [vmem:[#allocation12 + $0x28] sm:$0xff]
    %v1573 = vld [vmem:[#allocation12 + $0x30] sm:$0xff]
    %v1574 = vld [vmem:[#allocation12 + $0x38] sm:$0xff]
    %v1575 = vld [vmem:[#allocation12 + $0x40] sm:$0xff]
    %v1576 = vld [vmem:[#allocation12 + $0x48] sm:$0xff]
    %v1577 = vld [vmem:[#allocation12 + $0x50] sm:$0xff]
    %v1578 = vld [vmem:[#allocation12 + $0x58] sm:$0xff]
    %v1579 = vld [vmem:[#allocation12 + $0x60] sm:$0xff]
    %v1580 = vld [vmem:[#allocation12 + $0x68] sm:$0xff]
    %v1581 = vld [vmem:[#allocation12 + $0x70] sm:$0xff]
    %v1582 = vld [vmem:[#allocation12 + $0x78] sm:$0xff]
    %v1583 = vld [vmem:[#allocation12 + $0x80] sm:$0xff]
    %v1584 = vld [vmem:[#allocation12 + $0x88] sm:$0xff]
    %v1585 = vld [vmem:[#allocation12 + $0x90] sm:$0xff]
    %v1586 = vld [vmem:[#allocation12 + $0x98] sm:$0xff]
    %v1587 = vld [vmem:[#allocation12 + $0xa0] sm:$0xff]
    %v1588 = vld [vmem:[#allocation12 + $0xa8] sm:$0xff]
    %v1589 = vld [vmem:[#allocation12 + $0xb0] sm:$0xff]
    %v1590 = vld [vmem:[#allocation12 + $0xb8] sm:$0xff]
    %v1591 = vld [vmem:[#allocation12 + $0xc0] sm:$0xff]
    %v1592 = vld [vmem:[#allocation12 + $0xc8] sm:$0xff]
    %v1593 = vld [vmem:[#allocation12 + $0xd0] sm:$0xff]
    %v1594 = vld [vmem:[#allocation12 + $0xd8] sm:$0xff]
    %v1595 = vld [vmem:[#allocation12 + $0xe0] sm:$0xff]
    %v1596 = vld [vmem:[#allocation12 + $0xe8] sm:$0xff]
    %v1597 = vld [vmem:[#allocation12 + $0xf0] sm:$0xff]
    %v1598 = vld [vmem:[#allocation12 + $0xf8] sm:$0xff]
    %v1599 = vld [vmem:[#allocation13] sm:$0x3]
    %v1601 = vlaneseq
    %v1602 = vshrl.u32 %v1601, 7
    %v1603 = vsub.s32 0, %v1602
    %v1604 = vrot.slane %v1599, %v1603
    %v1605 = vlaneseq
    %v1606 = vshrl.u32 %v1605, 7
    %v1607 = vsub.s32 1, %v1606
    %v1608 = vrot.slane %v1599, %v1607
    %v1643 = vunpack.c.l.b16 %v1567
    %v1644 = vunpack.c.h.b16 %v1567
    %v1645 = vunpack.c.l.b16 %v1568
    %v1646 = vunpack.c.h.b16 %v1568
    %v1647 = vunpack.c.l.b16 %v1569
    %v1648 = vunpack.c.h.b16 %v1569
    %v1649 = vunpack.c.l.b16 %v1570
    %v1650 = vunpack.c.h.b16 %v1570
    %v1651 = vunpack.c.l.b16 %v1571
    %v1652 = vunpack.c.h.b16 %v1571
    %v1653 = vunpack.c.l.b16 %v1572
    %v1654 = vunpack.c.h.b16 %v1572
    %v1655 = vunpack.c.l.b16 %v1573
    %v1656 = vunpack.c.h.b16 %v1573
    %v1657 = vunpack.c.l.b16 %v1574
    %v1658 = vunpack.c.h.b16 %v1574
    %v1659 = vunpack.c.l.b16 %v1575
    %v1660 = vunpack.c.h.b16 %v1575
    %v1661 = vunpack.c.l.b16 %v1576
    %v1662 = vunpack.c.h.b16 %v1576
    %v1663 = vunpack.c.l.b16 %v1577
    %v1664 = vunpack.c.h.b16 %v1577
    %v1665 = vunpack.c.l.b16 %v1578
    %v1666 = vunpack.c.h.b16 %v1578
    %v1667 = vunpack.c.l.b16 %v1579
    %v1668 = vunpack.c.h.b16 %v1579
    %v1669 = vunpack.c.l.b16 %v1580
    %v1670 = vunpack.c.h.b16 %v1580
    %v1671 = vunpack.c.l.b16 %v1581
    %v1672 = vunpack.c.h.b16 %v1581
    %v1673 = vunpack.c.l.b16 %v1582
    %v1674 = vunpack.c.h.b16 %v1582
    %v1675 = vunpack.c.l.b16 %v1583
    %v1676 = vunpack.c.h.b16 %v1583
    %v1677 = vunpack.c.l.b16 %v1584
    %v1678 = vunpack.c.h.b16 %v1584
    %v1679 = vunpack.c.l.b16 %v1585
    %v1680 = vunpack.c.h.b16 %v1585
    %v1681 = vunpack.c.l.b16 %v1586
    %v1682 = vunpack.c.h.b16 %v1586
    %v1683 = vunpack.c.l.b16 %v1587
    %v1684 = vunpack.c.h.b16 %v1587
    %v1685 = vunpack.c.l.b16 %v1588
    %v1686 = vunpack.c.h.b16 %v1588
    %v1687 = vunpack.c.l.b16 %v1589
    %v1688 = vunpack.c.h.b16 %v1589
    %v1689 = vunpack.c.l.b16 %v1590
    %v1690 = vunpack.c.h.b16 %v1590
    %v1691 = vunpack.c.l.b16 %v1591
    %v1692 = vunpack.c.h.b16 %v1591
    %v1693 = vunpack.c.l.b16 %v1592
    %v1694 = vunpack.c.h.b16 %v1592
    %v1695 = vunpack.c.l.b16 %v1593
    %v1696 = vunpack.c.h.b16 %v1593
    %v1697 = vunpack.c.l.b16 %v1594
    %v1698 = vunpack.c.h.b16 %v1594
    %v1699 = vunpack.c.l.b16 %v1595
    %v1700 = vunpack.c.h.b16 %v1595
    %v1701 = vunpack.c.l.b16 %v1596
    %v1702 = vunpack.c.h.b16 %v1596
    %v1703 = vunpack.c.l.b16 %v1597
    %v1704 = vunpack.c.h.b16 %v1597
    %v1705 = vunpack.c.l.b16 %v1598
    %v1706 = vunpack.c.h.b16 %v1598
    %v1707 = vpack.c.b16 %v1645, %v1643
    %v1708 = vpack.c.b16 %v1646, %v1644
    %v1709 = vpack.c.b16 %v1649, %v1647
    %v1710 = vpack.c.b16 %v1650, %v1648
    %v1711 = vpack.c.b16 %v1653, %v1651
    %v1712 = vpack.c.b16 %v1654, %v1652
    %v1713 = vpack.c.b16 %v1657, %v1655
    %v1714 = vpack.c.b16 %v1658, %v1656
    %v1715 = vpack.c.b16 %v1661, %v1659
    %v1716 = vpack.c.b16 %v1662, %v1660
    %v1717 = vpack.c.b16 %v1665, %v1663
    %v1718 = vpack.c.b16 %v1666, %v1664
    %v1719 = vpack.c.b16 %v1669, %v1667
    %v1720 = vpack.c.b16 %v1670, %v1668
    %v1721 = vpack.c.b16 %v1673, %v1671
    %v1722 = vpack.c.b16 %v1674, %v1672
    %v1723 = vpack.c.b16 %v1677, %v1675
    %v1724 = vpack.c.b16 %v1678, %v1676
    %v1725 = vpack.c.b16 %v1681, %v1679
    %v1726 = vpack.c.b16 %v1682, %v1680
    %v1727 = vpack.c.b16 %v1685, %v1683
    %v1728 = vpack.c.b16 %v1686, %v1684
    %v1729 = vpack.c.b16 %v1689, %v1687
    %v1730 = vpack.c.b16 %v1690, %v1688
    %v1731 = vpack.c.b16 %v1693, %v1691
    %v1732 = vpack.c.b16 %v1694, %v1692
    %v1733 = vpack.c.b16 %v1697, %v1695
    %v1734 = vpack.c.b16 %v1698, %v1696
    %v1735 = vpack.c.b16 %v1701, %v1699
    %v1736 = vpack.c.b16 %v1702, %v1700
    %v1737 = vpack.c.b16 %v1705, %v1703
    %v1738 = vpack.c.b16 %v1706, %v1704
    %1771 = vmatprep.subr.bf16.mxu0 %v1708
    %1772 = vmatpush1.bf16.msra.mxu0 %v1707
    %1773 = vmatprep.subr.bf16.mxu0 %v1710
    %1774 = vmatpush1.bf16.msra.mxu0 %v1709
    %1775 = vmatprep.subr.bf16.mxu0 %v1712
    %1776 = vmatpush1.bf16.msra.mxu0 %v1711
    %1777 = vmatprep.subr.bf16.mxu0 %v1714
    %1778 = vmatpush1.bf16.msra.mxu0 %v1713
    %1779 = vmatprep.subr.bf16.mxu0 %v1716
    %1780 = vmatpush1.bf16.msra.mxu0 %v1715
    %1781 = vmatprep.subr.bf16.mxu0 %v1718
    %1782 = vmatpush1.bf16.msra.mxu0 %v1717
    %1783 = vmatprep.subr.bf16.mxu0 %v1720
    %1784 = vmatpush1.bf16.msra.mxu0 %v1719
    %1785 = vmatprep.subr.bf16.mxu0 %v1722
    %1786 = vmatpush1.bf16.msra.mxu0 %v1721
    %1787 = vmatprep.subr.bf16.mxu0 %v1724
    %1788 = vmatpush1.bf16.msra.mxu0 %v1723
    %1789 = vmatprep.subr.bf16.mxu0 %v1726
    %1790 = vmatpush1.bf16.msra.mxu0 %v1725
    %1791 = vmatprep.subr.bf16.mxu0 %v1728
    %1792 = vmatpush1.bf16.msra.mxu0 %v1727
    %1793 = vmatprep.subr.bf16.mxu0 %v1730
    %1794 = vmatpush1.bf16.msra.mxu0 %v1729
    %1795 = vmatprep.subr.bf16.mxu0 %v1732
    %1796 = vmatpush1.bf16.msra.mxu0 %v1731
    %1797 = vmatprep.subr.bf16.mxu0 %v1734
    %1798 = vmatpush1.bf16.msra.mxu0 %v1733
    %1799 = vmatprep.subr.bf16.mxu0 %v1736
    %1800 = vmatpush1.bf16.msra.mxu0 %v1735
    %1801 = vmatprep.subr.bf16.mxu0 %v1738
    %1802 = vmatpush1.bf16.msra.mxu0 %v1737
    %1803 = vmatprep.mubr.bf16.mxu0 %v1566
    %1804 = vmatmul.mubr.bf16.gmra.mrb[0].mxu0 %v1565
    %v1805 = vpop.f32.mrb[0].mxu0
    %v1806 = vadd.f32 %v1604, %v1805
    %v1807 = vpop.f32.mrb[0].mxu0
    %v1808 = vadd.f32 %v1608, %v1807
    %v1809 = vpop.f32.mrb[0].mxu0
    %v1810 = vadd.f32 %v1604, %v1809
    %v1811 = vpop.f32.mrb[0].mxu0
    %v1812 = vadd.f32 %v1608, %v1811
    %1813 = vdwg.mxu0
    %v1814 = vmax.f32 %v1806, 0.0
    %v1815 = vmax.f32 %v1808, 0.0
    %v1816 = vmax.f32 %v1810, 0.0
    %v1817 = vmax.f32 %v1812, 0.0
    %v1818 = vld [vmem:[#allocation15] sm:$0xff]
    %v1819 = vld [vmem:[#allocation15 + $0x8] sm:$0xff]
    %v1820 = vld [vmem:[#allocation15 + $0x10] sm:$0xff]
    %v1821 = vld [vmem:[#allocation15 + $0x18] sm:$0xff]
    %v1822 = vld [vmem:[#allocation15 + $0x20] sm:$0xff]
    %v1823 = vld [vmem:[#allocation15 + $0x28] sm:$0xff]
    %v1824 = vld [vmem:[#allocation15 + $0x30] sm:$0xff]
    %v1825 = vld [vmem:[#allocation15 + $0x38] sm:$0xff]
    %v1826 = vld [vmem:[#allocation15 + $0x40] sm:$0xff]
    %v1827 = vld [vmem:[#allocation15 + $0x48] sm:$0xff]
    %v1828 = vld [vmem:[#allocation15 + $0x50] sm:$0xff]
    %v1829 = vld [vmem:[#allocation15 + $0x58] sm:$0xff]
    %v1830 = vld [vmem:[#allocation15 + $0x60] sm:$0xff]
    %v1831 = vld [vmem:[#allocation15 + $0x68] sm:$0xff]
    %v1832 = vld [vmem:[#allocation15 + $0x70] sm:$0xff]
    %v1833 = vld [vmem:[#allocation15 + $0x78] sm:$0xff]
    %v1834 = vld [vmem:[#allocation15 + $0x80] sm:$0xff]
    %v1835 = vld [vmem:[#allocation15 + $0x88] sm:$0xff]
    %v1836 = vld [vmem:[#allocation15 + $0x90] sm:$0xff]
    %v1837 = vld [vmem:[#allocation15 + $0x98] sm:$0xff]
    %v1838 = vld [vmem:[#allocation15 + $0xa0] sm:$0xff]
    %v1839 = vld [vmem:[#allocation15 + $0xa8] sm:$0xff]
    %v1840 = vld [vmem:[#allocation15 + $0xb0] sm:$0xff]
    %v1841 = vld [vmem:[#allocation15 + $0xb8] sm:$0xff]
    %v1842 = vld [vmem:[#allocation15 + $0xc0] sm:$0xff]
    %v1843 = vld [vmem:[#allocation15 + $0xc8] sm:$0xff]
    %v1844 = vld [vmem:[#allocation15 + $0xd0] sm:$0xff]
    %v1845 = vld [vmem:[#allocation15 + $0xd8] sm:$0xff]
    %v1846 = vld [vmem:[#allocation15 + $0xe0] sm:$0xff]
    %v1847 = vld [vmem:[#allocation15 + $0xe8] sm:$0xff]
    %v1848 = vld [vmem:[#allocation15 + $0xf0] sm:$0xff]
    %v1849 = vld [vmem:[#allocation15 + $0xf8] sm:$0xff]
    %v1850 = vld [vmem:[#allocation15 + $0x100] sm:$0xff]
    %v1851 = vld [vmem:[#allocation15 + $0x108] sm:$0xff]
    %v1852 = vld [vmem:[#allocation15 + $0x110] sm:$0xff]
    %v1853 = vld [vmem:[#allocation15 + $0x118] sm:$0xff]
    %v1854 = vld [vmem:[#allocation15 + $0x120] sm:$0xff]
    %v1855 = vld [vmem:[#allocation15 + $0x128] sm:$0xff]
    %v1856 = vld [vmem:[#allocation15 + $0x130] sm:$0xff]
    %v1857 = vld [vmem:[#allocation15 + $0x138] sm:$0xff]
    %v1858 = vld [vmem:[#allocation15 + $0x140] sm:$0xff]
    %v1859 = vld [vmem:[#allocation15 + $0x148] sm:$0xff]
    %v1860 = vld [vmem:[#allocation15 + $0x150] sm:$0xff]
    %v1861 = vld [vmem:[#allocation15 + $0x158] sm:$0xff]
    %v1862 = vld [vmem:[#allocation15 + $0x160] sm:$0xff]
    %v1863 = vld [vmem:[#allocation15 + $0x168] sm:$0xff]
    %v1864 = vld [vmem:[#allocation15 + $0x170] sm:$0xff]
    %v1865 = vld [vmem:[#allocation15 + $0x178] sm:$0xff]
    %v1866 = vld [vmem:[#allocation15 + $0x180] sm:$0xff]
    %v1867 = vld [vmem:[#allocation15 + $0x188] sm:$0xff]
    %v1868 = vld [vmem:[#allocation15 + $0x190] sm:$0xff]
    %v1869 = vld [vmem:[#allocation15 + $0x198] sm:$0xff]
    %v1870 = vld [vmem:[#allocation15 + $0x1a0] sm:$0xff]
    %v1871 = vld [vmem:[#allocation15 + $0x1a8] sm:$0xff]
    %v1872 = vld [vmem:[#allocation15 + $0x1b0] sm:$0xff]
    %v1873 = vld [vmem:[#allocation15 + $0x1b8] sm:$0xff]
    %v1874 = vld [vmem:[#allocation15 + $0x1c0] sm:$0xff]
    %v1875 = vld [vmem:[#allocation15 + $0x1c8] sm:$0xff]
    %v1876 = vld [vmem:[#allocation15 + $0x1d0] sm:$0xff]
    %v1877 = vld [vmem:[#allocation15 + $0x1d8] sm:$0xff]
    %v1878 = vld [vmem:[#allocation15 + $0x1e0] sm:$0xff]
    %v1879 = vld [vmem:[#allocation15 + $0x1e8] sm:$0xff]
    %v1880 = vld [vmem:[#allocation15 + $0x1f0] sm:$0xff]
    %v1881 = vld [vmem:[#allocation15 + $0x1f8] sm:$0xff]
    %v1882 = vld [vmem:[#allocation15 + $0x200] sm:$0xff]
    %v1883 = vld [vmem:[#allocation15 + $0x208] sm:$0xff]
    %v1884 = vld [vmem:[#allocation15 + $0x210] sm:$0xff]
    %v1885 = vld [vmem:[#allocation15 + $0x218] sm:$0xff]
    %v1886 = vld [vmem:[#allocation15 + $0x220] sm:$0xff]
    %v1887 = vld [vmem:[#allocation15 + $0x228] sm:$0xff]
    %v1888 = vld [vmem:[#allocation15 + $0x230] sm:$0xff]
    %v1889 = vld [vmem:[#allocation15 + $0x238] sm:$0xff]
    %v1890 = vld [vmem:[#allocation15 + $0x240] sm:$0xff]
    %v1891 = vld [vmem:[#allocation15 + $0x248] sm:$0xff]
    %v1892 = vld [vmem:[#allocation15 + $0x250] sm:$0xff]
    %v1893 = vld [vmem:[#allocation15 + $0x258] sm:$0xff]
    %v1894 = vld [vmem:[#allocation15 + $0x260] sm:$0xff]
    %v1895 = vld [vmem:[#allocation15 + $0x268] sm:$0xff]
    %v1896 = vld [vmem:[#allocation15 + $0x270] sm:$0xff]
    %v1897 = vld [vmem:[#allocation15 + $0x278] sm:$0xff]
    %v1898 = vld [vmem:[#allocation15 + $0x280] sm:$0xff]
    %v1899 = vld [vmem:[#allocation15 + $0x288] sm:$0xff]
    %v1900 = vld [vmem:[#allocation15 + $0x290] sm:$0xff]
    %v1901 = vld [vmem:[#allocation15 + $0x298] sm:$0xff]
    %v1902 = vld [vmem:[#allocation15 + $0x2a0] sm:$0xff]
    %v1903 = vld [vmem:[#allocation15 + $0x2a8] sm:$0xff]
    %v1904 = vld [vmem:[#allocation15 + $0x2b0] sm:$0xff]
    %v1905 = vld [vmem:[#allocation15 + $0x2b8] sm:$0xff]
    %v1906 = vld [vmem:[#allocation15 + $0x2c0] sm:$0xff]
    %v1907 = vld [vmem:[#allocation15 + $0x2c8] sm:$0xff]
    %v1908 = vld [vmem:[#allocation15 + $0x2d0] sm:$0xff]
    %v1909 = vld [vmem:[#allocation15 + $0x2d8] sm:$0xff]
    %v1910 = vld [vmem:[#allocation15 + $0x2e0] sm:$0xff]
    %v1911 = vld [vmem:[#allocation15 + $0x2e8] sm:$0xff]
    %v1912 = vld [vmem:[#allocation15 + $0x2f0] sm:$0xff]
    %v1913 = vld [vmem:[#allocation15 + $0x2f8] sm:$0xff]
    %v1914 = vld [vmem:[#allocation15 + $0x300] sm:$0xff]
    %v1915 = vld [vmem:[#allocation15 + $0x308] sm:$0xff]
    %v1916 = vld [vmem:[#allocation15 + $0x310] sm:$0xff]
    %v1917 = vld [vmem:[#allocation15 + $0x318] sm:$0xff]
    %v1918 = vld [vmem:[#allocation15 + $0x320] sm:$0xff]
    %v1919 = vld [vmem:[#allocation15 + $0x328] sm:$0xff]
    %v1920 = vld [vmem:[#allocation15 + $0x330] sm:$0xff]
    %v1921 = vld [vmem:[#allocation15 + $0x338] sm:$0xff]
    %v1922 = vld [vmem:[#allocation15 + $0x340] sm:$0xff]
    %v1923 = vld [vmem:[#allocation15 + $0x348] sm:$0xff]
    %v1924 = vld [vmem:[#allocation15 + $0x350] sm:$0xff]
    %v1925 = vld [vmem:[#allocation15 + $0x358] sm:$0xff]
    %v1926 = vld [vmem:[#allocation15 + $0x360] sm:$0xff]
    %v1927 = vld [vmem:[#allocation15 + $0x368] sm:$0xff]
    %v1928 = vld [vmem:[#allocation15 + $0x370] sm:$0xff]
    %v1929 = vld [vmem:[#allocation15 + $0x378] sm:$0xff]
    %v1930 = vld [vmem:[#allocation15 + $0x380] sm:$0xff]
    %v1931 = vld [vmem:[#allocation15 + $0x388] sm:$0xff]
    %v1932 = vld [vmem:[#allocation15 + $0x390] sm:$0xff]
    %v1933 = vld [vmem:[#allocation15 + $0x398] sm:$0xff]
    %v1934 = vld [vmem:[#allocation15 + $0x3a0] sm:$0xff]
    %v1935 = vld [vmem:[#allocation15 + $0x3a8] sm:$0xff]
    %v1936 = vld [vmem:[#allocation15 + $0x3b0] sm:$0xff]
    %v1937 = vld [vmem:[#allocation15 + $0x3b8] sm:$0xff]
    %v1938 = vld [vmem:[#allocation15 + $0x3c0] sm:$0xff]
    %v1939 = vld [vmem:[#allocation15 + $0x3c8] sm:$0xff]
    %v1940 = vld [vmem:[#allocation15 + $0x3d0] sm:$0xff]
    %v1941 = vld [vmem:[#allocation15 + $0x3d8] sm:$0xff]
    %v1942 = vld [vmem:[#allocation15 + $0x3e0] sm:$0xff]
    %v1943 = vld [vmem:[#allocation15 + $0x3e8] sm:$0xff]
    %v1944 = vld [vmem:[#allocation15 + $0x3f0] sm:$0xff]
    %v1945 = vld [vmem:[#allocation15 + $0x3f8] sm:$0xff]
    %v1946 = vld [vmem:[#allocation16] sm:$0xff]
    %v1948 = vlaneseq
    %v1949 = vshrl.u32 %v1948, 7
    %v1950 = vsub.s32 0, %v1949
    %v1951 = vrot.slane %v1946, %v1950
    %v1952 = vlaneseq
    %v1953 = vshrl.u32 %v1952, 7
    %v1954 = vsub.s32 1, %v1953
    %v1955 = vrot.slane %v1946, %v1954
    %v1956 = vlaneseq
    %v1957 = vshrl.u32 %v1956, 7
    %v1958 = vsub.s32 2, %v1957
    %v1959 = vrot.slane %v1946, %v1958
    %v1960 = vlaneseq
    %v1961 = vshrl.u32 %v1960, 7
    %v1962 = vsub.s32 3, %v1961
    %v1963 = vrot.slane %v1946, %v1962
    %v1964 = vlaneseq
    %v1965 = vshrl.u32 %v1964, 7
    %v1966 = vsub.s32 4, %v1965
    %v1967 = vrot.slane %v1946, %v1966
    %v1968 = vlaneseq
    %v1969 = vshrl.u32 %v1968, 7
    %v1970 = vsub.s32 5, %v1969
    %v1971 = vrot.slane %v1946, %v1970
    %v1972 = vlaneseq
    %v1973 = vshrl.u32 %v1972, 7
    %v1974 = vsub.s32 6, %v1973
    %v1975 = vrot.slane %v1946, %v1974
    %v1976 = vlaneseq
    %v1977 = vshrl.u32 %v1976, 7
    %v1978 = vsub.s32 7, %v1977
    %v1979 = vrot.slane %v1946, %v1978
    %v2116 = vunpack.c.l.b16 %v1818
    %v2117 = vunpack.c.h.b16 %v1818
    %v2118 = vunpack.c.l.b16 %v1819
    %v2119 = vunpack.c.h.b16 %v1819
    %v2120 = vunpack.c.l.b16 %v1820
    %v2121 = vunpack.c.h.b16 %v1820
    %v2122 = vunpack.c.l.b16 %v1821
    %v2123 = vunpack.c.h.b16 %v1821
    %v2124 = vunpack.c.l.b16 %v1822
    %v2125 = vunpack.c.h.b16 %v1822
    %v2126 = vunpack.c.l.b16 %v1823
    %v2127 = vunpack.c.h.b16 %v1823
    %v2128 = vunpack.c.l.b16 %v1824
    %v2129 = vunpack.c.h.b16 %v1824
    %v2130 = vunpack.c.l.b16 %v1825
    %v2131 = vunpack.c.h.b16 %v1825
    %v2132 = vunpack.c.l.b16 %v1826
    %v2133 = vunpack.c.h.b16 %v1826
    %v2134 = vunpack.c.l.b16 %v1827
    %v2135 = vunpack.c.h.b16 %v1827
    %v2136 = vunpack.c.l.b16 %v1828
    %v2137 = vunpack.c.h.b16 %v1828
    %v2138 = vunpack.c.l.b16 %v1829
    %v2139 = vunpack.c.h.b16 %v1829
    %v2140 = vunpack.c.l.b16 %v1830
    %v2141 = vunpack.c.h.b16 %v1830
    %v2142 = vunpack.c.l.b16 %v1831
    %v2143 = vunpack.c.h.b16 %v1831
    %v2144 = vunpack.c.l.b16 %v1832
    %v2145 = vunpack.c.h.b16 %v1832
    %v2146 = vunpack.c.l.b16 %v1833
    %v2147 = vunpack.c.h.b16 %v1833
    %v2148 = vunpack.c.l.b16 %v1834
    %v2149 = vunpack.c.h.b16 %v1834
    %v2150 = vunpack.c.l.b16 %v1835
    %v2151 = vunpack.c.h.b16 %v1835
    %v2152 = vunpack.c.l.b16 %v1836
    %v2153 = vunpack.c.h.b16 %v1836
    %v2154 = vunpack.c.l.b16 %v1837
    %v2155 = vunpack.c.h.b16 %v1837
    %v2156 = vunpack.c.l.b16 %v1838
    %v2157 = vunpack.c.h.b16 %v1838
    %v2158 = vunpack.c.l.b16 %v1839
    %v2159 = vunpack.c.h.b16 %v1839
    %v2160 = vunpack.c.l.b16 %v1840
    %v2161 = vunpack.c.h.b16 %v1840
    %v2162 = vunpack.c.l.b16 %v1841
    %v2163 = vunpack.c.h.b16 %v1841
    %v2164 = vunpack.c.l.b16 %v1842
    %v2165 = vunpack.c.h.b16 %v1842
    %v2166 = vunpack.c.l.b16 %v1843
    %v2167 = vunpack.c.h.b16 %v1843
    %v2168 = vunpack.c.l.b16 %v1844
    %v2169 = vunpack.c.h.b16 %v1844
    %v2170 = vunpack.c.l.b16 %v1845
    %v2171 = vunpack.c.h.b16 %v1845
    %v2172 = vunpack.c.l.b16 %v1846
    %v2173 = vunpack.c.h.b16 %v1846
    %v2174 = vunpack.c.l.b16 %v1847
    %v2175 = vunpack.c.h.b16 %v1847
    %v2176 = vunpack.c.l.b16 %v1848
    %v2177 = vunpack.c.h.b16 %v1848
    %v2178 = vunpack.c.l.b16 %v1849
    %v2179 = vunpack.c.h.b16 %v1849
    %v2180 = vunpack.c.l.b16 %v1850
    %v2181 = vunpack.c.h.b16 %v1850
    %v2182 = vunpack.c.l.b16 %v1851
    %v2183 = vunpack.c.h.b16 %v1851
    %v2184 = vunpack.c.l.b16 %v1852
    %v2185 = vunpack.c.h.b16 %v1852
    %v2186 = vunpack.c.l.b16 %v1853
    %v2187 = vunpack.c.h.b16 %v1853
    %v2188 = vunpack.c.l.b16 %v1854
    %v2189 = vunpack.c.h.b16 %v1854
    %v2190 = vunpack.c.l.b16 %v1855
    %v2191 = vunpack.c.h.b16 %v1855
    %v2192 = vunpack.c.l.b16 %v1856
    %v2193 = vunpack.c.h.b16 %v1856
    %v2194 = vunpack.c.l.b16 %v1857
    %v2195 = vunpack.c.h.b16 %v1857
    %v2196 = vunpack.c.l.b16 %v1858
    %v2197 = vunpack.c.h.b16 %v1858
    %v2198 = vunpack.c.l.b16 %v1859
    %v2199 = vunpack.c.h.b16 %v1859
    %v2200 = vunpack.c.l.b16 %v1860
    %v2201 = vunpack.c.h.b16 %v1860
    %v2202 = vunpack.c.l.b16 %v1861
    %v2203 = vunpack.c.h.b16 %v1861
    %v2204 = vunpack.c.l.b16 %v1862
    %v2205 = vunpack.c.h.b16 %v1862
    %v2206 = vunpack.c.l.b16 %v1863
    %v2207 = vunpack.c.h.b16 %v1863
    %v2208 = vunpack.c.l.b16 %v1864
    %v2209 = vunpack.c.h.b16 %v1864
    %v2210 = vunpack.c.l.b16 %v1865
    %v2211 = vunpack.c.h.b16 %v1865
    %v2212 = vunpack.c.l.b16 %v1866
    %v2213 = vunpack.c.h.b16 %v1866
    %v2214 = vunpack.c.l.b16 %v1867
    %v2215 = vunpack.c.h.b16 %v1867
    %v2216 = vunpack.c.l.b16 %v1868
    %v2217 = vunpack.c.h.b16 %v1868
    %v2218 = vunpack.c.l.b16 %v1869
    %v2219 = vunpack.c.h.b16 %v1869
    %v2220 = vunpack.c.l.b16 %v1870
    %v2221 = vunpack.c.h.b16 %v1870
    %v2222 = vunpack.c.l.b16 %v1871
    %v2223 = vunpack.c.h.b16 %v1871
    %v2224 = vunpack.c.l.b16 %v1872
    %v2225 = vunpack.c.h.b16 %v1872
    %v2226 = vunpack.c.l.b16 %v1873
    %v2227 = vunpack.c.h.b16 %v1873
    %v2228 = vunpack.c.l.b16 %v1874
    %v2229 = vunpack.c.h.b16 %v1874
    %v2230 = vunpack.c.l.b16 %v1875
    %v2231 = vunpack.c.h.b16 %v1875
    %v2232 = vunpack.c.l.b16 %v1876
    %v2233 = vunpack.c.h.b16 %v1876
    %v2234 = vunpack.c.l.b16 %v1877
    %v2235 = vunpack.c.h.b16 %v1877
    %v2236 = vunpack.c.l.b16 %v1878
    %v2237 = vunpack.c.h.b16 %v1878
    %v2238 = vunpack.c.l.b16 %v1879
    %v2239 = vunpack.c.h.b16 %v1879
    %v2240 = vunpack.c.l.b16 %v1880
    %v2241 = vunpack.c.h.b16 %v1880
    %v2242 = vunpack.c.l.b16 %v1881
    %v2243 = vunpack.c.h.b16 %v1881
    %v2244 = vunpack.c.l.b16 %v1882
    %v2245 = vunpack.c.h.b16 %v1882
    %v2246 = vunpack.c.l.b16 %v1883
    %v2247 = vunpack.c.h.b16 %v1883
    %v2248 = vunpack.c.l.b16 %v1884
    %v2249 = vunpack.c.h.b16 %v1884
    %v2250 = vunpack.c.l.b16 %v1885
    %v2251 = vunpack.c.h.b16 %v1885
    %v2252 = vunpack.c.l.b16 %v1886
    %v2253 = vunpack.c.h.b16 %v1886
    %v2254 = vunpack.c.l.b16 %v1887
    %v2255 = vunpack.c.h.b16 %v1887
    %v2256 = vunpack.c.l.b16 %v1888
    %v2257 = vunpack.c.h.b16 %v1888
    %v2258 = vunpack.c.l.b16 %v1889
    %v2259 = vunpack.c.h.b16 %v1889
    %v2260 = vunpack.c.l.b16 %v1890
    %v2261 = vunpack.c.h.b16 %v1890
    %v2262 = vunpack.c.l.b16 %v1891
    %v2263 = vunpack.c.h.b16 %v1891
    %v2264 = vunpack.c.l.b16 %v1892
    %v2265 = vunpack.c.h.b16 %v1892
    %v2266 = vunpack.c.l.b16 %v1893
    %v2267 = vunpack.c.h.b16 %v1893
    %v2268 = vunpack.c.l.b16 %v1894
    %v2269 = vunpack.c.h.b16 %v1894
    %v2270 = vunpack.c.l.b16 %v1895
    %v2271 = vunpack.c.h.b16 %v1895
    %v2272 = vunpack.c.l.b16 %v1896
    %v2273 = vunpack.c.h.b16 %v1896
    %v2274 = vunpack.c.l.b16 %v1897
    %v2275 = vunpack.c.h.b16 %v1897
    %v2276 = vunpack.c.l.b16 %v1898
    %v2277 = vunpack.c.h.b16 %v1898
    %v2278 = vunpack.c.l.b16 %v1899
    %v2279 = vunpack.c.h.b16 %v1899
    %v2280 = vunpack.c.l.b16 %v1900
    %v2281 = vunpack.c.h.b16 %v1900
    %v2282 = vunpack.c.l.b16 %v1901
    %v2283 = vunpack.c.h.b16 %v1901
    %v2284 = vunpack.c.l.b16 %v1902
    %v2285 = vunpack.c.h.b16 %v1902
    %v2286 = vunpack.c.l.b16 %v1903
    %v2287 = vunpack.c.h.b16 %v1903
    %v2288 = vunpack.c.l.b16 %v1904
    %v2289 = vunpack.c.h.b16 %v1904
    %v2290 = vunpack.c.l.b16 %v1905
    %v2291 = vunpack.c.h.b16 %v1905
    %v2292 = vunpack.c.l.b16 %v1906
    %v2293 = vunpack.c.h.b16 %v1906
    %v2294 = vunpack.c.l.b16 %v1907
    %v2295 = vunpack.c.h.b16 %v1907
    %v2296 = vunpack.c.l.b16 %v1908
    %v2297 = vunpack.c.h.b16 %v1908
    %v2298 = vunpack.c.l.b16 %v1909
    %v2299 = vunpack.c.h.b16 %v1909
    %v2300 = vunpack.c.l.b16 %v1910
    %v2301 = vunpack.c.h.b16 %v1910
    %v2302 = vunpack.c.l.b16 %v1911
    %v2303 = vunpack.c.h.b16 %v1911
    %v2304 = vunpack.c.l.b16 %v1912
    %v2305 = vunpack.c.h.b16 %v1912
    %v2306 = vunpack.c.l.b16 %v1913
    %v2307 = vunpack.c.h.b16 %v1913
    %v2308 = vunpack.c.l.b16 %v1914
    %v2309 = vunpack.c.h.b16 %v1914
    %v2310 = vunpack.c.l.b16 %v1915
    %v2311 = vunpack.c.h.b16 %v1915
    %v2312 = vunpack.c.l.b16 %v1916
    %v2313 = vunpack.c.h.b16 %v1916
    %v2314 = vunpack.c.l.b16 %v1917
    %v2315 = vunpack.c.h.b16 %v1917
    %v2316 = vunpack.c.l.b16 %v1918
    %v2317 = vunpack.c.h.b16 %v1918
    %v2318 = vunpack.c.l.b16 %v1919
    %v2319 = vunpack.c.h.b16 %v1919
    %v2320 = vunpack.c.l.b16 %v1920
    %v2321 = vunpack.c.h.b16 %v1920
    %v2322 = vunpack.c.l.b16 %v1921
    %v2323 = vunpack.c.h.b16 %v1921
    %v2324 = vunpack.c.l.b16 %v1922
    %v2325 = vunpack.c.h.b16 %v1922
    %v2326 = vunpack.c.l.b16 %v1923
    %v2327 = vunpack.c.h.b16 %v1923
    %v2328 = vunpack.c.l.b16 %v1924
    %v2329 = vunpack.c.h.b16 %v1924
    %v2330 = vunpack.c.l.b16 %v1925
    %v2331 = vunpack.c.h.b16 %v1925
    %v2332 = vunpack.c.l.b16 %v1926
    %v2333 = vunpack.c.h.b16 %v1926
    %v2334 = vunpack.c.l.b16 %v1927
    %v2335 = vunpack.c.h.b16 %v1927
    %v2336 = vunpack.c.l.b16 %v1928
    %v2337 = vunpack.c.h.b16 %v1928
    %v2338 = vunpack.c.l.b16 %v1929
    %v2339 = vunpack.c.h.b16 %v1929
    %v2340 = vunpack.c.l.b16 %v1930
    %v2341 = vunpack.c.h.b16 %v1930
    %v2342 = vunpack.c.l.b16 %v1931
    %v2343 = vunpack.c.h.b16 %v1931
    %v2344 = vunpack.c.l.b16 %v1932
    %v2345 = vunpack.c.h.b16 %v1932
    %v2346 = vunpack.c.l.b16 %v1933
    %v2347 = vunpack.c.h.b16 %v1933
    %v2348 = vunpack.c.l.b16 %v1934
    %v2349 = vunpack.c.h.b16 %v1934
    %v2350 = vunpack.c.l.b16 %v1935
    %v2351 = vunpack.c.h.b16 %v1935
    %v2352 = vunpack.c.l.b16 %v1936
    %v2353 = vunpack.c.h.b16 %v1936
    %v2354 = vunpack.c.l.b16 %v1937
    %v2355 = vunpack.c.h.b16 %v1937
    %v2356 = vunpack.c.l.b16 %v1938
    %v2357 = vunpack.c.h.b16 %v1938
    %v2358 = vunpack.c.l.b16 %v1939
    %v2359 = vunpack.c.h.b16 %v1939
    %v2360 = vunpack.c.l.b16 %v1940
    %v2361 = vunpack.c.h.b16 %v1940
    %v2362 = vunpack.c.l.b16 %v1941
    %v2363 = vunpack.c.h.b16 %v1941
    %v2364 = vunpack.c.l.b16 %v1942
    %v2365 = vunpack.c.h.b16 %v1942
    %v2366 = vunpack.c.l.b16 %v1943
    %v2367 = vunpack.c.h.b16 %v1943
    %v2368 = vunpack.c.l.b16 %v1944
    %v2369 = vunpack.c.h.b16 %v1944
    %v2370 = vunpack.c.l.b16 %v1945
    %v2371 = vunpack.c.h.b16 %v1945
    %v2372 = vpack.c.b16 %v2124, %v2116
    %v2373 = vpack.c.b16 %v2125, %v2117
    %v2374 = vpack.c.b16 %v2126, %v2118
    %v2375 = vpack.c.b16 %v2127, %v2119
    %v2376 = vpack.c.b16 %v2128, %v2120
    %v2377 = vpack.c.b16 %v2129, %v2121
    %v2378 = vpack.c.b16 %v2130, %v2122
    %v2379 = vpack.c.b16 %v2131, %v2123
    %v2380 = vpack.c.b16 %v2140, %v2132
    %v2381 = vpack.c.b16 %v2141, %v2133
    %v2382 = vpack.c.b16 %v2142, %v2134
    %v2383 = vpack.c.b16 %v2143, %v2135
    %v2384 = vpack.c.b16 %v2144, %v2136
    %v2385 = vpack.c.b16 %v2145, %v2137
    %v2386 = vpack.c.b16 %v2146, %v2138
    %v2387 = vpack.c.b16 %v2147, %v2139
    %v2388 = vpack.c.b16 %v2156, %v2148
    %v2389 = vpack.c.b16 %v2157, %v2149
    %v2390 = vpack.c.b16 %v2158, %v2150
    %v2391 = vpack.c.b16 %v2159, %v2151
    %v2392 = vpack.c.b16 %v2160, %v2152
    %v2393 = vpack.c.b16 %v2161, %v2153
    %v2394 = vpack.c.b16 %v2162, %v2154
    %v2395 = vpack.c.b16 %v2163, %v2155
    %v2396 = vpack.c.b16 %v2172, %v2164
    %v2397 = vpack.c.b16 %v2173, %v2165
    %v2398 = vpack.c.b16 %v2174, %v2166
    %v2399 = vpack.c.b16 %v2175, %v2167
    %v2400 = vpack.c.b16 %v2176, %v2168
    %v2401 = vpack.c.b16 %v2177, %v2169
    %v2402 = vpack.c.b16 %v2178, %v2170
    %v2403 = vpack.c.b16 %v2179, %v2171
    %v2404 = vpack.c.b16 %v2188, %v2180
    %v2405 = vpack.c.b16 %v2189, %v2181
    %v2406 = vpack.c.b16 %v2190, %v2182
    %v2407 = vpack.c.b16 %v2191, %v2183
    %v2408 = vpack.c.b16 %v2192, %v2184
    %v2409 = vpack.c.b16 %v2193, %v2185
    %v2410 = vpack.c.b16 %v2194, %v2186
    %v2411 = vpack.c.b16 %v2195, %v2187
    %v2412 = vpack.c.b16 %v2204, %v2196
    %v2413 = vpack.c.b16 %v2205, %v2197
    %v2414 = vpack.c.b16 %v2206, %v2198
    %v2415 = vpack.c.b16 %v2207, %v2199
    %v2416 = vpack.c.b16 %v2208, %v2200
    %v2417 = vpack.c.b16 %v2209, %v2201
    %v2418 = vpack.c.b16 %v2210, %v2202
    %v2419 = vpack.c.b16 %v2211, %v2203
    %v2420 = vpack.c.b16 %v2220, %v2212
    %v2421 = vpack.c.b16 %v2221, %v2213
    %v2422 = vpack.c.b16 %v2222, %v2214
    %v2423 = vpack.c.b16 %v2223, %v2215
    %v2424 = vpack.c.b16 %v2224, %v2216
    %v2425 = vpack.c.b16 %v2225, %v2217
    %v2426 = vpack.c.b16 %v2226, %v2218
    %v2427 = vpack.c.b16 %v2227, %v2219
    %v2428 = vpack.c.b16 %v2236, %v2228
    %v2429 = vpack.c.b16 %v2237, %v2229
    %v2430 = vpack.c.b16 %v2238, %v2230
    %v2431 = vpack.c.b16 %v2239, %v2231
    %v2432 = vpack.c.b16 %v2240, %v2232
    %v2433 = vpack.c.b16 %v2241, %v2233
    %v2434 = vpack.c.b16 %v2242, %v2234
    %v2435 = vpack.c.b16 %v2243, %v2235
    %v2436 = vpack.c.b16 %v2252, %v2244
    %v2437 = vpack.c.b16 %v2253, %v2245
    %v2438 = vpack.c.b16 %v2254, %v2246
    %v2439 = vpack.c.b16 %v2255, %v2247
    %v2440 = vpack.c.b16 %v2256, %v2248
    %v2441 = vpack.c.b16 %v2257, %v2249
    %v2442 = vpack.c.b16 %v2258, %v2250
    %v2443 = vpack.c.b16 %v2259, %v2251
    %v2444 = vpack.c.b16 %v2268, %v2260
    %v2445 = vpack.c.b16 %v2269, %v2261
    %v2446 = vpack.c.b16 %v2270, %v2262
    %v2447 = vpack.c.b16 %v2271, %v2263
    %v2448 = vpack.c.b16 %v2272, %v2264
    %v2449 = vpack.c.b16 %v2273, %v2265
    %v2450 = vpack.c.b16 %v2274, %v2266
    %v2451 = vpack.c.b16 %v2275, %v2267
    %v2452 = vpack.c.b16 %v2284, %v2276
    %v2453 = vpack.c.b16 %v2285, %v2277
    %v2454 = vpack.c.b16 %v2286, %v2278
    %v2455 = vpack.c.b16 %v2287, %v2279
    %v2456 = vpack.c.b16 %v2288, %v2280
    %v2457 = vpack.c.b16 %v2289, %v2281
    %v2458 = vpack.c.b16 %v2290, %v2282
    %v2459 = vpack.c.b16 %v2291, %v2283
    %v2460 = vpack.c.b16 %v2300, %v2292
    %v2461 = vpack.c.b16 %v2301, %v2293
    %v2462 = vpack.c.b16 %v2302, %v2294
    %v2463 = vpack.c.b16 %v2303, %v2295
    %v2464 = vpack.c.b16 %v2304, %v2296
    %v2465 = vpack.c.b16 %v2305, %v2297
    %v2466 = vpack.c.b16 %v2306, %v2298
    %v2467 = vpack.c.b16 %v2307, %v2299
    %v2468 = vpack.c.b16 %v2316, %v2308
    %v2469 = vpack.c.b16 %v2317, %v2309
    %v2470 = vpack.c.b16 %v2318, %v2310
    %v2471 = vpack.c.b16 %v2319, %v2311
    %v2472 = vpack.c.b16 %v2320, %v2312
    %v2473 = vpack.c.b16 %v2321, %v2313
    %v2474 = vpack.c.b16 %v2322, %v2314
    %v2475 = vpack.c.b16 %v2323, %v2315
    %v2476 = vpack.c.b16 %v2332, %v2324
    %v2477 = vpack.c.b16 %v2333, %v2325
    %v2478 = vpack.c.b16 %v2334, %v2326
    %v2479 = vpack.c.b16 %v2335, %v2327
    %v2480 = vpack.c.b16 %v2336, %v2328
    %v2481 = vpack.c.b16 %v2337, %v2329
    %v2482 = vpack.c.b16 %v2338, %v2330
    %v2483 = vpack.c.b16 %v2339, %v2331
    %v2484 = vpack.c.b16 %v2348, %v2340
    %v2485 = vpack.c.b16 %v2349, %v2341
    %v2486 = vpack.c.b16 %v2350, %v2342
    %v2487 = vpack.c.b16 %v2351, %v2343
    %v2488 = vpack.c.b16 %v2352, %v2344
    %v2489 = vpack.c.b16 %v2353, %v2345
    %v2490 = vpack.c.b16 %v2354, %v2346
    %v2491 = vpack.c.b16 %v2355, %v2347
    %v2492 = vpack.c.b16 %v2364, %v2356
    %v2493 = vpack.c.b16 %v2365, %v2357
    %v2494 = vpack.c.b16 %v2366, %v2358
    %v2495 = vpack.c.b16 %v2367, %v2359
    %v2496 = vpack.c.b16 %v2368, %v2360
    %v2497 = vpack.c.b16 %v2369, %v2361
    %v2498 = vpack.c.b16 %v2370, %v2362
    %v2499 = vpack.c.b16 %v2371, %v2363
    %2628 = vmatprep.subr.bf16.mxu0 %v2373
    %2629 = vmatpush1.bf16.msra.mxu0 %v2372
    %2630 = vmatprep.subr.bf16.mxu0 %v2381
    %2631 = vmatpush1.bf16.msra.mxu0 %v2380
    %2632 = vmatprep.subr.bf16.mxu0 %v2389
    %2633 = vmatpush1.bf16.msra.mxu0 %v2388
    %2634 = vmatprep.subr.bf16.mxu0 %v2397
    %2635 = vmatpush1.bf16.msra.mxu0 %v2396
    %2636 = vmatprep.subr.bf16.mxu0 %v2405
    %2637 = vmatpush1.bf16.msra.mxu0 %v2404
    %2638 = vmatprep.subr.bf16.mxu0 %v2413
    %2639 = vmatpush1.bf16.msra.mxu0 %v2412
    %2640 = vmatprep.subr.bf16.mxu0 %v2421
    %2641 = vmatpush1.bf16.msra.mxu0 %v2420
    %2642 = vmatprep.subr.bf16.mxu0 %v2429
    %2643 = vmatpush1.bf16.msra.mxu0 %v2428
    %2644 = vmatprep.subr.bf16.mxu0 %v2437
    %2645 = vmatpush1.bf16.msra.mxu0 %v2436
    %2646 = vmatprep.subr.bf16.mxu0 %v2445
    %2647 = vmatpush1.bf16.msra.mxu0 %v2444
    %2648 = vmatprep.subr.bf16.mxu0 %v2453
    %2649 = vmatpush1.bf16.msra.mxu0 %v2452
    %2650 = vmatprep.subr.bf16.mxu0 %v2461
    %2651 = vmatpush1.bf16.msra.mxu0 %v2460
    %2652 = vmatprep.subr.bf16.mxu0 %v2469
    %2653 = vmatpush1.bf16.msra.mxu0 %v2468
    %2654 = vmatprep.subr.bf16.mxu0 %v2477
    %2655 = vmatpush1.bf16.msra.mxu0 %v2476
    %2656 = vmatprep.subr.bf16.mxu0 %v2485
    %2657 = vmatpush1.bf16.msra.mxu0 %v2484
    %2658 = vmatprep.subr.bf16.mxu0 %v2493
    %2659 = vmatpush1.bf16.msra.mxu0 %v2492
    %2660 = vmatprep.mubr.bf16.mxu0 %v1155
    %2661 = vmatmul.mubr.bf16.gmra.mrb[0].mxu0 %v1154
    %v2662 = vpop.f32.mrb[0].mxu0
    %v2663 = vadd.f32 %v1951, %v2662
    %v2664 = vpop.f32.mrb[0].mxu0
    %v2665 = vadd.f32 %v1955, %v2664
    %v2666 = vpop.f32.mrb[0].mxu0
    %v2667 = vadd.f32 %v1951, %v2666
    %v2668 = vpop.f32.mrb[0].mxu0
    %v2669 = vadd.f32 %v1955, %v2668
    %2670 = vdwg.mxu0
    %2671 = vmatprep.subr.bf16.mxu0 %v2375
    %2672 = vmatpush1.bf16.msra.mxu0 %v2374
    %2673 = vmatprep.subr.bf16.mxu0 %v2383
    %2674 = vmatpush1.bf16.msra.mxu0 %v2382
    %2675 = vmatprep.subr.bf16.mxu0 %v2391
    %2676 = vmatpush1.bf16.msra.mxu0 %v2390
    %2677 = vmatprep.subr.bf16.mxu0 %v2399
    %2678 = vmatpush1.bf16.msra.mxu0 %v2398
    %2679 = vmatprep.subr.bf16.mxu0 %v2407
    %2680 = vmatpush1.bf16.msra.mxu0 %v2406
    %2681 = vmatprep.subr.bf16.mxu0 %v2415
    %2682 = vmatpush1.bf16.msra.mxu0 %v2414
    %2683 = vmatprep.subr.bf16.mxu0 %v2423
    %2684 = vmatpush1.bf16.msra.mxu0 %v2422
    %2685 = vmatprep.subr.bf16.mxu0 %v2431
    %2686 = vmatpush1.bf16.msra.mxu0 %v2430
    %2687 = vmatprep.subr.bf16.mxu0 %v2439
    %2688 = vmatpush1.bf16.msra.mxu0 %v2438
    %2689 = vmatprep.subr.bf16.mxu0 %v2447
    %2690 = vmatpush1.bf16.msra.mxu0 %v2446
    %2691 = vmatprep.subr.bf16.mxu0 %v2455
    %2692 = vmatpush1.bf16.msra.mxu0 %v2454
    %2693 = vmatprep.subr.bf16.mxu0 %v2463
    %2694 = vmatpush1.bf16.msra.mxu0 %v2462
    %2695 = vmatprep.subr.bf16.mxu0 %v2471
    %2696 = vmatpush1.bf16.msra.mxu0 %v2470
    %2697 = vmatprep.subr.bf16.mxu0 %v2479
    %2698 = vmatpush1.bf16.msra.mxu0 %v2478
    %2699 = vmatprep.subr.bf16.mxu0 %v2487
    %2700 = vmatpush1.bf16.msra.mxu0 %v2486
    %2701 = vmatprep.subr.bf16.mxu0 %v2495
    %2702 = vmatpush1.bf16.msra.mxu0 %v2494
    %2703 = vmatprep.mubr.bf16.mxu0 %v1155
    %2704 = vmatmul.mubr.bf16.gmra.mrb[0].mxu0 %v1154
    %v2705 = vpop.f32.mrb[0].mxu0
    %v2706 = vadd.f32 %v1959, %v2705
    %v2707 = vpop.f32.mrb[0].mxu0
    %v2708 = vadd.f32 %v1963, %v2707
    %v2709 = vpop.f32.mrb[0].mxu0
    %v2710 = vadd.f32 %v1959, %v2709
    %v2711 = vpop.f32.mrb[0].mxu0
    %v2712 = vadd.f32 %v1963, %v2711
    %2713 = vdwg.mxu0
    %2714 = vmatprep.subr.bf16.mxu0 %v2377
    %2715 = vmatpush1.bf16.msra.mxu0 %v2376
    %2716 = vmatprep.subr.bf16.mxu0 %v2385
    %2717 = vmatpush1.bf16.msra.mxu0 %v2384
    %2718 = vmatprep.subr.bf16.mxu0 %v2393
    %2719 = vmatpush1.bf16.msra.mxu0 %v2392
    %2720 = vmatprep.subr.bf16.mxu0 %v2401
    %2721 = vmatpush1.bf16.msra.mxu0 %v2400
    %2722 = vmatprep.subr.bf16.mxu0 %v2409
    %2723 = vmatpush1.bf16.msra.mxu0 %v2408
    %2724 = vmatprep.subr.bf16.mxu0 %v2417
    %2725 = vmatpush1.bf16.msra.mxu0 %v2416
    %2726 = vmatprep.subr.bf16.mxu0 %v2425
    %2727 = vmatpush1.bf16.msra.mxu0 %v2424
    %2728 = vmatprep.subr.bf16.mxu0 %v2433
    %2729 = vmatpush1.bf16.msra.mxu0 %v2432
    %2730 = vmatprep.subr.bf16.mxu0 %v2441
    %2731 = vmatpush1.bf16.msra.mxu0 %v2440
    %2732 = vmatprep.subr.bf16.mxu0 %v2449
    %2733 = vmatpush1.bf16.msra.mxu0 %v2448
    %2734 = vmatprep.subr.bf16.mxu0 %v2457
    %2735 = vmatpush1.bf16.msra.mxu0 %v2456
    %2736 = vmatprep.subr.bf16.mxu0 %v2465
    %2737 = vmatpush1.bf16.msra.mxu0 %v2464
    %2738 = vmatprep.subr.bf16.mxu0 %v2473
    %2739 = vmatpush1.bf16.msra.mxu0 %v2472
    %2740 = vmatprep.subr.bf16.mxu0 %v2481
    %2741 = vmatpush1.bf16.msra.mxu0 %v2480
    %2742 = vmatprep.subr.bf16.mxu0 %v2489
    %2743 = vmatpush1.bf16.msra.mxu0 %v2488
    %2744 = vmatprep.subr.bf16.mxu0 %v2497
    %2745 = vmatpush1.bf16.msra.mxu0 %v2496
    %2746 = vmatprep.mubr.bf16.mxu0 %v1155
    %2747 = vmatmul.mubr.bf16.gmra.mrb[0].mxu0 %v1154
    %v2748 = vpop.f32.mrb[0].mxu0
    %v2749 = vadd.f32 %v1967, %v2748
    %v2750 = vpop.f32.mrb[0].mxu0
    %v2751 = vadd.f32 %v1971, %v2750
    %v2752 = vpop.f32.mrb[0].mxu0
    %v2753 = vadd.f32 %v1967, %v2752
    %v2754 = vpop.f32.mrb[0].mxu0
    %v2755 = vadd.f32 %v1971, %v2754
    %2756 = vdwg.mxu0
    %2757 = vmatprep.subr.bf16.mxu0 %v2379
    %2758 = vmatpush1.bf16.msra.mxu0 %v2378
    %2759 = vmatprep.subr.bf16.mxu0 %v2387
    %2760 = vmatpush1.bf16.msra.mxu0 %v2386
    %2761 = vmatprep.subr.bf16.mxu0 %v2395
    %2762 = vmatpush1.bf16.msra.mxu0 %v2394
    %2763 = vmatprep.subr.bf16.mxu0 %v2403
    %2764 = vmatpush1.bf16.msra.mxu0 %v2402
    %2765 = vmatprep.subr.bf16.mxu0 %v2411
    %2766 = vmatpush1.bf16.msra.mxu0 %v2410
    %2767 = vmatprep.subr.bf16.mxu0 %v2419
    %2768 = vmatpush1.bf16.msra.mxu0 %v2418
    %2769 = vmatprep.subr.bf16.mxu0 %v2427
    %2770 = vmatpush1.bf16.msra.mxu0 %v2426
    %2771 = vmatprep.subr.bf16.mxu0 %v2435
    %2772 = vmatpush1.bf16.msra.mxu0 %v2434
    %2773 = vmatprep.subr.bf16.mxu0 %v2443
    %2774 = vmatpush1.bf16.msra.mxu0 %v2442
    %2775 = vmatprep.subr.bf16.mxu0 %v2451
    %2776 = vmatpush1.bf16.msra.mxu0 %v2450
    %2777 = vmatprep.subr.bf16.mxu0 %v2459
    %2778 = vmatpush1.bf16.msra.mxu0 %v2458
    %2779 = vmatprep.subr.bf16.mxu0 %v2467
    %2780 = vmatpush1.bf16.msra.mxu0 %v2466
    %2781 = vmatprep.subr.bf16.mxu0 %v2475
    %2782 = vmatpush1.bf16.msra.mxu0 %v2474
    %2783 = vmatprep.subr.bf16.mxu0 %v2483
    %2784 = vmatpush1.bf16.msra.mxu0 %v2482
    %2785 = vmatprep.subr.bf16.mxu0 %v2491
    %2786 = vmatpush1.bf16.msra.mxu0 %v2490
    %2787 = vmatprep.subr.bf16.mxu0 %v2499
    %2788 = vmatpush1.bf16.msra.mxu0 %v2498
    %2789 = vmatprep.mubr.bf16.mxu0 %v1155
    %2790 = vmatmul.mubr.bf16.gmra.mrb[0].mxu0 %v1154
    %v2791 = vpop.f32.mrb[0].mxu0
    %v2792 = vadd.f32 %v1975, %v2791
    %v2793 = vpop.f32.mrb[0].mxu0
    %v2794 = vadd.f32 %v1979, %v2793
    %v2795 = vpop.f32.mrb[0].mxu0
    %v2796 = vadd.f32 %v1975, %v2795
    %v2797 = vpop.f32.mrb[0].mxu0
    %v2798 = vadd.f32 %v1979, %v2797
    %2799 = vdwg.mxu0
    %v2800 = vmax.f32 %v2663, 0.0
    %v2801 = vmax.f32 %v2665, 0.0
    %v2802 = vmax.f32 %v2706, 0.0
    %v2803 = vmax.f32 %v2708, 0.0
    %v2804 = vmax.f32 %v2749, 0.0
    %v2805 = vmax.f32 %v2751, 0.0
    %v2806 = vmax.f32 %v2792, 0.0
    %v2807 = vmax.f32 %v2794, 0.0
    %v2808 = vmax.f32 %v2667, 0.0
    %v2809 = vmax.f32 %v2669, 0.0
    %v2810 = vmax.f32 %v2710, 0.0
    %v2811 = vmax.f32 %v2712, 0.0
    %v2812 = vmax.f32 %v2753, 0.0
    %v2813 = vmax.f32 %v2755, 0.0
    %v2814 = vmax.f32 %v2796, 0.0
    %v2815 = vmax.f32 %v2798, 0.0
    %2816 = vst [vmem:[%s12] sm:$0xff] %v2800
    %2817 = vst [vmem:[%s12 + $0x8] sm:$0xff] %v2801
    %2818 = vst [vmem:[%s12 + $0x10] sm:$0xff] %v2802
    %2819 = vst [vmem:[%s12 + $0x18] sm:$0xff] %v2803
    %2820 = vst [vmem:[%s12 + $0x20] sm:$0xff] %v2804
    %2821 = vst [vmem:[%s12 + $0x28] sm:$0xff] %v2805
    %2822 = vst [vmem:[%s12 + $0x30] sm:$0xff] %v2806
    %2823 = vst [vmem:[%s12 + $0x38] sm:$0xff] %v2807
    %2824 = vst [vmem:[%s12 + $0x40] sm:$0xff] %v2808
    %2825 = vst [vmem:[%s12 + $0x48] sm:$0xff] %v2809
    %2826 = vst [vmem:[%s12 + $0x50] sm:$0xff] %v2810
    %2827 = vst [vmem:[%s12 + $0x58] sm:$0xff] %v2811
    %2828 = vst [vmem:[%s12 + $0x60] sm:$0xff] %v2812
    %2829 = vst [vmem:[%s12 + $0x68] sm:$0xff] %v2813
    %2830 = vst [vmem:[%s12 + $0x70] sm:$0xff] %v2814
    %2831 = vst [vmem:[%s12 + $0x78] sm:$0xff] %v2815
    %s2832 = scalar_lea.vmem [#allocation15], 1024
    %v2833 = vld [vmem:[%s2832] sm:$0xff]
    %v2834 = vld [vmem:[%s2832 + $0x8] sm:$0xff]
    %v2835 = vld [vmem:[%s2832 + $0x10] sm:$0xff]
    %v2836 = vld [vmem:[%s2832 + $0x18] sm:$0xff]
    %v2837 = vld [vmem:[%s2832 + $0x20] sm:$0xff]
    %v2838 = vld [vmem:[%s2832 + $0x28] sm:$0xff]
    %v2839 = vld [vmem:[%s2832 + $0x30] sm:$0xff]
    %v2840 = vld [vmem:[%s2832 + $0x38] sm:$0xff]
    %v2841 = vld [vmem:[%s2832 + $0x40] sm:$0xff]
    %v2842 = vld [vmem:[%s2832 + $0x48] sm:$0xff]
    %v2843 = vld [vmem:[%s2832 + $0x50] sm:$0xff]
    %v2844 = vld [vmem:[%s2832 + $0x58] sm:$0xff]
    %v2845 = vld [vmem:[%s2832 + $0x60] sm:$0xff]
    %v2846 = vld [vmem:[%s2832 + $0x68] sm:$0xff]
    %v2847 = vld [vmem:[%s2832 + $0x70] sm:$0xff]
    %v2848 = vld [vmem:[%s2832 + $0x78] sm:$0xff]
    %v2849 = vld [vmem:[%s2832 + $0x80] sm:$0xff]
    %v2850 = vld [vmem:[%s2832 + $0x88] sm:$0xff]
    %v2851 = vld [vmem:[%s2832 + $0x90] sm:$0xff]
    %v2852 = vld [vmem:[%s2832 + $0x98] sm:$0xff]
    %v2853 = vld [vmem:[%s2832 + $0xa0] sm:$0xff]
    %v2854 = vld [vmem:[%s2832 + $0xa8] sm:$0xff]
    %v2855 = vld [vmem:[%s2832 + $0xb0] sm:$0xff]
    %v2856 = vld [vmem:[%s2832 + $0xb8] sm:$0xff]
    %v2857 = vld [vmem:[%s2832 + $0xc0] sm:$0xff]
    %v2858 = vld [vmem:[%s2832 + $0xc8] sm:$0xff]
    %v2859 = vld [vmem:[%s2832 + $0xd0] sm:$0xff]
    %v2860 = vld [vmem:[%s2832 + $0xd8] sm:$0xff]
    %v2861 = vld [vmem:[%s2832 + $0xe0] sm:$0xff]
    %v2862 = vld [vmem:[%s2832 + $0xe8] sm:$0xff]
    %v2863 = vld [vmem:[%s2832 + $0xf0] sm:$0xff]
    %v2864 = vld [vmem:[%s2832 + $0xf8] sm:$0xff]
    %v2865 = vld [vmem:[%s2832 + $0x100] sm:$0xff]
    %v2866 = vld [vmem:[%s2832 + $0x108] sm:$0xff]
    %v2867 = vld [vmem:[%s2832 + $0x110] sm:$0xff]
    %v2868 = vld [vmem:[%s2832 + $0x118] sm:$0xff]
    %v2869 = vld [vmem:[%s2832 + $0x120] sm:$0xff]
    %v2870 = vld [vmem:[%s2832 + $0x128] sm:$0xff]
    %v2871 = vld [vmem:[%s2832 + $0x130] sm:$0xff]
    %v2872 = vld [vmem:[%s2832 + $0x138] sm:$0xff]
    %v2873 = vld [vmem:[%s2832 + $0x140] sm:$0xff]
    %v2874 = vld [vmem:[%s2832 + $0x148] sm:$0xff]
    %v2875 = vld [vmem:[%s2832 + $0x150] sm:$0xff]
    %v2876 = vld [vmem:[%s2832 + $0x158] sm:$0xff]
    %v2877 = vld [vmem:[%s2832 + $0x160] sm:$0xff]
    %v2878 = vld [vmem:[%s2832 + $0x168] sm:$0xff]
    %v2879 = vld [vmem:[%s2832 + $0x170] sm:$0xff]
    %v2880 = vld [vmem:[%s2832 + $0x178] sm:$0xff]
    %v2881 = vld [vmem:[%s2832 + $0x180] sm:$0xff]
    %v2882 = vld [vmem:[%s2832 + $0x188] sm:$0xff]
    %v2883 = vld [vmem:[%s2832 + $0x190] sm:$0xff]
    %v2884 = vld [vmem:[%s2832 + $0x198] sm:$0xff]
    %v2885 = vld [vmem:[%s2832 + $0x1a0] sm:$0xff]
    %v2886 = vld [vmem:[%s2832 + $0x1a8] sm:$0xff]
    %v2887 = vld [vmem:[%s2832 + $0x1b0] sm:$0xff]
    %v2888 = vld [vmem:[%s2832 + $0x1b8] sm:$0xff]
    %v2889 = vld [vmem:[%s2832 + $0x1c0] sm:$0xff]
    %v2890 = vld [vmem:[%s2832 + $0x1c8] sm:$0xff]
    %v2891 = vld [vmem:[%s2832 + $0x1d0] sm:$0xff]
    %v2892 = vld [vmem:[%s2832 + $0x1d8] sm:$0xff]
    %v2893 = vld [vmem:[%s2832 + $0x1e0] sm:$0xff]
    %v2894 = vld [vmem:[%s2832 + $0x1e8] sm:$0xff]
    %v2895 = vld [vmem:[%s2832 + $0x1f0] sm:$0xff]
    %v2896 = vld [vmem:[%s2832 + $0x1f8] sm:$0xff]
    %v2897 = vld [vmem:[%s2832 + $0x200] sm:$0xff]
    %v2898 = vld [vmem:[%s2832 + $0x208] sm:$0xff]
    %v2899 = vld [vmem:[%s2832 + $0x210] sm:$0xff]
    %v2900 = vld [vmem:[%s2832 + $0x218] sm:$0xff]
    %v2901 = vld [vmem:[%s2832 + $0x220] sm:$0xff]
    %v2902 = vld [vmem:[%s2832 + $0x228] sm:$0xff]
    %v2903 = vld [vmem:[%s2832 + $0x230] sm:$0xff]
    %v2904 = vld [vmem:[%s2832 + $0x238] sm:$0xff]
    %v2905 = vld [vmem:[%s2832 + $0x240] sm:$0xff]
    %v2906 = vld [vmem:[%s2832 + $0x248] sm:$0xff]
    %v2907 = vld [vmem:[%s2832 + $0x250] sm:$0xff]
    %v2908 = vld [vmem:[%s2832 + $0x258] sm:$0xff]
    %v2909 = vld [vmem:[%s2832 + $0x260] sm:$0xff]
    %v2910 = vld [vmem:[%s2832 + $0x268] sm:$0xff]
    %v2911 = vld [vmem:[%s2832 + $0x270] sm:$0xff]
    %v2912 = vld [vmem:[%s2832 + $0x278] sm:$0xff]
    %v2913 = vld [vmem:[%s2832 + $0x280] sm:$0xff]
    %v2914 = vld [vmem:[%s2832 + $0x288] sm:$0xff]
    %v2915 = vld [vmem:[%s2832 + $0x290] sm:$0xff]
    %v2916 = vld [vmem:[%s2832 + $0x298] sm:$0xff]
    %v2917 = vld [vmem:[%s2832 + $0x2a0] sm:$0xff]
    %v2918 = vld [vmem:[%s2832 + $0x2a8] sm:$0xff]
    %v2919 = vld [vmem:[%s2832 + $0x2b0] sm:$0xff]
    %v2920 = vld [vmem:[%s2832 + $0x2b8] sm:$0xff]
    %v2921 = vld [vmem:[%s2832 + $0x2c0] sm:$0xff]
    %v2922 = vld [vmem:[%s2832 + $0x2c8] sm:$0xff]
    %v2923 = vld [vmem:[%s2832 + $0x2d0] sm:$0xff]
    %v2924 = vld [vmem:[%s2832 + $0x2d8] sm:$0xff]
    %v2925 = vld [vmem:[%s2832 + $0x2e0] sm:$0xff]
    %v2926 = vld [vmem:[%s2832 + $0x2e8] sm:$0xff]
    %v2927 = vld [vmem:[%s2832 + $0x2f0] sm:$0xff]
    %v2928 = vld [vmem:[%s2832 + $0x2f8] sm:$0xff]
    %v2929 = vld [vmem:[%s2832 + $0x300] sm:$0xff]
    %v2930 = vld [vmem:[%s2832 + $0x308] sm:$0xff]
    %v2931 = vld [vmem:[%s2832 + $0x310] sm:$0xff]
    %v2932 = vld [vmem:[%s2832 + $0x318] sm:$0xff]
    %v2933 = vld [vmem:[%s2832 + $0x320] sm:$0xff]
    %v2934 = vld [vmem:[%s2832 + $0x328] sm:$0xff]
    %v2935 = vld [vmem:[%s2832 + $0x330] sm:$0xff]
    %v2936 = vld [vmem:[%s2832 + $0x338] sm:$0xff]
    %v2937 = vld [vmem:[%s2832 + $0x340] sm:$0xff]
    %v2938 = vld [vmem:[%s2832 + $0x348] sm:$0xff]
    %v2939 = vld [vmem:[%s2832 + $0x350] sm:$0xff]
    %v2940 = vld [vmem:[%s2832 + $0x358] sm:$0xff]
    %v2941 = vld [vmem:[%s2832 + $0x360] sm:$0xff]
    %v2942 = vld [vmem:[%s2832 + $0x368] sm:$0xff]
    %v2943 = vld [vmem:[%s2832 + $0x370] sm:$0xff]
    %v2944 = vld [vmem:[%s2832 + $0x378] sm:$0xff]
    %v2945 = vld [vmem:[%s2832 + $0x380] sm:$0xff]
    %v2946 = vld [vmem:[%s2832 + $0x388] sm:$0xff]
    %v2947 = vld [vmem:[%s2832 + $0x390] sm:$0xff]
    %v2948 = vld [vmem:[%s2832 + $0x398] sm:$0xff]
    %v2949 = vld [vmem:[%s2832 + $0x3a0] sm:$0xff]
    %v2950 = vld [vmem:[%s2832 + $0x3a8] sm:$0xff]
    %v2951 = vld [vmem:[%s2832 + $0x3b0] sm:$0xff]
    %v2952 = vld [vmem:[%s2832 + $0x3b8] sm:$0xff]
    %v2953 = vld [vmem:[%s2832 + $0x3c0] sm:$0xff]
    %v2954 = vld [vmem:[%s2832 + $0x3c8] sm:$0xff]
    %v2955 = vld [vmem:[%s2832 + $0x3d0] sm:$0xff]
    %v2956 = vld [vmem:[%s2832 + $0x3d8] sm:$0xff]
    %v2957 = vld [vmem:[%s2832 + $0x3e0] sm:$0xff]
    %v2958 = vld [vmem:[%s2832 + $0x3e8] sm:$0xff]
    %v2959 = vld [vmem:[%s2832 + $0x3f0] sm:$0xff]
    %v2960 = vld [vmem:[%s2832 + $0x3f8] sm:$0xff]
    %s2961 = scalar_lea.vmem [#allocation16], 8
    %v2962 = vld [vmem:[%s2961] sm:$0xff]
    %v2964 = vlaneseq
    %v2965 = vshrl.u32 %v2964, 7
    %v2966 = vsub.s32 0, %v2965
    %v2967 = vrot.slane %v2962, %v2966
    %v2968 = vlaneseq
    %v2969 = vshrl.u32 %v2968, 7
    %v2970 = vsub.s32 1, %v2969
    %v2971 = vrot.slane %v2962, %v2970
    %v2972 = vlaneseq
    %v2973 = vshrl.u32 %v2972, 7
    %v2974 = vsub.s32 2, %v2973
    %v2975 = vrot.slane %v2962, %v2974
    %v2976 = vlaneseq
    %v2977 = vshrl.u32 %v2976, 7
    %v2978 = vsub.s32 3, %v2977
    %v2979 = vrot.slane %v2962, %v2978
    %v2980 = vlaneseq
    %v2981 = vshrl.u32 %v2980, 7
    %v2982 = vsub.s32 4, %v2981
    %v2983 = vrot.slane %v2962, %v2982
    %v2984 = vlaneseq
    %v2985 = vshrl.u32 %v2984, 7
    %v2986 = vsub.s32 5, %v2985
    %v2987 = vrot.slane %v2962, %v2986
    %v2988 = vlaneseq
    %v2989 = vshrl.u32 %v2988, 7
    %v2990 = vsub.s32 6, %v2989
    %v2991 = vrot.slane %v2962, %v2990
    %v2992 = vlaneseq
    %v2993 = vshrl.u32 %v2992, 7
    %v2994 = vsub.s32 7, %v2993
    %v2995 = vrot.slane %v2962, %v2994
    %v3132 = vunpack.c.l.b16 %v2833
    %v3133 = vunpack.c.h.b16 %v2833
    %v3134 = vunpack.c.l.b16 %v2834
    %v3135 = vunpack.c.h.b16 %v2834
    %v3136 = vunpack.c.l.b16 %v2835
    %v3137 = vunpack.c.h.b16 %v2835
    %v3138 = vunpack.c.l.b16 %v2836
    %v3139 = vunpack.c.h.b16 %v2836
    %v3140 = vunpack.c.l.b16 %v2837
    %v3141 = vunpack.c.h.b16 %v2837
    %v3142 = vunpack.c.l.b16 %v2838
    %v3143 = vunpack.c.h.b16 %v2838
    %v3144 = vunpack.c.l.b16 %v2839
    %v3145 = vunpack.c.h.b16 %v2839
    %v3146 = vunpack.c.l.b16 %v2840
    %v3147 = vunpack.c.h.b16 %v2840
    %v3148 = vunpack.c.l.b16 %v2841
    %v3149 = vunpack.c.h.b16 %v2841
    %v3150 = vunpack.c.l.b16 %v2842
    %v3151 = vunpack.c.h.b16 %v2842
    %v3152 = vunpack.c.l.b16 %v2843
    %v3153 = vunpack.c.h.b16 %v2843
    %v3154 = vunpack.c.l.b16 %v2844
    %v3155 = vunpack.c.h.b16 %v2844
    %v3156 = vunpack.c.l.b16 %v2845
    %v3157 = vunpack.c.h.b16 %v2845
    %v3158 = vunpack.c.l.b16 %v2846
    %v3159 = vunpack.c.h.b16 %v2846
    %v3160 = vunpack.c.l.b16 %v2847
    %v3161 = vunpack.c.h.b16 %v2847
    %v3162 = vunpack.c.l.b16 %v2848
    %v3163 = vunpack.c.h.b16 %v2848
    %v3164 = vunpack.c.l.b16 %v2849
    %v3165 = vunpack.c.h.b16 %v2849
    %v3166 = vunpack.c.l.b16 %v2850
    %v3167 = vunpack.c.h.b16 %v2850
    %v3168 = vunpack.c.l.b16 %v2851
    %v3169 = vunpack.c.h.b16 %v2851
    %v3170 = vunpack.c.l.b16 %v2852
    %v3171 = vunpack.c.h.b16 %v2852
    %v3172 = vunpack.c.l.b16 %v2853
    %v3173 = vunpack.c.h.b16 %v2853
    %v3174 = vunpack.c.l.b16 %v2854
    %v3175 = vunpack.c.h.b16 %v2854
    %v3176 = vunpack.c.l.b16 %v2855
    %v3177 = vunpack.c.h.b16 %v2855
    %v3178 = vunpack.c.l.b16 %v2856
    %v3179 = vunpack.c.h.b16 %v2856
    %v3180 = vunpack.c.l.b16 %v2857
    %v3181 = vunpack.c.h.b16 %v2857
    %v3182 = vunpack.c.l.b16 %v2858
    %v3183 = vunpack.c.h.b16 %v2858
    %v3184 = vunpack.c.l.b16 %v2859
    %v3185 = vunpack.c.h.b16 %v2859
    %v3186 = vunpack.c.l.b16 %v2860
    %v3187 = vunpack.c.h.b16 %v2860
    %v3188 = vunpack.c.l.b16 %v2861
    %v3189 = vunpack.c.h.b16 %v2861
    %v3190 = vunpack.c.l.b16 %v2862
    %v3191 = vunpack.c.h.b16 %v2862
    %v3192 = vunpack.c.l.b16 %v2863
    %v3193 = vunpack.c.h.b16 %v2863
    %v3194 = vunpack.c.l.b16 %v2864
    %v3195 = vunpack.c.h.b16 %v2864
    %v3196 = vunpack.c.l.b16 %v2865
    %v3197 = vunpack.c.h.b16 %v2865
    %v3198 = vunpack.c.l.b16 %v2866
    %v3199 = vunpack.c.h.b16 %v2866
    %v3200 = vunpack.c.l.b16 %v2867
    %v3201 = vunpack.c.h.b16 %v2867
    %v3202 = vunpack.c.l.b16 %v2868
    %v3203 = vunpack.c.h.b16 %v2868
    %v3204 = vunpack.c.l.b16 %v2869
    %v3205 = vunpack.c.h.b16 %v2869
    %v3206 = vunpack.c.l.b16 %v2870
    %v3207 = vunpack.c.h.b16 %v2870
    %v3208 = vunpack.c.l.b16 %v2871
    %v3209 = vunpack.c.h.b16 %v2871
    %v3210 = vunpack.c.l.b16 %v2872
    %v3211 = vunpack.c.h.b16 %v2872
    %v3212 = vunpack.c.l.b16 %v2873
    %v3213 = vunpack.c.h.b16 %v2873
    %v3214 = vunpack.c.l.b16 %v2874
    %v3215 = vunpack.c.h.b16 %v2874
    %v3216 = vunpack.c.l.b16 %v2875
    %v3217 = vunpack.c.h.b16 %v2875
    %v3218 = vunpack.c.l.b16 %v2876
    %v3219 = vunpack.c.h.b16 %v2876
    %v3220 = vunpack.c.l.b16 %v2877
    %v3221 = vunpack.c.h.b16 %v2877
    %v3222 = vunpack.c.l.b16 %v2878
    %v3223 = vunpack.c.h.b16 %v2878
    %v3224 = vunpack.c.l.b16 %v2879
    %v3225 = vunpack.c.h.b16 %v2879
    %v3226 = vunpack.c.l.b16 %v2880
    %v3227 = vunpack.c.h.b16 %v2880
    %v3228 = vunpack.c.l.b16 %v2881
    %v3229 = vunpack.c.h.b16 %v2881
    %v3230 = vunpack.c.l.b16 %v2882
    %v3231 = vunpack.c.h.b16 %v2882
    %v3232 = vunpack.c.l.b16 %v2883
    %v3233 = vunpack.c.h.b16 %v2883
    %v3234 = vunpack.c.l.b16 %v2884
    %v3235 = vunpack.c.h.b16 %v2884
    %v3236 = vunpack.c.l.b16 %v2885
    %v3237 = vunpack.c.h.b16 %v2885
    %v3238 = vunpack.c.l.b16 %v2886
    %v3239 = vunpack.c.h.b16 %v2886
    %v3240 = vunpack.c.l.b16 %v2887
    %v3241 = vunpack.c.h.b16 %v2887
    %v3242 = vunpack.c.l.b16 %v2888
    %v3243 = vunpack.c.h.b16 %v2888
    %v3244 = vunpack.c.l.b16 %v2889
    %v3245 = vunpack.c.h.b16 %v2889
    %v3246 = vunpack.c.l.b16 %v2890
    %v3247 = vunpack.c.h.b16 %v2890
    %v3248 = vunpack.c.l.b16 %v2891
    %v3249 = vunpack.c.h.b16 %v2891
    %v3250 = vunpack.c.l.b16 %v2892
    %v3251 = vunpack.c.h.b16 %v2892
    %v3252 = vunpack.c.l.b16 %v2893
    %v3253 = vunpack.c.h.b16 %v2893
    %v3254 = vunpack.c.l.b16 %v2894
    %v3255 = vunpack.c.h.b16 %v2894
    %v3256 = vunpack.c.l.b16 %v2895
    %v3257 = vunpack.c.h.b16 %v2895
    %v3258 = vunpack.c.l.b16 %v2896
    %v3259 = vunpack.c.h.b16 %v2896
    %v3260 = vunpack.c.l.b16 %v2897
    %v3261 = vunpack.c.h.b16 %v2897
    %v3262 = vunpack.c.l.b16 %v2898
    %v3263 = vunpack.c.h.b16 %v2898
    %v3264 = vunpack.c.l.b16 %v2899
    %v3265 = vunpack.c.h.b16 %v2899
    %v3266 = vunpack.c.l.b16 %v2900
    %v3267 = vunpack.c.h.b16 %v2900
    %v3268 = vunpack.c.l.b16 %v2901
    %v3269 = vunpack.c.h.b16 %v2901
    %v3270 = vunpack.c.l.b16 %v2902
    %v3271 = vunpack.c.h.b16 %v2902
    %v3272 = vunpack.c.l.b16 %v2903
    %v3273 = vunpack.c.h.b16 %v2903
    %v3274 = vunpack.c.l.b16 %v2904
    %v3275 = vunpack.c.h.b16 %v2904
    %v3276 = vunpack.c.l.b16 %v2905
    %v3277 = vunpack.c.h.b16 %v2905
    %v3278 = vunpack.c.l.b16 %v2906
    %v3279 = vunpack.c.h.b16 %v2906
    %v3280 = vunpack.c.l.b16 %v2907
    %v3281 = vunpack.c.h.b16 %v2907
    %v3282 = vunpack.c.l.b16 %v2908
    %v3283 = vunpack.c.h.b16 %v2908
    %v3284 = vunpack.c.l.b16 %v2909
    %v3285 = vunpack.c.h.b16 %v2909
    %v3286 = vunpack.c.l.b16 %v2910
    %v3287 = vunpack.c.h.b16 %v2910
    %v3288 = vunpack.c.l.b16 %v2911
    %v3289 = vunpack.c.h.b16 %v2911
    %v3290 = vunpack.c.l.b16 %v2912
    %v3291 = vunpack.c.h.b16 %v2912
    %v3292 = vunpack.c.l.b16 %v2913
    %v3293 = vunpack.c.h.b16 %v2913
    %v3294 = vunpack.c.l.b16 %v2914
    %v3295 = vunpack.c.h.b16 %v2914
    %v3296 = vunpack.c.l.b16 %v2915
    %v3297 = vunpack.c.h.b16 %v2915
    %v3298 = vunpack.c.l.b16 %v2916
    %v3299 = vunpack.c.h.b16 %v2916
    %v3300 = vunpack.c.l.b16 %v2917
    %v3301 = vunpack.c.h.b16 %v2917
    %v3302 = vunpack.c.l.b16 %v2918
    %v3303 = vunpack.c.h.b16 %v2918
    %v3304 = vunpack.c.l.b16 %v2919
    %v3305 = vunpack.c.h.b16 %v2919
    %v3306 = vunpack.c.l.b16 %v2920
    %v3307 = vunpack.c.h.b16 %v2920
    %v3308 = vunpack.c.l.b16 %v2921
    %v3309 = vunpack.c.h.b16 %v2921
    %v3310 = vunpack.c.l.b16 %v2922
    %v3311 = vunpack.c.h.b16 %v2922
    %v3312 = vunpack.c.l.b16 %v2923
    %v3313 = vunpack.c.h.b16 %v2923
    %v3314 = vunpack.c.l.b16 %v2924
    %v3315 = vunpack.c.h.b16 %v2924
    %v3316 = vunpack.c.l.b16 %v2925
    %v3317 = vunpack.c.h.b16 %v2925
    %v3318 = vunpack.c.l.b16 %v2926
    %v3319 = vunpack.c.h.b16 %v2926
    %v3320 = vunpack.c.l.b16 %v2927
    %v3321 = vunpack.c.h.b16 %v2927
    %v3322 = vunpack.c.l.b16 %v2928
    %v3323 = vunpack.c.h.b16 %v2928
    %v3324 = vunpack.c.l.b16 %v2929
    %v3325 = vunpack.c.h.b16 %v2929
    %v3326 = vunpack.c.l.b16 %v2930
    %v3327 = vunpack.c.h.b16 %v2930
    %v3328 = vunpack.c.l.b16 %v2931
    %v3329 = vunpack.c.h.b16 %v2931
    %v3330 = vunpack.c.l.b16 %v2932
    %v3331 = vunpack.c.h.b16 %v2932
    %v3332 = vunpack.c.l.b16 %v2933
    %v3333 = vunpack.c.h.b16 %v2933
    %v3334 = vunpack.c.l.b16 %v2934
    %v3335 = vunpack.c.h.b16 %v2934
    %v3336 = vunpack.c.l.b16 %v2935
    %v3337 = vunpack.c.h.b16 %v2935
    %v3338 = vunpack.c.l.b16 %v2936
    %v3339 = vunpack.c.h.b16 %v2936
    %v3340 = vunpack.c.l.b16 %v2937
    %v3341 = vunpack.c.h.b16 %v2937
    %v3342 = vunpack.c.l.b16 %v2938
    %v3343 = vunpack.c.h.b16 %v2938
    %v3344 = vunpack.c.l.b16 %v2939
    %v3345 = vunpack.c.h.b16 %v2939
    %v3346 = vunpack.c.l.b16 %v2940
    %v3347 = vunpack.c.h.b16 %v2940
    %v3348 = vunpack.c.l.b16 %v2941
    %v3349 = vunpack.c.h.b16 %v2941
    %v3350 = vunpack.c.l.b16 %v2942
    %v3351 = vunpack.c.h.b16 %v2942
    %v3352 = vunpack.c.l.b16 %v2943
    %v3353 = vunpack.c.h.b16 %v2943
    %v3354 = vunpack.c.l.b16 %v2944
    %v3355 = vunpack.c.h.b16 %v2944
    %v3356 = vunpack.c.l.b16 %v2945
    %v3357 = vunpack.c.h.b16 %v2945
    %v3358 = vunpack.c.l.b16 %v2946
    %v3359 = vunpack.c.h.b16 %v2946
    %v3360 = vunpack.c.l.b16 %v2947
    %v3361 = vunpack.c.h.b16 %v2947
    %v3362 = vunpack.c.l.b16 %v2948
    %v3363 = vunpack.c.h.b16 %v2948
    %v3364 = vunpack.c.l.b16 %v2949
    %v3365 = vunpack.c.h.b16 %v2949
    %v3366 = vunpack.c.l.b16 %v2950
    %v3367 = vunpack.c.h.b16 %v2950
    %v3368 = vunpack.c.l.b16 %v2951
    %v3369 = vunpack.c.h.b16 %v2951
    %v3370 = vunpack.c.l.b16 %v2952
    %v3371 = vunpack.c.h.b16 %v2952
    %v3372 = vunpack.c.l.b16 %v2953
    %v3373 = vunpack.c.h.b16 %v2953
    %v3374 = vunpack.c.l.b16 %v2954
    %v3375 = vunpack.c.h.b16 %v2954
    %v3376 = vunpack.c.l.b16 %v2955
    %v3377 = vunpack.c.h.b16 %v2955
    %v3378 = vunpack.c.l.b16 %v2956
    %v3379 = vunpack.c.h.b16 %v2956
    %v3380 = vunpack.c.l.b16 %v2957
    %v3381 = vunpack.c.h.b16 %v2957
    %v3382 = vunpack.c.l.b16 %v2958
    %v3383 = vunpack.c.h.b16 %v2958
    %v3384 = vunpack.c.l.b16 %v2959
    %v3385 = vunpack.c.h.b16 %v2959
    %v3386 = vunpack.c.l.b16 %v2960
    %v3387 = vunpack.c.h.b16 %v2960
    %v3388 = vpack.c.b16 %v3140, %v3132
    %v3389 = vpack.c.b16 %v3141, %v3133
    %v3390 = vpack.c.b16 %v3142, %v3134
    %v3391 = vpack.c.b16 %v3143, %v3135
    %v3392 = vpack.c.b16 %v3144, %v3136
    %v3393 = vpack.c.b16 %v3145, %v3137
    %v3394 = vpack.c.b16 %v3146, %v3138
    %v3395 = vpack.c.b16 %v3147, %v3139
    %v3396 = vpack.c.b16 %v3156, %v3148
    %v3397 = vpack.c.b16 %v3157, %v3149
    %v3398 = vpack.c.b16 %v3158, %v3150
    %v3399 = vpack.c.b16 %v3159, %v3151
    %v3400 = vpack.c.b16 %v3160, %v3152
    %v3401 = vpack.c.b16 %v3161, %v3153
    %v3402 = vpack.c.b16 %v3162, %v3154
    %v3403 = vpack.c.b16 %v3163, %v3155
    %v3404 = vpack.c.b16 %v3172, %v3164
    %v3405 = vpack.c.b16 %v3173, %v3165
    %v3406 = vpack.c.b16 %v3174, %v3166
    %v3407 = vpack.c.b16 %v3175, %v3167
    %v3408 = vpack.c.b16 %v3176, %v3168
    %v3409 = vpack.c.b16 %v3177, %v3169
    %v3410 = vpack.c.b16 %v3178, %v3170
    %v3411 = vpack.c.b16 %v3179, %v3171
    %v3412 = vpack.c.b16 %v3188, %v3180
    %v3413 = vpack.c.b16 %v3189, %v3181
    %v3414 = vpack.c.b16 %v3190, %v3182
    %v3415 = vpack.c.b16 %v3191, %v3183
    %v3416 = vpack.c.b16 %v3192, %v3184
    %v3417 = vpack.c.b16 %v3193, %v3185
    %v3418 = vpack.c.b16 %v3194, %v3186
    %v3419 = vpack.c.b16 %v3195, %v3187
    %v3420 = vpack.c.b16 %v3204, %v3196
    %v3421 = vpack.c.b16 %v3205, %v3197
    %v3422 = vpack.c.b16 %v3206, %v3198
    %v3423 = vpack.c.b16 %v3207, %v3199
    %v3424 = vpack.c.b16 %v3208, %v3200
    %v3425 = vpack.c.b16 %v3209, %v3201
    %v3426 = vpack.c.b16 %v3210, %v3202
    %v3427 = vpack.c.b16 %v3211, %v3203
    %v3428 = vpack.c.b16 %v3220, %v3212
    %v3429 = vpack.c.b16 %v3221, %v3213
    %v3430 = vpack.c.b16 %v3222, %v3214
    %v3431 = vpack.c.b16 %v3223, %v3215
    %v3432 = vpack.c.b16 %v3224, %v3216
    %v3433 = vpack.c.b16 %v3225, %v3217
    %v3434 = vpack.c.b16 %v3226, %v3218
    %v3435 = vpack.c.b16 %v3227, %v3219
    %v3436 = vpack.c.b16 %v3236, %v3228
    %v3437 = vpack.c.b16 %v3237, %v3229
    %v3438 = vpack.c.b16 %v3238, %v3230
    %v3439 = vpack.c.b16 %v3239, %v3231
    %v3440 = vpack.c.b16 %v3240, %v3232
    %v3441 = vpack.c.b16 %v3241, %v3233
    %v3442 = vpack.c.b16 %v3242, %v3234
    %v3443 = vpack.c.b16 %v3243, %v3235
    %v3444 = vpack.c.b16 %v3252, %v3244
    %v3445 = vpack.c.b16 %v3253, %v3245
    %v3446 = vpack.c.b16 %v3254, %v3246
    %v3447 = vpack.c.b16 %v3255, %v3247
    %v3448 = vpack.c.b16 %v3256, %v3248
    %v3449 = vpack.c.b16 %v3257, %v3249
    %v3450 = vpack.c.b16 %v3258, %v3250
    %v3451 = vpack.c.b16 %v3259, %v3251
    %v3452 = vpack.c.b16 %v3268, %v3260
    %v3453 = vpack.c.b16 %v3269, %v3261
    %v3454 = vpack.c.b16 %v3270, %v3262
    %v3455 = vpack.c.b16 %v3271, %v3263
    %v3456 = vpack.c.b16 %v3272, %v3264
    %v3457 = vpack.c.b16 %v3273, %v3265
    %v3458 = vpack.c.b16 %v3274, %v3266
    %v3459 = vpack.c.b16 %v3275, %v3267
    %v3460 = vpack.c.b16 %v3284, %v3276
    %v3461 = vpack.c.b16 %v3285, %v3277
    %v3462 = vpack.c.b16 %v3286, %v3278
    %v3463 = vpack.c.b16 %v3287, %v3279
    %v3464 = vpack.c.b16 %v3288, %v3280
    %v3465 = vpack.c.b16 %v3289, %v3281
    %v3466 = vpack.c.b16 %v3290, %v3282
    %v3467 = vpack.c.b16 %v3291, %v3283
    %v3468 = vpack.c.b16 %v3300, %v3292
    %v3469 = vpack.c.b16 %v3301, %v3293
    %v3470 = vpack.c.b16 %v3302, %v3294
    %v3471 = vpack.c.b16 %v3303, %v3295
    %v3472 = vpack.c.b16 %v3304, %v3296
    %v3473 = vpack.c.b16 %v3305, %v3297
    %v3474 = vpack.c.b16 %v3306, %v3298
    %v3475 = vpack.c.b16 %v3307, %v3299
    %v3476 = vpack.c.b16 %v3316, %v3308
    %v3477 = vpack.c.b16 %v3317, %v3309
    %v3478 = vpack.c.b16 %v3318, %v3310
    %v3479 = vpack.c.b16 %v3319, %v3311
    %v3480 = vpack.c.b16 %v3320, %v3312
    %v3481 = vpack.c.b16 %v3321, %v3313
    %v3482 = vpack.c.b16 %v3322, %v3314
    %v3483 = vpack.c.b16 %v3323, %v3315
    %v3484 = vpack.c.b16 %v3332, %v3324
    %v3485 = vpack.c.b16 %v3333, %v3325
    %v3486 = vpack.c.b16 %v3334, %v3326
    %v3487 = vpack.c.b16 %v3335, %v3327
    %v3488 = vpack.c.b16 %v3336, %v3328
    %v3489 = vpack.c.b16 %v3337, %v3329
    %v3490 = vpack.c.b16 %v3338, %v3330
    %v3491 = vpack.c.b16 %v3339, %v3331
    %v3492 = vpack.c.b16 %v3348, %v3340
    %v3493 = vpack.c.b16 %v3349, %v3341
    %v3494 = vpack.c.b16 %v3350, %v3342
    %v3495 = vpack.c.b16 %v3351, %v3343
    %v3496 = vpack.c.b16 %v3352, %v3344
    %v3497 = vpack.c.b16 %v3353, %v3345
    %v3498 = vpack.c.b16 %v3354, %v3346
    %v3499 = vpack.c.b16 %v3355, %v3347
    %v3500 = vpack.c.b16 %v3364, %v3356
    %v3501 = vpack.c.b16 %v3365, %v3357
    %v3502 = vpack.c.b16 %v3366, %v3358
    %v3503 = vpack.c.b16 %v3367, %v3359
    %v3504 = vpack.c.b16 %v3368, %v3360
    %v3505 = vpack.c.b16 %v3369, %v3361
    %v3506 = vpack.c.b16 %v3370, %v3362
    %v3507 = vpack.c.b16 %v3371, %v3363
    %v3508 = vpack.c.b16 %v3380, %v3372
    %v3509 = vpack.c.b16 %v3381, %v3373
    %v3510 = vpack.c.b16 %v3382, %v3374
    %v3511 = vpack.c.b16 %v3383, %v3375
    %v3512 = vpack.c.b16 %v3384, %v3376
    %v3513 = vpack.c.b16 %v3385, %v3377
    %v3514 = vpack.c.b16 %v3386, %v3378
    %v3515 = vpack.c.b16 %v3387, %v3379
    %3644 = vmatprep.subr.bf16.mxu0 %v3389
    %3645 = vmatpush1.bf16.msra.mxu0 %v3388
    %3646 = vmatprep.subr.bf16.mxu0 %v3397
    %3647 = vmatpush1.bf16.msra.mxu0 %v3396
    %3648 = vmatprep.subr.bf16.mxu0 %v3405
    %3649 = vmatpush1.bf16.msra.mxu0 %v3404
    %3650 = vmatprep.subr.bf16.mxu0 %v3413
    %3651 = vmatpush1.bf16.msra.mxu0 %v3412
    %3652 = vmatprep.subr.bf16.mxu0 %v3421
    %3653 = vmatpush1.bf16.msra.mxu0 %v3420
    %3654 = vmatprep.subr.bf16.mxu0 %v3429
    %3655 = vmatpush1.bf16.msra.mxu0 %v3428
    %3656 = vmatprep.subr.bf16.mxu0 %v3437
    %3657 = vmatpush1.bf16.msra.mxu0 %v3436
    %3658 = vmatprep.subr.bf16.mxu0 %v3445
    %3659 = vmatpush1.bf16.msra.mxu0 %v3444
    %3660 = vmatprep.subr.bf16.mxu0 %v3453
    %3661 = vmatpush1.bf16.msra.mxu0 %v3452
    %3662 = vmatprep.subr.bf16.mxu0 %v3461
    %3663 = vmatpush1.bf16.msra.mxu0 %v3460
    %3664 = vmatprep.subr.bf16.mxu0 %v3469
    %3665 = vmatpush1.bf16.msra.mxu0 %v3468
    %3666 = vmatprep.subr.bf16.mxu0 %v3477
    %3667 = vmatpush1.bf16.msra.mxu0 %v3476
    %3668 = vmatprep.subr.bf16.mxu0 %v3485
    %3669 = vmatpush1.bf16.msra.mxu0 %v3484
    %3670 = vmatprep.subr.bf16.mxu0 %v3493
    %3671 = vmatpush1.bf16.msra.mxu0 %v3492
    %3672 = vmatprep.subr.bf16.mxu0 %v3501
    %3673 = vmatpush1.bf16.msra.mxu0 %v3500
    %3674 = vmatprep.subr.bf16.mxu0 %v3509
    %3675 = vmatpush1.bf16.msra.mxu0 %v3508
    %3676 = vmatprep.mubr.bf16.mxu0 %v1566
    %3677 = vmatmul.mubr.bf16.gmra.mrb[0].mxu0 %v1565
    %v3678 = vpop.f32.mrb[0].mxu0
    %v3679 = vadd.f32 %v2967, %v3678
    %v3680 = vpop.f32.mrb[0].mxu0
    %v3681 = vadd.f32 %v2971, %v3680
    %v3682 = vpop.f32.mrb[0].mxu0
    %v3683 = vadd.f32 %v2967, %v3682
    %v3684 = vpop.f32.mrb[0].mxu0
    %v3685 = vadd.f32 %v2971, %v3684
    %3686 = vdwg.mxu0
    %3687 = vmatprep.subr.bf16.mxu0 %v3391
    %3688 = vmatpush1.bf16.msra.mxu0 %v3390
    %3689 = vmatprep.subr.bf16.mxu0 %v3399
    %3690 = vmatpush1.bf16.msra.mxu0 %v3398
    %3691 = vmatprep.subr.bf16.mxu0 %v3407
    %3692 = vmatpush1.bf16.msra.mxu0 %v3406
    %3693 = vmatprep.subr.bf16.mxu0 %v3415
    %3694 = vmatpush1.bf16.msra.mxu0 %v3414
    %3695 = vmatprep.subr.bf16.mxu0 %v3423
    %3696 = vmatpush1.bf16.msra.mxu0 %v3422
    %3697 = vmatprep.subr.bf16.mxu0 %v3431
    %3698 = vmatpush1.bf16.msra.mxu0 %v3430
    %3699 = vmatprep.subr.bf16.mxu0 %v3439
    %3700 = vmatpush1.bf16.msra.mxu0 %v3438
    %3701 = vmatprep.subr.bf16.mxu0 %v3447
    %3702 = vmatpush1.bf16.msra.mxu0 %v3446
    %3703 = vmatprep.subr.bf16.mxu0 %v3455
    %3704 = vmatpush1.bf16.msra.mxu0 %v3454
    %3705 = vmatprep.subr.bf16.mxu0 %v3463
    %3706 = vmatpush1.bf16.msra.mxu0 %v3462
    %3707 = vmatprep.subr.bf16.mxu0 %v3471
    %3708 = vmatpush1.bf16.msra.mxu0 %v3470
    %3709 = vmatprep.subr.bf16.mxu0 %v3479
    %3710 = vmatpush1.bf16.msra.mxu0 %v3478
    %3711 = vmatprep.subr.bf16.mxu0 %v3487
    %3712 = vmatpush1.bf16.msra.mxu0 %v3486
    %3713 = vmatprep.subr.bf16.mxu0 %v3495
    %3714 = vmatpush1.bf16.msra.mxu0 %v3494
    %3715 = vmatprep.subr.bf16.mxu0 %v3503
    %3716 = vmatpush1.bf16.msra.mxu0 %v3502
    %3717 = vmatprep.subr.bf16.mxu0 %v3511
    %3718 = vmatpush1.bf16.msra.mxu0 %v3510
    %3719 = vmatprep.mubr.bf16.mxu0 %v1566
    %3720 = vmatmul.mubr.bf16.gmra.mrb[0].mxu0 %v1565
    %v3721 = vpop.f32.mrb[0].mxu0
    %v3722 = vadd.f32 %v2975, %v3721
    %v3723 = vpop.f32.mrb[0].mxu0
    %v3724 = vadd.f32 %v2979, %v3723
    %v3725 = vpop.f32.mrb[0].mxu0
    %v3726 = vadd.f32 %v2975, %v3725
    %v3727 = vpop.f32.mrb[0].mxu0
    %v3728 = vadd.f32 %v2979, %v3727
    %3729 = vdwg.mxu0
    %3730 = vmatprep.subr.bf16.mxu0 %v3393
    %3731 = vmatpush1.bf16.msra.mxu0 %v3392
    %3732 = vmatprep.subr.bf16.mxu0 %v3401
    %3733 = vmatpush1.bf16.msra.mxu0 %v3400
    %3734 = vmatprep.subr.bf16.mxu0 %v3409
    %3735 = vmatpush1.bf16.msra.mxu0 %v3408
    %3736 = vmatprep.subr.bf16.mxu0 %v3417
    %3737 = vmatpush1.bf16.msra.mxu0 %v3416
    %3738 = vmatprep.subr.bf16.mxu0 %v3425
    %3739 = vmatpush1.bf16.msra.mxu0 %v3424
    %3740 = vmatprep.subr.bf16.mxu0 %v3433
    %3741 = vmatpush1.bf16.msra.mxu0 %v3432
    %3742 = vmatprep.subr.bf16.mxu0 %v3441
    %3743 = vmatpush1.bf16.msra.mxu0 %v3440
    %3744 = vmatprep.subr.bf16.mxu0 %v3449
    %3745 = vmatpush1.bf16.msra.mxu0 %v3448
    %3746 = vmatprep.subr.bf16.mxu0 %v3457
    %3747 = vmatpush1.bf16.msra.mxu0 %v3456
    %3748 = vmatprep.subr.bf16.mxu0 %v3465
    %3749 = vmatpush1.bf16.msra.mxu0 %v3464
    %3750 = vmatprep.subr.bf16.mxu0 %v3473
    %3751 = vmatpush1.bf16.msra.mxu0 %v3472
    %3752 = vmatprep.subr.bf16.mxu0 %v3481
    %3753 = vmatpush1.bf16.msra.mxu0 %v3480
    %3754 = vmatprep.subr.bf16.mxu0 %v3489
    %3755 = vmatpush1.bf16.msra.mxu0 %v3488
    %3756 = vmatprep.subr.bf16.mxu0 %v3497
    %3757 = vmatpush1.bf16.msra.mxu0 %v3496
    %3758 = vmatprep.subr.bf16.mxu0 %v3505
    %3759 = vmatpush1.bf16.msra.mxu0 %v3504
    %3760 = vmatprep.subr.bf16.mxu0 %v3513
    %3761 = vmatpush1.bf16.msra.mxu0 %v3512
    %3762 = vmatprep.mubr.bf16.mxu0 %v1566
    %3763 = vmatmul.mubr.bf16.gmra.mrb[0].mxu0 %v1565
    %v3764 = vpop.f32.mrb[0].mxu0
    %v3765 = vadd.f32 %v2983, %v3764
    %v3766 = vpop.f32.mrb[0].mxu0
    %v3767 = vadd.f32 %v2987, %v3766
    %v3768 = vpop.f32.mrb[0].mxu0
    %v3769 = vadd.f32 %v2983, %v3768
    %v3770 = vpop.f32.mrb[0].mxu0
    %v3771 = vadd.f32 %v2987, %v3770
    %3772 = vdwg.mxu0
    %3773 = vmatprep.subr.bf16.mxu0 %v3395
    %3774 = vmatpush1.bf16.msra.mxu0 %v3394
    %3775 = vmatprep.subr.bf16.mxu0 %v3403
    %3776 = vmatpush1.bf16.msra.mxu0 %v3402
    %3777 = vmatprep.subr.bf16.mxu0 %v3411
    %3778 = vmatpush1.bf16.msra.mxu0 %v3410
    %3779 = vmatprep.subr.bf16.mxu0 %v3419
    %3780 = vmatpush1.bf16.msra.mxu0 %v3418
    %3781 = vmatprep.subr.bf16.mxu0 %v3427
    %3782 = vmatpush1.bf16.msra.mxu0 %v3426
    %3783 = vmatprep.subr.bf16.mxu0 %v3435
    %3784 = vmatpush1.bf16.msra.mxu0 %v3434
    %3785 = vmatprep.subr.bf16.mxu0 %v3443
    %3786 = vmatpush1.bf16.msra.mxu0 %v3442
    %3787 = vmatprep.subr.bf16.mxu0 %v3451
    %3788 = vmatpush1.bf16.msra.mxu0 %v3450
    %3789 = vmatprep.subr.bf16.mxu0 %v3459
    %3790 = vmatpush1.bf16.msra.mxu0 %v3458
    %3791 = vmatprep.subr.bf16.mxu0 %v3467
    %3792 = vmatpush1.bf16.msra.mxu0 %v3466
    %3793 = vmatprep.subr.bf16.mxu0 %v3475
    %3794 = vmatpush1.bf16.msra.mxu0 %v3474
    %3795 = vmatprep.subr.bf16.mxu0 %v3483
    %3796 = vmatpush1.bf16.msra.mxu0 %v3482
    %3797 = vmatprep.subr.bf16.mxu0 %v3491
    %3798 = vmatpush1.bf16.msra.mxu0 %v3490
    %3799 = vmatprep.subr.bf16.mxu0 %v3499
    %3800 = vmatpush1.bf16.msra.mxu0 %v3498
    %3801 = vmatprep.subr.bf16.mxu0 %v3507
    %3802 = vmatpush1.bf16.msra.mxu0 %v3506
    %3803 = vmatprep.subr.bf16.mxu0 %v3515
    %3804 = vmatpush1.bf16.msra.mxu0 %v3514
    %3805 = vmatprep.mubr.bf16.mxu0 %v1566
    %3806 = vmatmul.mubr.bf16.gmra.mrb[0].mxu0 %v1565
    %v3807 = vpop.f32.mrb[0].mxu0
    %v3808 = vadd.f32 %v2991, %v3807
    %v3809 = vpop.f32.mrb[0].mxu0
    %v3810 = vadd.f32 %v2995, %v3809
    %v3811 = vpop.f32.mrb[0].mxu0
    %v3812 = vadd.f32 %v2991, %v3811
    %v3813 = vpop.f32.mrb[0].mxu0
    %v3814 = vadd.f32 %v2995, %v3813
    %3815 = vdwg.mxu0
    %v3816 = vmax.f32 %v3679, 0.0
    %v3817 = vmax.f32 %v3681, 0.0
    %v3818 = vmax.f32 %v3722, 0.0
    %v3819 = vmax.f32 %v3724, 0.0
    %v3820 = vmax.f32 %v3765, 0.0
    %v3821 = vmax.f32 %v3767, 0.0
    %v3822 = vmax.f32 %v3808, 0.0
    %v3823 = vmax.f32 %v3810, 0.0
    %v3824 = vmax.f32 %v3683, 0.0
    %v3825 = vmax.f32 %v3685, 0.0
    %v3826 = vmax.f32 %v3726, 0.0
    %v3827 = vmax.f32 %v3728, 0.0
    %v3828 = vmax.f32 %v3769, 0.0
    %v3829 = vmax.f32 %v3771, 0.0
    %v3830 = vmax.f32 %v3812, 0.0
    %v3831 = vmax.f32 %v3814, 0.0
    %3832 = vst [vmem:[%s13] sm:$0xff] %v3816
    %3833 = vst [vmem:[%s13 + $0x8] sm:$0xff] %v3817
    %3834 = vst [vmem:[%s13 + $0x10] sm:$0xff] %v3818
    %3835 = vst [vmem:[%s13 + $0x18] sm:$0xff] %v3819
    %3836 = vst [vmem:[%s13 + $0x20] sm:$0xff] %v3820
    %3837 = vst [vmem:[%s13 + $0x28] sm:$0xff] %v3821
    %3838 = vst [vmem:[%s13 + $0x30] sm:$0xff] %v3822
    %3839 = vst [vmem:[%s13 + $0x38] sm:$0xff] %v3823
    %3840 = vst [vmem:[%s13 + $0x40] sm:$0xff] %v3824
    %3841 = vst [vmem:[%s13 + $0x48] sm:$0xff] %v3825
    %3842 = vst [vmem:[%s13 + $0x50] sm:$0xff] %v3826
    %3843 = vst [vmem:[%s13 + $0x58] sm:$0xff] %v3827
    %3844 = vst [vmem:[%s13 + $0x60] sm:$0xff] %v3828
    %3845 = vst [vmem:[%s13 + $0x68] sm:$0xff] %v3829
    %3846 = vst [vmem:[%s13 + $0x70] sm:$0xff] %v3830
    %3847 = vst [vmem:[%s13 + $0x78] sm:$0xff] %v3831
    %v3848 = vpack.c.bf16 %v1405, %v1403
    %v3849 = vpack.c.bf16 %v1406, %v1404
    %s3850 = scalar_lea.vmem [#allocation15], 2048
    %v3851 = vld [vmem:[%s3850] sm:$0xff]
    %v3852 = vld [vmem:[%s3850 + $0x8] sm:$0xff]
    %v3853 = vld [vmem:[%s3850 + $0x10] sm:$0xff]
    %v3854 = vld [vmem:[%s3850 + $0x18] sm:$0xff]
    %v3855 = vld [vmem:[%s3850 + $0x20] sm:$0xff]
    %v3856 = vld [vmem:[%s3850 + $0x28] sm:$0xff]
    %v3857 = vld [vmem:[%s3850 + $0x30] sm:$0xff]
    %v3858 = vld [vmem:[%s3850 + $0x38] sm:$0xff]
    %v3859 = vld [vmem:[%s3850 + $0x40] sm:$0xff]
    %v3860 = vld [vmem:[%s3850 + $0x48] sm:$0xff]
    %v3861 = vld [vmem:[%s3850 + $0x50] sm:$0xff]
    %v3862 = vld [vmem:[%s3850 + $0x58] sm:$0xff]
    %v3863 = vld [vmem:[%s3850 + $0x60] sm:$0xff]
    %v3864 = vld [vmem:[%s3850 + $0x68] sm:$0xff]
    %v3865 = vld [vmem:[%s3850 + $0x70] sm:$0xff]
    %v3866 = vld [vmem:[%s3850 + $0x78] sm:$0xff]
    %v3867 = vld [vmem:[%s3850 + $0x80] sm:$0xff]
    %v3868 = vld [vmem:[%s3850 + $0x88] sm:$0xff]
    %v3869 = vld [vmem:[%s3850 + $0x90] sm:$0xff]
    %v3870 = vld [vmem:[%s3850 + $0x98] sm:$0xff]
    %v3871 = vld [vmem:[%s3850 + $0xa0] sm:$0xff]
    %v3872 = vld [vmem:[%s3850 + $0xa8] sm:$0xff]
    %v3873 = vld [vmem:[%s3850 + $0xb0] sm:$0xff]
    %v3874 = vld [vmem:[%s3850 + $0xb8] sm:$0xff]
    %v3875 = vld [vmem:[%s3850 + $0xc0] sm:$0xff]
    %v3876 = vld [vmem:[%s3850 + $0xc8] sm:$0xff]
    %v3877 = vld [vmem:[%s3850 + $0xd0] sm:$0xff]
    %v3878 = vld [vmem:[%s3850 + $0xd8] sm:$0xff]
    %v3879 = vld [vmem:[%s3850 + $0xe0] sm:$0xff]
    %v3880 = vld [vmem:[%s3850 + $0xe8] sm:$0xff]
    %v3881 = vld [vmem:[%s3850 + $0xf0] sm:$0xff]
    %v3882 = vld [vmem:[%s3850 + $0xf8] sm:$0xff]
    %v3883 = vld [vmem:[%s3850 + $0x100] sm:$0xff]
    %v3884 = vld [vmem:[%s3850 + $0x108] sm:$0xff]
    %v3885 = vld [vmem:[%s3850 + $0x110] sm:$0xff]
    %v3886 = vld [vmem:[%s3850 + $0x118] sm:$0xff]
    %v3887 = vld [vmem:[%s3850 + $0x120] sm:$0xff]
    %v3888 = vld [vmem:[%s3850 + $0x128] sm:$0xff]
    %v3889 = vld [vmem:[%s3850 + $0x130] sm:$0xff]
    %v3890 = vld [vmem:[%s3850 + $0x138] sm:$0xff]
    %v3891 = vld [vmem:[%s3850 + $0x140] sm:$0xff]
    %v3892 = vld [vmem:[%s3850 + $0x148] sm:$0xff]
    %v3893 = vld [vmem:[%s3850 + $0x150] sm:$0xff]
    %v3894 = vld [vmem:[%s3850 + $0x158] sm:$0xff]
    %v3895 = vld [vmem:[%s3850 + $0x160] sm:$0xff]
    %v3896 = vld [vmem:[%s3850 + $0x168] sm:$0xff]
    %v3897 = vld [vmem:[%s3850 + $0x170] sm:$0xff]
    %v3898 = vld [vmem:[%s3850 + $0x178] sm:$0xff]
    %v3899 = vld [vmem:[%s3850 + $0x180] sm:$0xff]
    %v3900 = vld [vmem:[%s3850 + $0x188] sm:$0xff]
    %v3901 = vld [vmem:[%s3850 + $0x190] sm:$0xff]
    %v3902 = vld [vmem:[%s3850 + $0x198] sm:$0xff]
    %v3903 = vld [vmem:[%s3850 + $0x1a0] sm:$0xff]
    %v3904 = vld [vmem:[%s3850 + $0x1a8] sm:$0xff]
    %v3905 = vld [vmem:[%s3850 + $0x1b0] sm:$0xff]
    %v3906 = vld [vmem:[%s3850 + $0x1b8] sm:$0xff]
    %v3907 = vld [vmem:[%s3850 + $0x1c0] sm:$0xff]
    %v3908 = vld [vmem:[%s3850 + $0x1c8] sm:$0xff]
    %v3909 = vld [vmem:[%s3850 + $0x1d0] sm:$0xff]
    %v3910 = vld [vmem:[%s3850 + $0x1d8] sm:$0xff]
    %v3911 = vld [vmem:[%s3850 + $0x1e0] sm:$0xff]
    %v3912 = vld [vmem:[%s3850 + $0x1e8] sm:$0xff]
    %v3913 = vld [vmem:[%s3850 + $0x1f0] sm:$0xff]
    %v3914 = vld [vmem:[%s3850 + $0x1f8] sm:$0xff]
    %v3915 = vld [vmem:[%s3850 + $0x200] sm:$0xff]
    %v3916 = vld [vmem:[%s3850 + $0x208] sm:$0xff]
    %v3917 = vld [vmem:[%s3850 + $0x210] sm:$0xff]
    %v3918 = vld [vmem:[%s3850 + $0x218] sm:$0xff]
    %v3919 = vld [vmem:[%s3850 + $0x220] sm:$0xff]
    %v3920 = vld [vmem:[%s3850 + $0x228] sm:$0xff]
    %v3921 = vld [vmem:[%s3850 + $0x230] sm:$0xff]
    %v3922 = vld [vmem:[%s3850 + $0x238] sm:$0xff]
    %v3923 = vld [vmem:[%s3850 + $0x240] sm:$0xff]
    %v3924 = vld [vmem:[%s3850 + $0x248] sm:$0xff]
    %v3925 = vld [vmem:[%s3850 + $0x250] sm:$0xff]
    %v3926 = vld [vmem:[%s3850 + $0x258] sm:$0xff]
    %v3927 = vld [vmem:[%s3850 + $0x260] sm:$0xff]
    %v3928 = vld [vmem:[%s3850 + $0x268] sm:$0xff]
    %v3929 = vld [vmem:[%s3850 + $0x270] sm:$0xff]
    %v3930 = vld [vmem:[%s3850 + $0x278] sm:$0xff]
    %v3931 = vld [vmem:[%s3850 + $0x280] sm:$0xff]
    %v3932 = vld [vmem:[%s3850 + $0x288] sm:$0xff]
    %v3933 = vld [vmem:[%s3850 + $0x290] sm:$0xff]
    %v3934 = vld [vmem:[%s3850 + $0x298] sm:$0xff]
    %v3935 = vld [vmem:[%s3850 + $0x2a0] sm:$0xff]
    %v3936 = vld [vmem:[%s3850 + $0x2a8] sm:$0xff]
    %v3937 = vld [vmem:[%s3850 + $0x2b0] sm:$0xff]
    %v3938 = vld [vmem:[%s3850 + $0x2b8] sm:$0xff]
    %v3939 = vld [vmem:[%s3850 + $0x2c0] sm:$0xff]
    %v3940 = vld [vmem:[%s3850 + $0x2c8] sm:$0xff]
    %v3941 = vld [vmem:[%s3850 + $0x2d0] sm:$0xff]
    %v3942 = vld [vmem:[%s3850 + $0x2d8] sm:$0xff]
    %v3943 = vld [vmem:[%s3850 + $0x2e0] sm:$0xff]
    %v3944 = vld [vmem:[%s3850 + $0x2e8] sm:$0xff]
    %v3945 = vld [vmem:[%s3850 + $0x2f0] sm:$0xff]
    %v3946 = vld [vmem:[%s3850 + $0x2f8] sm:$0xff]
    %v3947 = vld [vmem:[%s3850 + $0x300] sm:$0xff]
    %v3948 = vld [vmem:[%s3850 + $0x308] sm:$0xff]
    %v3949 = vld [vmem:[%s3850 + $0x310] sm:$0xff]
    %v3950 = vld [vmem:[%s3850 + $0x318] sm:$0xff]
    %v3951 = vld [vmem:[%s3850 + $0x320] sm:$0xff]
    %v3952 = vld [vmem:[%s3850 + $0x328] sm:$0xff]
    %v3953 = vld [vmem:[%s3850 + $0x330] sm:$0xff]
    %v3954 = vld [vmem:[%s3850 + $0x338] sm:$0xff]
    %v3955 = vld [vmem:[%s3850 + $0x340] sm:$0xff]
    %v3956 = vld [vmem:[%s3850 + $0x348] sm:$0xff]
    %v3957 = vld [vmem:[%s3850 + $0x350] sm:$0xff]
    %v3958 = vld [vmem:[%s3850 + $0x358] sm:$0xff]
    %v3959 = vld [vmem:[%s3850 + $0x360] sm:$0xff]
    %v3960 = vld [vmem:[%s3850 + $0x368] sm:$0xff]
    %v3961 = vld [vmem:[%s3850 + $0x370] sm:$0xff]
    %v3962 = vld [vmem:[%s3850 + $0x378] sm:$0xff]
    %v3963 = vld [vmem:[%s3850 + $0x380] sm:$0xff]
    %v3964 = vld [vmem:[%s3850 + $0x388] sm:$0xff]
    %v3965 = vld [vmem:[%s3850 + $0x390] sm:$0xff]
    %v3966 = vld [vmem:[%s3850 + $0x398] sm:$0xff]
    %v3967 = vld [vmem:[%s3850 + $0x3a0] sm:$0xff]
    %v3968 = vld [vmem:[%s3850 + $0x3a8] sm:$0xff]
    %v3969 = vld [vmem:[%s3850 + $0x3b0] sm:$0xff]
    %v3970 = vld [vmem:[%s3850 + $0x3b8] sm:$0xff]
    %v3971 = vld [vmem:[%s3850 + $0x3c0] sm:$0xff]
    %v3972 = vld [vmem:[%s3850 + $0x3c8] sm:$0xff]
    %v3973 = vld [vmem:[%s3850 + $0x3d0] sm:$0xff]
    %v3974 = vld [vmem:[%s3850 + $0x3d8] sm:$0xff]
    %v3975 = vld [vmem:[%s3850 + $0x3e0] sm:$0xff]
    %v3976 = vld [vmem:[%s3850 + $0x3e8] sm:$0xff]
    %v3977 = vld [vmem:[%s3850 + $0x3f0] sm:$0xff]
    %v3978 = vld [vmem:[%s3850 + $0x3f8] sm:$0xff]
    %s3979 = scalar_lea.vmem [#allocation16], 16
    %v3980 = vld [vmem:[%s3979] sm:$0xff]
    %v3982 = vlaneseq
    %v3983 = vshrl.u32 %v3982, 7
    %v3984 = vsub.s32 0, %v3983
    %v3985 = vrot.slane %v3980, %v3984
    %v3986 = vlaneseq
    %v3987 = vshrl.u32 %v3986, 7
    %v3988 = vsub.s32 1, %v3987
    %v3989 = vrot.slane %v3980, %v3988
    %v3990 = vlaneseq
    %v3991 = vshrl.u32 %v3990, 7
    %v3992 = vsub.s32 2, %v3991
    %v3993 = vrot.slane %v3980, %v3992
    %v3994 = vlaneseq
    %v3995 = vshrl.u32 %v3994, 7
    %v3996 = vsub.s32 3, %v3995
    %v3997 = vrot.slane %v3980, %v3996
    %v3998 = vlaneseq
    %v3999 = vshrl.u32 %v3998, 7
    %v4000 = vsub.s32 4, %v3999
    %v4001 = vrot.slane %v3980, %v4000
    %v4002 = vlaneseq
    %v4003 = vshrl.u32 %v4002, 7
    %v4004 = vsub.s32 5, %v4003
    %v4005 = vrot.slane %v3980, %v4004
    %v4006 = vlaneseq
    %v4007 = vshrl.u32 %v4006, 7
    %v4008 = vsub.s32 6, %v4007
    %v4009 = vrot.slane %v3980, %v4008
    %v4010 = vlaneseq
    %v4011 = vshrl.u32 %v4010, 7
    %v4012 = vsub.s32 7, %v4011
    %v4013 = vrot.slane %v3980, %v4012
    %v4150 = vunpack.c.l.b16 %v3851
    %v4151 = vunpack.c.h.b16 %v3851
    %v4152 = vunpack.c.l.b16 %v3852
    %v4153 = vunpack.c.h.b16 %v3852
    %v4154 = vunpack.c.l.b16 %v3853
    %v4155 = vunpack.c.h.b16 %v3853
    %v4156 = vunpack.c.l.b16 %v3854
    %v4157 = vunpack.c.h.b16 %v3854
    %v4158 = vunpack.c.l.b16 %v3855
    %v4159 = vunpack.c.h.b16 %v3855
    %v4160 = vunpack.c.l.b16 %v3856
    %v4161 = vunpack.c.h.b16 %v3856
    %v4162 = vunpack.c.l.b16 %v3857
    %v4163 = vunpack.c.h.b16 %v3857
    %v4164 = vunpack.c.l.b16 %v3858
    %v4165 = vunpack.c.h.b16 %v3858
    %v4166 = vunpack.c.l.b16 %v3859
    %v4167 = vunpack.c.h.b16 %v3859
    %v4168 = vunpack.c.l.b16 %v3860
    %v4169 = vunpack.c.h.b16 %v3860
    %v4170 = vunpack.c.l.b16 %v3861
    %v4171 = vunpack.c.h.b16 %v3861
    %v4172 = vunpack.c.l.b16 %v3862
    %v4173 = vunpack.c.h.b16 %v3862
    %v4174 = vunpack.c.l.b16 %v3863
    %v4175 = vunpack.c.h.b16 %v3863
    %v4176 = vunpack.c.l.b16 %v3864
    %v4177 = vunpack.c.h.b16 %v3864
    %v4178 = vunpack.c.l.b16 %v3865
    %v4179 = vunpack.c.h.b16 %v3865
    %v4180 = vunpack.c.l.b16 %v3866
    %v4181 = vunpack.c.h.b16 %v3866
    %v4182 = vunpack.c.l.b16 %v3867
    %v4183 = vunpack.c.h.b16 %v3867
    %v4184 = vunpack.c.l.b16 %v3868
    %v4185 = vunpack.c.h.b16 %v3868
    %v4186 = vunpack.c.l.b16 %v3869
    %v4187 = vunpack.c.h.b16 %v3869
    %v4188 = vunpack.c.l.b16 %v3870
    %v4189 = vunpack.c.h.b16 %v3870
    %v4190 = vunpack.c.l.b16 %v3871
    %v4191 = vunpack.c.h.b16 %v3871
    %v4192 = vunpack.c.l.b16 %v3872
    %v4193 = vunpack.c.h.b16 %v3872
    %v4194 = vunpack.c.l.b16 %v3873
    %v4195 = vunpack.c.h.b16 %v3873
    %v4196 = vunpack.c.l.b16 %v3874
    %v4197 = vunpack.c.h.b16 %v3874
    %v4198 = vunpack.c.l.b16 %v3875
    %v4199 = vunpack.c.h.b16 %v3875
    %v4200 = vunpack.c.l.b16 %v3876
    %v4201 = vunpack.c.h.b16 %v3876
    %v4202 = vunpack.c.l.b16 %v3877
    %v4203 = vunpack.c.h.b16 %v3877
    %v4204 = vunpack.c.l.b16 %v3878
    %v4205 = vunpack.c.h.b16 %v3878
    %v4206 = vunpack.c.l.b16 %v3879
    %v4207 = vunpack.c.h.b16 %v3879
    %v4208 = vunpack.c.l.b16 %v3880
    %v4209 = vunpack.c.h.b16 %v3880
    %v4210 = vunpack.c.l.b16 %v3881
    %v4211 = vunpack.c.h.b16 %v3881
    %v4212 = vunpack.c.l.b16 %v3882
    %v4213 = vunpack.c.h.b16 %v3882
    %v4214 = vunpack.c.l.b16 %v3883
    %v4215 = vunpack.c.h.b16 %v3883
    %v4216 = vunpack.c.l.b16 %v3884
    %v4217 = vunpack.c.h.b16 %v3884
    %v4218 = vunpack.c.l.b16 %v3885
    %v4219 = vunpack.c.h.b16 %v3885
    %v4220 = vunpack.c.l.b16 %v3886
    %v4221 = vunpack.c.h.b16 %v3886
    %v4222 = vunpack.c.l.b16 %v3887
    %v4223 = vunpack.c.h.b16 %v3887
    %v4224 = vunpack.c.l.b16 %v3888
    %v4225 = vunpack.c.h.b16 %v3888
    %v4226 = vunpack.c.l.b16 %v3889
    %v4227 = vunpack.c.h.b16 %v3889
    %v4228 = vunpack.c.l.b16 %v3890
    %v4229 = vunpack.c.h.b16 %v3890
    %v4230 = vunpack.c.l.b16 %v3891
    %v4231 = vunpack.c.h.b16 %v3891
    %v4232 = vunpack.c.l.b16 %v3892
    %v4233 = vunpack.c.h.b16 %v3892
    %v4234 = vunpack.c.l.b16 %v3893
    %v4235 = vunpack.c.h.b16 %v3893
    %v4236 = vunpack.c.l.b16 %v3894
    %v4237 = vunpack.c.h.b16 %v3894
    %v4238 = vunpack.c.l.b16 %v3895
    %v4239 = vunpack.c.h.b16 %v3895
    %v4240 = vunpack.c.l.b16 %v3896
    %v4241 = vunpack.c.h.b16 %v3896
    %v4242 = vunpack.c.l.b16 %v3897
    %v4243 = vunpack.c.h.b16 %v3897
    %v4244 = vunpack.c.l.b16 %v3898
    %v4245 = vunpack.c.h.b16 %v3898
    %v4246 = vunpack.c.l.b16 %v3899
    %v4247 = vunpack.c.h.b16 %v3899
    %v4248 = vunpack.c.l.b16 %v3900
    %v4249 = vunpack.c.h.b16 %v3900
    %v4250 = vunpack.c.l.b16 %v3901
    %v4251 = vunpack.c.h.b16 %v3901
    %v4252 = vunpack.c.l.b16 %v3902
    %v4253 = vunpack.c.h.b16 %v3902
    %v4254 = vunpack.c.l.b16 %v3903
    %v4255 = vunpack.c.h.b16 %v3903
    %v4256 = vunpack.c.l.b16 %v3904
    %v4257 = vunpack.c.h.b16 %v3904
    %v4258 = vunpack.c.l.b16 %v3905
    %v4259 = vunpack.c.h.b16 %v3905
    %v4260 = vunpack.c.l.b16 %v3906
    %v4261 = vunpack.c.h.b16 %v3906
    %v4262 = vunpack.c.l.b16 %v3907
    %v4263 = vunpack.c.h.b16 %v3907
    %v4264 = vunpack.c.l.b16 %v3908
    %v4265 = vunpack.c.h.b16 %v3908
    %v4266 = vunpack.c.l.b16 %v3909
    %v4267 = vunpack.c.h.b16 %v3909
    %v4268 = vunpack.c.l.b16 %v3910
    %v4269 = vunpack.c.h.b16 %v3910
    %v4270 = vunpack.c.l.b16 %v3911
    %v4271 = vunpack.c.h.b16 %v3911
    %v4272 = vunpack.c.l.b16 %v3912
    %v4273 = vunpack.c.h.b16 %v3912
    %v4274 = vunpack.c.l.b16 %v3913
    %v4275 = vunpack.c.h.b16 %v3913
    %v4276 = vunpack.c.l.b16 %v3914
    %v4277 = vunpack.c.h.b16 %v3914
    %v4278 = vunpack.c.l.b16 %v3915
    %v4279 = vunpack.c.h.b16 %v3915
    %v4280 = vunpack.c.l.b16 %v3916
    %v4281 = vunpack.c.h.b16 %v3916
    %v4282 = vunpack.c.l.b16 %v3917
    %v4283 = vunpack.c.h.b16 %v3917
    %v4284 = vunpack.c.l.b16 %v3918
    %v4285 = vunpack.c.h.b16 %v3918
    %v4286 = vunpack.c.l.b16 %v3919
    %v4287 = vunpack.c.h.b16 %v3919
    %v4288 = vunpack.c.l.b16 %v3920
    %v4289 = vunpack.c.h.b16 %v3920
    %v4290 = vunpack.c.l.b16 %v3921
    %v4291 = vunpack.c.h.b16 %v3921
    %v4292 = vunpack.c.l.b16 %v3922
    %v4293 = vunpack.c.h.b16 %v3922
    %v4294 = vunpack.c.l.b16 %v3923
    %v4295 = vunpack.c.h.b16 %v3923
    %v4296 = vunpack.c.l.b16 %v3924
    %v4297 = vunpack.c.h.b16 %v3924
    %v4298 = vunpack.c.l.b16 %v3925
    %v4299 = vunpack.c.h.b16 %v3925
    %v4300 = vunpack.c.l.b16 %v3926
    %v4301 = vunpack.c.h.b16 %v3926
    %v4302 = vunpack.c.l.b16 %v3927
    %v4303 = vunpack.c.h.b16 %v3927
    %v4304 = vunpack.c.l.b16 %v3928
    %v4305 = vunpack.c.h.b16 %v3928
    %v4306 = vunpack.c.l.b16 %v3929
    %v4307 = vunpack.c.h.b16 %v3929
    %v4308 = vunpack.c.l.b16 %v3930
    %v4309 = vunpack.c.h.b16 %v3930
    %v4310 = vunpack.c.l.b16 %v3931
    %v4311 = vunpack.c.h.b16 %v3931
    %v4312 = vunpack.c.l.b16 %v3932
    %v4313 = vunpack.c.h.b16 %v3932
    %v4314 = vunpack.c.l.b16 %v3933
    %v4315 = vunpack.c.h.b16 %v3933
    %v4316 = vunpack.c.l.b16 %v3934
    %v4317 = vunpack.c.h.b16 %v3934
    %v4318 = vunpack.c.l.b16 %v3935
    %v4319 = vunpack.c.h.b16 %v3935
    %v4320 = vunpack.c.l.b16 %v3936
    %v4321 = vunpack.c.h.b16 %v3936
    %v4322 = vunpack.c.l.b16 %v3937
    %v4323 = vunpack.c.h.b16 %v3937
    %v4324 = vunpack.c.l.b16 %v3938
    %v4325 = vunpack.c.h.b16 %v3938
    %v4326 = vunpack.c.l.b16 %v3939
    %v4327 = vunpack.c.h.b16 %v3939
    %v4328 = vunpack.c.l.b16 %v3940
    %v4329 = vunpack.c.h.b16 %v3940
    %v4330 = vunpack.c.l.b16 %v3941
    %v4331 = vunpack.c.h.b16 %v3941
    %v4332 = vunpack.c.l.b16 %v3942
    %v4333 = vunpack.c.h.b16 %v3942
    %v4334 = vunpack.c.l.b16 %v3943
    %v4335 = vunpack.c.h.b16 %v3943
    %v4336 = vunpack.c.l.b16 %v3944
    %v4337 = vunpack.c.h.b16 %v3944
    %v4338 = vunpack.c.l.b16 %v3945
    %v4339 = vunpack.c.h.b16 %v3945
    %v4340 = vunpack.c.l.b16 %v3946
    %v4341 = vunpack.c.h.b16 %v3946
    %v4342 = vunpack.c.l.b16 %v3947
    %v4343 = vunpack.c.h.b16 %v3947
    %v4344 = vunpack.c.l.b16 %v3948
    %v4345 = vunpack.c.h.b16 %v3948
    %v4346 = vunpack.c.l.b16 %v3949
    %v4347 = vunpack.c.h.b16 %v3949
    %v4348 = vunpack.c.l.b16 %v3950
    %v4349 = vunpack.c.h.b16 %v3950
    %v4350 = vunpack.c.l.b16 %v3951
    %v4351 = vunpack.c.h.b16 %v3951
    %v4352 = vunpack.c.l.b16 %v3952
    %v4353 = vunpack.c.h.b16 %v3952
    %v4354 = vunpack.c.l.b16 %v3953
    %v4355 = vunpack.c.h.b16 %v3953
    %v4356 = vunpack.c.l.b16 %v3954
    %v4357 = vunpack.c.h.b16 %v3954
    %v4358 = vunpack.c.l.b16 %v3955
    %v4359 = vunpack.c.h.b16 %v3955
    %v4360 = vunpack.c.l.b16 %v3956
    %v4361 = vunpack.c.h.b16 %v3956
    %v4362 = vunpack.c.l.b16 %v3957
    %v4363 = vunpack.c.h.b16 %v3957
    %v4364 = vunpack.c.l.b16 %v3958
    %v4365 = vunpack.c.h.b16 %v3958
    %v4366 = vunpack.c.l.b16 %v3959
    %v4367 = vunpack.c.h.b16 %v3959
    %v4368 = vunpack.c.l.b16 %v3960
    %v4369 = vunpack.c.h.b16 %v3960
    %v4370 = vunpack.c.l.b16 %v3961
    %v4371 = vunpack.c.h.b16 %v3961
    %v4372 = vunpack.c.l.b16 %v3962
    %v4373 = vunpack.c.h.b16 %v3962
    %v4374 = vunpack.c.l.b16 %v3963
    %v4375 = vunpack.c.h.b16 %v3963
    %v4376 = vunpack.c.l.b16 %v3964
    %v4377 = vunpack.c.h.b16 %v3964
    %v4378 = vunpack.c.l.b16 %v3965
    %v4379 = vunpack.c.h.b16 %v3965
    %v4380 = vunpack.c.l.b16 %v3966
    %v4381 = vunpack.c.h.b16 %v3966
    %v4382 = vunpack.c.l.b16 %v3967
    %v4383 = vunpack.c.h.b16 %v3967
    %v4384 = vunpack.c.l.b16 %v3968
    %v4385 = vunpack.c.h.b16 %v3968
    %v4386 = vunpack.c.l.b16 %v3969
    %v4387 = vunpack.c.h.b16 %v3969
    %v4388 = vunpack.c.l.b16 %v3970
    %v4389 = vunpack.c.h.b16 %v3970
    %v4390 = vunpack.c.l.b16 %v3971
    %v4391 = vunpack.c.h.b16 %v3971
    %v4392 = vunpack.c.l.b16 %v3972
    %v4393 = vunpack.c.h.b16 %v3972
    %v4394 = vunpack.c.l.b16 %v3973
    %v4395 = vunpack.c.h.b16 %v3973
    %v4396 = vunpack.c.l.b16 %v3974
    %v4397 = vunpack.c.h.b16 %v3974
    %v4398 = vunpack.c.l.b16 %v3975
    %v4399 = vunpack.c.h.b16 %v3975
    %v4400 = vunpack.c.l.b16 %v3976
    %v4401 = vunpack.c.h.b16 %v3976
    %v4402 = vunpack.c.l.b16 %v3977
    %v4403 = vunpack.c.h.b16 %v3977
    %v4404 = vunpack.c.l.b16 %v3978
    %v4405 = vunpack.c.h.b16 %v3978
    %v4406 = vpack.c.b16 %v4158, %v4150
    %v4407 = vpack.c.b16 %v4159, %v4151
    %v4408 = vpack.c.b16 %v4160, %v4152
    %v4409 = vpack.c.b16 %v4161, %v4153
    %v4410 = vpack.c.b16 %v4162, %v4154
    %v4411 = vpack.c.b16 %v4163, %v4155
    %v4412 = vpack.c.b16 %v4164, %v4156
    %v4413 = vpack.c.b16 %v4165, %v4157
    %v4414 = vpack.c.b16 %v4174, %v4166
    %v4415 = vpack.c.b16 %v4175, %v4167
    %v4416 = vpack.c.b16 %v4176, %v4168
    %v4417 = vpack.c.b16 %v4177, %v4169
    %v4418 = vpack.c.b16 %v4178, %v4170
    %v4419 = vpack.c.b16 %v4179, %v4171
    %v4420 = vpack.c.b16 %v4180, %v4172
    %v4421 = vpack.c.b16 %v4181, %v4173
    %v4422 = vpack.c.b16 %v4190, %v4182
    %v4423 = vpack.c.b16 %v4191, %v4183
    %v4424 = vpack.c.b16 %v4192, %v4184
    %v4425 = vpack.c.b16 %v4193, %v4185
    %v4426 = vpack.c.b16 %v4194, %v4186
    %v4427 = vpack.c.b16 %v4195, %v4187
    %v4428 = vpack.c.b16 %v4196, %v4188
    %v4429 = vpack.c.b16 %v4197, %v4189
    %v4430 = vpack.c.b16 %v4206, %v4198
    %v4431 = vpack.c.b16 %v4207, %v4199
    %v4432 = vpack.c.b16 %v4208, %v4200
    %v4433 = vpack.c.b16 %v4209, %v4201
    %v4434 = vpack.c.b16 %v4210, %v4202
    %v4435 = vpack.c.b16 %v4211, %v4203
    %v4436 = vpack.c.b16 %v4212, %v4204
    %v4437 = vpack.c.b16 %v4213, %v4205
    %v4438 = vpack.c.b16 %v4222, %v4214
    %v4439 = vpack.c.b16 %v4223, %v4215
    %v4440 = vpack.c.b16 %v4224, %v4216
    %v4441 = vpack.c.b16 %v4225, %v4217
    %v4442 = vpack.c.b16 %v4226, %v4218
    %v4443 = vpack.c.b16 %v4227, %v4219
    %v4444 = vpack.c.b16 %v4228, %v4220
    %v4445 = vpack.c.b16 %v4229, %v4221
    %v4446 = vpack.c.b16 %v4238, %v4230
    %v4447 = vpack.c.b16 %v4239, %v4231
    %v4448 = vpack.c.b16 %v4240, %v4232
    %v4449 = vpack.c.b16 %v4241, %v4233
    %v4450 = vpack.c.b16 %v4242, %v4234
    %v4451 = vpack.c.b16 %v4243, %v4235
    %v4452 = vpack.c.b16 %v4244, %v4236
    %v4453 = vpack.c.b16 %v4245, %v4237
    %v4454 = vpack.c.b16 %v4254, %v4246
    %v4455 = vpack.c.b16 %v4255, %v4247
    %v4456 = vpack.c.b16 %v4256, %v4248
    %v4457 = vpack.c.b16 %v4257, %v4249
    %v4458 = vpack.c.b16 %v4258, %v4250
    %v4459 = vpack.c.b16 %v4259, %v4251
    %v4460 = vpack.c.b16 %v4260, %v4252
    %v4461 = vpack.c.b16 %v4261, %v4253
    %v4462 = vpack.c.b16 %v4270, %v4262
    %v4463 = vpack.c.b16 %v4271, %v4263
    %v4464 = vpack.c.b16 %v4272, %v4264
    %v4465 = vpack.c.b16 %v4273, %v4265
    %v4466 = vpack.c.b16 %v4274, %v4266
    %v4467 = vpack.c.b16 %v4275, %v4267
    %v4468 = vpack.c.b16 %v4276, %v4268
    %v4469 = vpack.c.b16 %v4277, %v4269
    %v4470 = vpack.c.b16 %v4286, %v4278
    %v4471 = vpack.c.b16 %v4287, %v4279
    %v4472 = vpack.c.b16 %v4288, %v4280
    %v4473 = vpack.c.b16 %v4289, %v4281
    %v4474 = vpack.c.b16 %v4290, %v4282
    %v4475 = vpack.c.b16 %v4291, %v4283
    %v4476 = vpack.c.b16 %v4292, %v4284
    %v4477 = vpack.c.b16 %v4293, %v4285
    %v4478 = vpack.c.b16 %v4302, %v4294
    %v4479 = vpack.c.b16 %v4303, %v4295
    %v4480 = vpack.c.b16 %v4304, %v4296
    %v4481 = vpack.c.b16 %v4305, %v4297
    %v4482 = vpack.c.b16 %v4306, %v4298
    %v4483 = vpack.c.b16 %v4307, %v4299
    %v4484 = vpack.c.b16 %v4308, %v4300
    %v4485 = vpack.c.b16 %v4309, %v4301
    %v4486 = vpack.c.b16 %v4318, %v4310
    %v4487 = vpack.c.b16 %v4319, %v4311
    %v4488 = vpack.c.b16 %v4320, %v4312
    %v4489 = vpack.c.b16 %v4321, %v4313
    %v4490 = vpack.c.b16 %v4322, %v4314
    %v4491 = vpack.c.b16 %v4323, %v4315
    %v4492 = vpack.c.b16 %v4324, %v4316
    %v4493 = vpack.c.b16 %v4325, %v4317
    %v4494 = vpack.c.b16 %v4334, %v4326
    %v4495 = vpack.c.b16 %v4335, %v4327
    %v4496 = vpack.c.b16 %v4336, %v4328
    %v4497 = vpack.c.b16 %v4337, %v4329
    %v4498 = vpack.c.b16 %v4338, %v4330
    %v4499 = vpack.c.b16 %v4339, %v4331
    %v4500 = vpack.c.b16 %v4340, %v4332
    %v4501 = vpack.c.b16 %v4341, %v4333
    %v4502 = vpack.c.b16 %v4350, %v4342
    %v4503 = vpack.c.b16 %v4351, %v4343
    %v4504 = vpack.c.b16 %v4352, %v4344
    %v4505 = vpack.c.b16 %v4353, %v4345
    %v4506 = vpack.c.b16 %v4354, %v4346
    %v4507 = vpack.c.b16 %v4355, %v4347
    %v4508 = vpack.c.b16 %v4356, %v4348
    %v4509 = vpack.c.b16 %v4357, %v4349
    %v4510 = vpack.c.b16 %v4366, %v4358
    %v4511 = vpack.c.b16 %v4367, %v4359
    %v4512 = vpack.c.b16 %v4368, %v4360
    %v4513 = vpack.c.b16 %v4369, %v4361
    %v4514 = vpack.c.b16 %v4370, %v4362
    %v4515 = vpack.c.b16 %v4371, %v4363
    %v4516 = vpack.c.b16 %v4372, %v4364
    %v4517 = vpack.c.b16 %v4373, %v4365
    %v4518 = vpack.c.b16 %v4382, %v4374
    %v4519 = vpack.c.b16 %v4383, %v4375
    %v4520 = vpack.c.b16 %v4384, %v4376
    %v4521 = vpack.c.b16 %v4385, %v4377
    %v4522 = vpack.c.b16 %v4386, %v4378
    %v4523 = vpack.c.b16 %v4387, %v4379
    %v4524 = vpack.c.b16 %v4388, %v4380
    %v4525 = vpack.c.b16 %v4389, %v4381
    %v4526 = vpack.c.b16 %v4398, %v4390
    %v4527 = vpack.c.b16 %v4399, %v4391
    %v4528 = vpack.c.b16 %v4400, %v4392
    %v4529 = vpack.c.b16 %v4401, %v4393
    %v4530 = vpack.c.b16 %v4402, %v4394
    %v4531 = vpack.c.b16 %v4403, %v4395
    %v4532 = vpack.c.b16 %v4404, %v4396
    %v4533 = vpack.c.b16 %v4405, %v4397
    %4662 = vmatprep.subr.bf16.mxu0 %v4407
    %4663 = vmatpush1.bf16.msra.mxu0 %v4406
    %4664 = vmatprep.subr.bf16.mxu0 %v4415
    %4665 = vmatpush1.bf16.msra.mxu0 %v4414
    %4666 = vmatprep.subr.bf16.mxu0 %v4423
    %4667 = vmatpush1.bf16.msra.mxu0 %v4422
    %4668 = vmatprep.subr.bf16.mxu0 %v4431
    %4669 = vmatpush1.bf16.msra.mxu0 %v4430
    %4670 = vmatprep.subr.bf16.mxu0 %v4439
    %4671 = vmatpush1.bf16.msra.mxu0 %v4438
    %4672 = vmatprep.subr.bf16.mxu0 %v4447
    %4673 = vmatpush1.bf16.msra.mxu0 %v4446
    %4674 = vmatprep.subr.bf16.mxu0 %v4455
    %4675 = vmatpush1.bf16.msra.mxu0 %v4454
    %4676 = vmatprep.subr.bf16.mxu0 %v4463
    %4677 = vmatpush1.bf16.msra.mxu0 %v4462
    %4678 = vmatprep.subr.bf16.mxu0 %v4471
    %4679 = vmatpush1.bf16.msra.mxu0 %v4470
    %4680 = vmatprep.subr.bf16.mxu0 %v4479
    %4681 = vmatpush1.bf16.msra.mxu0 %v4478
    %4682 = vmatprep.subr.bf16.mxu0 %v4487
    %4683 = vmatpush1.bf16.msra.mxu0 %v4486
    %4684 = vmatprep.subr.bf16.mxu0 %v4495
    %4685 = vmatpush1.bf16.msra.mxu0 %v4494
    %4686 = vmatprep.subr.bf16.mxu0 %v4503
    %4687 = vmatpush1.bf16.msra.mxu0 %v4502
    %4688 = vmatprep.subr.bf16.mxu0 %v4511
    %4689 = vmatpush1.bf16.msra.mxu0 %v4510
    %4690 = vmatprep.subr.bf16.mxu0 %v4519
    %4691 = vmatpush1.bf16.msra.mxu0 %v4518
    %4692 = vmatprep.subr.bf16.mxu0 %v4527
    %4693 = vmatpush1.bf16.msra.mxu0 %v4526
    %4694 = vmatprep.mubr.bf16.mxu0 %v3849
    %4695 = vmatmul.mubr.bf16.gmra.mrb[0].mxu0 %v3848
    %v4696 = vpop.f32.mrb[0].mxu0
    %v4697 = vadd.f32 %v3985, %v4696
    %v4698 = vpop.f32.mrb[0].mxu0
    %v4699 = vadd.f32 %v3989, %v4698
    %v4700 = vpop.f32.mrb[0].mxu0
    %v4701 = vadd.f32 %v3985, %v4700
    %v4702 = vpop.f32.mrb[0].mxu0
    %v4703 = vadd.f32 %v3989, %v4702
    %4704 = vdwg.mxu0
    %4705 = vmatprep.subr.bf16.mxu0 %v4409
    %4706 = vmatpush1.bf16.msra.mxu0 %v4408
    %4707 = vmatprep.subr.bf16.mxu0 %v4417
    %4708 = vmatpush1.bf16.msra.mxu0 %v4416
    %4709 = vmatprep.subr.bf16.mxu0 %v4425
    %4710 = vmatpush1.bf16.msra.mxu0 %v4424
    %4711 = vmatprep.subr.bf16.mxu0 %v4433
    %4712 = vmatpush1.bf16.msra.mxu0 %v4432
    %4713 = vmatprep.subr.bf16.mxu0 %v4441
    %4714 = vmatpush1.bf16.msra.mxu0 %v4440
    %4715 = vmatprep.subr.bf16.mxu0 %v4449
    %4716 = vmatpush1.bf16.msra.mxu0 %v4448
    %4717 = vmatprep.subr.bf16.mxu0 %v4457
    %4718 = vmatpush1.bf16.msra.mxu0 %v4456
    %4719 = vmatprep.subr.bf16.mxu0 %v4465
    %4720 = vmatpush1.bf16.msra.mxu0 %v4464
    %4721 = vmatprep.subr.bf16.mxu0 %v4473
    %4722 = vmatpush1.bf16.msra.mxu0 %v4472
    %4723 = vmatprep.subr.bf16.mxu0 %v4481
    %4724 = vmatpush1.bf16.msra.mxu0 %v4480
    %4725 = vmatprep.subr.bf16.mxu0 %v4489
    %4726 = vmatpush1.bf16.msra.mxu0 %v4488
    %4727 = vmatprep.subr.bf16.mxu0 %v4497
    %4728 = vmatpush1.bf16.msra.mxu0 %v4496
    %4729 = vmatprep.subr.bf16.mxu0 %v4505
    %4730 = vmatpush1.bf16.msra.mxu0 %v4504
    %4731 = vmatprep.subr.bf16.mxu0 %v4513
    %4732 = vmatpush1.bf16.msra.mxu0 %v4512
    %4733 = vmatprep.subr.bf16.mxu0 %v4521
    %4734 = vmatpush1.bf16.msra.mxu0 %v4520
    %4735 = vmatprep.subr.bf16.mxu0 %v4529
    %4736 = vmatpush1.bf16.msra.mxu0 %v4528
    %4737 = vmatprep.mubr.bf16.mxu0 %v3849
    %4738 = vmatmul.mubr.bf16.gmra.mrb[0].mxu0 %v3848
    %v4739 = vpop.f32.mrb[0].mxu0
    %v4740 = vadd.f32 %v3993, %v4739
    %v4741 = vpop.f32.mrb[0].mxu0
    %v4742 = vadd.f32 %v3997, %v4741
    %v4743 = vpop.f32.mrb[0].mxu0
    %v4744 = vadd.f32 %v3993, %v4743
    %v4745 = vpop.f32.mrb[0].mxu0
    %v4746 = vadd.f32 %v3997, %v4745
    %4747 = vdwg.mxu0
    %4748 = vmatprep.subr.bf16.mxu0 %v4411
    %4749 = vmatpush1.bf16.msra.mxu0 %v4410
    %4750 = vmatprep.subr.bf16.mxu0 %v4419
    %4751 = vmatpush1.bf16.msra.mxu0 %v4418
    %4752 = vmatprep.subr.bf16.mxu0 %v4427
    %4753 = vmatpush1.bf16.msra.mxu0 %v4426
    %4754 = vmatprep.subr.bf16.mxu0 %v4435
    %4755 = vmatpush1.bf16.msra.mxu0 %v4434
    %4756 = vmatprep.subr.bf16.mxu0 %v4443
    %4757 = vmatpush1.bf16.msra.mxu0 %v4442
    %4758 = vmatprep.subr.bf16.mxu0 %v4451
    %4759 = vmatpush1.bf16.msra.mxu0 %v4450
    %4760 = vmatprep.subr.bf16.mxu0 %v4459
    %4761 = vmatpush1.bf16.msra.mxu0 %v4458
    %4762 = vmatprep.subr.bf16.mxu0 %v4467
    %4763 = vmatpush1.bf16.msra.mxu0 %v4466
    %4764 = vmatprep.subr.bf16.mxu0 %v4475
    %4765 = vmatpush1.bf16.msra.mxu0 %v4474
    %4766 = vmatprep.subr.bf16.mxu0 %v4483
    %4767 = vmatpush1.bf16.msra.mxu0 %v4482
    %4768 = vmatprep.subr.bf16.mxu0 %v4491
    %4769 = vmatpush1.bf16.msra.mxu0 %v4490
    %4770 = vmatprep.subr.bf16.mxu0 %v4499
    %4771 = vmatpush1.bf16.msra.mxu0 %v4498
    %4772 = vmatprep.subr.bf16.mxu0 %v4507
    %4773 = vmatpush1.bf16.msra.mxu0 %v4506
    %4774 = vmatprep.subr.bf16.mxu0 %v4515
    %4775 = vmatpush1.bf16.msra.mxu0 %v4514
    %4776 = vmatprep.subr.bf16.mxu0 %v4523
    %4777 = vmatpush1.bf16.msra.mxu0 %v4522
    %4778 = vmatprep.subr.bf16.mxu0 %v4531
    %4779 = vmatpush1.bf16.msra.mxu0 %v4530
    %4780 = vmatprep.mubr.bf16.mxu0 %v3849
    %4781 = vmatmul.mubr.bf16.gmra.mrb[0].mxu0 %v3848
    %v4782 = vpop.f32.mrb[0].mxu0
    %v4783 = vadd.f32 %v4001, %v4782
    %v4784 = vpop.f32.mrb[0].mxu0
    %v4785 = vadd.f32 %v4005, %v4784
    %v4786 = vpop.f32.mrb[0].mxu0
    %v4787 = vadd.f32 %v4001, %v4786
    %v4788 = vpop.f32.mrb[0].mxu0
    %v4789 = vadd.f32 %v4005, %v4788
    %4790 = vdwg.mxu0
    %4791 = vmatprep.subr.bf16.mxu0 %v4413
    %4792 = vmatpush1.bf16.msra.mxu0 %v4412
    %4793 = vmatprep.subr.bf16.mxu0 %v4421
    %4794 = vmatpush1.bf16.msra.mxu0 %v4420
    %4795 = vmatprep.subr.bf16.mxu0 %v4429
    %4796 = vmatpush1.bf16.msra.mxu0 %v4428
    %4797 = vmatprep.subr.bf16.mxu0 %v4437
    %4798 = vmatpush1.bf16.msra.mxu0 %v4436
    %4799 = vmatprep.subr.bf16.mxu0 %v4445
    %4800 = vmatpush1.bf16.msra.mxu0 %v4444
    %4801 = vmatprep.subr.bf16.mxu0 %v4453
    %4802 = vmatpush1.bf16.msra.mxu0 %v4452
    %4803 = vmatprep.subr.bf16.mxu0 %v4461
    %4804 = vmatpush1.bf16.msra.mxu0 %v4460
    %4805 = vmatprep.subr.bf16.mxu0 %v4469
    %4806 = vmatpush1.bf16.msra.mxu0 %v4468
    %4807 = vmatprep.subr.bf16.mxu0 %v4477
    %4808 = vmatpush1.bf16.msra.mxu0 %v4476
    %4809 = vmatprep.subr.bf16.mxu0 %v4485
    %4810 = vmatpush1.bf16.msra.mxu0 %v4484
    %4811 = vmatprep.subr.bf16.mxu0 %v4493
    %4812 = vmatpush1.bf16.msra.mxu0 %v4492
    %4813 = vmatprep.subr.bf16.mxu0 %v4501
    %4814 = vmatpush1.bf16.msra.mxu0 %v4500
    %4815 = vmatprep.subr.bf16.mxu0 %v4509
    %4816 = vmatpush1.bf16.msra.mxu0 %v4508
    %4817 = vmatprep.subr.bf16.mxu0 %v4517
    %4818 = vmatpush1.bf16.msra.mxu0 %v4516
    %4819 = vmatprep.subr.bf16.mxu0 %v4525
    %4820 = vmatpush1.bf16.msra.mxu0 %v4524
    %4821 = vmatprep.subr.bf16.mxu0 %v4533
    %4822 = vmatpush1.bf16.msra.mxu0 %v4532
    %4823 = vmatprep.mubr.bf16.mxu0 %v3849
    %4824 = vmatmul.mubr.bf16.gmra.mrb[0].mxu0 %v3848
    %v4825 = vpop.f32.mrb[0].mxu0
    %v4826 = vadd.f32 %v4009, %v4825
    %v4827 = vpop.f32.mrb[0].mxu0
    %v4828 = vadd.f32 %v4013, %v4827
    %v4829 = vpop.f32.mrb[0].mxu0
    %v4830 = vadd.f32 %v4009, %v4829
    %v4831 = vpop.f32.mrb[0].mxu0
    %v4832 = vadd.f32 %v4013, %v4831
    %4833 = vdwg.mxu0
    %v4834 = vmax.f32 %v4697, 0.0
    %v4835 = vmax.f32 %v4699, 0.0
    %v4836 = vmax.f32 %v4740, 0.0
    %v4837 = vmax.f32 %v4742, 0.0
    %v4838 = vmax.f32 %v4783, 0.0
    %v4839 = vmax.f32 %v4785, 0.0
    %v4840 = vmax.f32 %v4826, 0.0
    %v4841 = vmax.f32 %v4828, 0.0
    %v4842 = vmax.f32 %v4701, 0.0
    %v4843 = vmax.f32 %v4703, 0.0
    %v4844 = vmax.f32 %v4744, 0.0
    %v4845 = vmax.f32 %v4746, 0.0
    %v4846 = vmax.f32 %v4787, 0.0
    %v4847 = vmax.f32 %v4789, 0.0
    %v4848 = vmax.f32 %v4830, 0.0
    %v4849 = vmax.f32 %v4832, 0.0
    %4850 = vst [vmem:[%s14] sm:$0xff] %v4834
    %4851 = vst [vmem:[%s14 + $0x8] sm:$0xff] %v4835
    %4852 = vst [vmem:[%s14 + $0x10] sm:$0xff] %v4836
    %4853 = vst [vmem:[%s14 + $0x18] sm:$0xff] %v4837
    %4854 = vst [vmem:[%s14 + $0x20] sm:$0xff] %v4838
    %4855 = vst [vmem:[%s14 + $0x28] sm:$0xff] %v4839
    %4856 = vst [vmem:[%s14 + $0x30] sm:$0xff] %v4840
    %4857 = vst [vmem:[%s14 + $0x38] sm:$0xff] %v4841
    %4858 = vst [vmem:[%s14 + $0x40] sm:$0xff] %v4842
    %4859 = vst [vmem:[%s14 + $0x48] sm:$0xff] %v4843
    %4860 = vst [vmem:[%s14 + $0x50] sm:$0xff] %v4844
    %4861 = vst [vmem:[%s14 + $0x58] sm:$0xff] %v4845
    %4862 = vst [vmem:[%s14 + $0x60] sm:$0xff] %v4846
    %4863 = vst [vmem:[%s14 + $0x68] sm:$0xff] %v4847
    %4864 = vst [vmem:[%s14 + $0x70] sm:$0xff] %v4848
    %4865 = vst [vmem:[%s14 + $0x78] sm:$0xff] %v4849
    %v4866 = vpack.c.bf16 %v1816, %v1814
    %v4867 = vpack.c.bf16 %v1817, %v1815
    %s4868 = scalar_lea.vmem [#allocation15], 3072
    %v4869 = vld [vmem:[%s4868] sm:$0xff]
    %v4870 = vld [vmem:[%s4868 + $0x8] sm:$0xff]
    %v4871 = vld [vmem:[%s4868 + $0x10] sm:$0xff]
    %v4872 = vld [vmem:[%s4868 + $0x18] sm:$0xff]
    %v4873 = vld [vmem:[%s4868 + $0x20] sm:$0xff]
    %v4874 = vld [vmem:[%s4868 + $0x28] sm:$0xff]
    %v4875 = vld [vmem:[%s4868 + $0x30] sm:$0xff]
    %v4876 = vld [vmem:[%s4868 + $0x38] sm:$0xff]
    %v4877 = vld [vmem:[%s4868 + $0x40] sm:$0xff]
    %v4878 = vld [vmem:[%s4868 + $0x48] sm:$0xff]
    %v4879 = vld [vmem:[%s4868 + $0x50] sm:$0xff]
    %v4880 = vld [vmem:[%s4868 + $0x58] sm:$0xff]
    %v4881 = vld [vmem:[%s4868 + $0x60] sm:$0xff]
    %v4882 = vld [vmem:[%s4868 + $0x68] sm:$0xff]
    %v4883 = vld [vmem:[%s4868 + $0x70] sm:$0xff]
    %v4884 = vld [vmem:[%s4868 + $0x78] sm:$0xff]
    %v4885 = vld [vmem:[%s4868 + $0x80] sm:$0xff]
    %v4886 = vld [vmem:[%s4868 + $0x88] sm:$0xff]
    %v4887 = vld [vmem:[%s4868 + $0x90] sm:$0xff]
    %v4888 = vld [vmem:[%s4868 + $0x98] sm:$0xff]
    %v4889 = vld [vmem:[%s4868 + $0xa0] sm:$0xff]
    %v4890 = vld [vmem:[%s4868 + $0xa8] sm:$0xff]
    %v4891 = vld [vmem:[%s4868 + $0xb0] sm:$0xff]
    %v4892 = vld [vmem:[%s4868 + $0xb8] sm:$0xff]
    %v4893 = vld [vmem:[%s4868 + $0xc0] sm:$0xff]
    %v4894 = vld [vmem:[%s4868 + $0xc8] sm:$0xff]
    %v4895 = vld [vmem:[%s4868 + $0xd0] sm:$0xff]
    %v4896 = vld [vmem:[%s4868 + $0xd8] sm:$0xff]
    %v4897 = vld [vmem:[%s4868 + $0xe0] sm:$0xff]
    %v4898 = vld [vmem:[%s4868 + $0xe8] sm:$0xff]
    %v4899 = vld [vmem:[%s4868 + $0xf0] sm:$0xff]
    %v4900 = vld [vmem:[%s4868 + $0xf8] sm:$0xff]
    %v4901 = vld [vmem:[%s4868 + $0x100] sm:$0xff]
    %v4902 = vld [vmem:[%s4868 + $0x108] sm:$0xff]
    %v4903 = vld [vmem:[%s4868 + $0x110] sm:$0xff]
    %v4904 = vld [vmem:[%s4868 + $0x118] sm:$0xff]
    %v4905 = vld [vmem:[%s4868 + $0x120] sm:$0xff]
    %v4906 = vld [vmem:[%s4868 + $0x128] sm:$0xff]
    %v4907 = vld [vmem:[%s4868 + $0x130] sm:$0xff]
    %v4908 = vld [vmem:[%s4868 + $0x138] sm:$0xff]
    %v4909 = vld [vmem:[%s4868 + $0x140] sm:$0xff]
    %v4910 = vld [vmem:[%s4868 + $0x148] sm:$0xff]
    %v4911 = vld [vmem:[%s4868 + $0x150] sm:$0xff]
    %v4912 = vld [vmem:[%s4868 + $0x158] sm:$0xff]
    %v4913 = vld [vmem:[%s4868 + $0x160] sm:$0xff]
    %v4914 = vld [vmem:[%s4868 + $0x168] sm:$0xff]
    %v4915 = vld [vmem:[%s4868 + $0x170] sm:$0xff]
    %v4916 = vld [vmem:[%s4868 + $0x178] sm:$0xff]
    %v4917 = vld [vmem:[%s4868 + $0x180] sm:$0xff]
    %v4918 = vld [vmem:[%s4868 + $0x188] sm:$0xff]
    %v4919 = vld [vmem:[%s4868 + $0x190] sm:$0xff]
    %v4920 = vld [vmem:[%s4868 + $0x198] sm:$0xff]
    %v4921 = vld [vmem:[%s4868 + $0x1a0] sm:$0xff]
    %v4922 = vld [vmem:[%s4868 + $0x1a8] sm:$0xff]
    %v4923 = vld [vmem:[%s4868 + $0x1b0] sm:$0xff]
    %v4924 = vld [vmem:[%s4868 + $0x1b8] sm:$0xff]
    %v4925 = vld [vmem:[%s4868 + $0x1c0] sm:$0xff]
    %v4926 = vld [vmem:[%s4868 + $0x1c8] sm:$0xff]
    %v4927 = vld [vmem:[%s4868 + $0x1d0] sm:$0xff]
    %v4928 = vld [vmem:[%s4868 + $0x1d8] sm:$0xff]
    %v4929 = vld [vmem:[%s4868 + $0x1e0] sm:$0xff]
    %v4930 = vld [vmem:[%s4868 + $0x1e8] sm:$0xff]
    %v4931 = vld [vmem:[%s4868 + $0x1f0] sm:$0xff]
    %v4932 = vld [vmem:[%s4868 + $0x1f8] sm:$0xff]
    %v4933 = vld [vmem:[%s4868 + $0x200] sm:$0xff]
    %v4934 = vld [vmem:[%s4868 + $0x208] sm:$0xff]
    %v4935 = vld [vmem:[%s4868 + $0x210] sm:$0xff]
    %v4936 = vld [vmem:[%s4868 + $0x218] sm:$0xff]
    %v4937 = vld [vmem:[%s4868 + $0x220] sm:$0xff]
    %v4938 = vld [vmem:[%s4868 + $0x228] sm:$0xff]
    %v4939 = vld [vmem:[%s4868 + $0x230] sm:$0xff]
    %v4940 = vld [vmem:[%s4868 + $0x238] sm:$0xff]
    %v4941 = vld [vmem:[%s4868 + $0x240] sm:$0xff]
    %v4942 = vld [vmem:[%s4868 + $0x248] sm:$0xff]
    %v4943 = vld [vmem:[%s4868 + $0x250] sm:$0xff]
    %v4944 = vld [vmem:[%s4868 + $0x258] sm:$0xff]
    %v4945 = vld [vmem:[%s4868 + $0x260] sm:$0xff]
    %v4946 = vld [vmem:[%s4868 + $0x268] sm:$0xff]
    %v4947 = vld [vmem:[%s4868 + $0x270] sm:$0xff]
    %v4948 = vld [vmem:[%s4868 + $0x278] sm:$0xff]
    %v4949 = vld [vmem:[%s4868 + $0x280] sm:$0xff]
    %v4950 = vld [vmem:[%s4868 + $0x288] sm:$0xff]
    %v4951 = vld [vmem:[%s4868 + $0x290] sm:$0xff]
    %v4952 = vld [vmem:[%s4868 + $0x298] sm:$0xff]
    %v4953 = vld [vmem:[%s4868 + $0x2a0] sm:$0xff]
    %v4954 = vld [vmem:[%s4868 + $0x2a8] sm:$0xff]
    %v4955 = vld [vmem:[%s4868 + $0x2b0] sm:$0xff]
    %v4956 = vld [vmem:[%s4868 + $0x2b8] sm:$0xff]
    %v4957 = vld [vmem:[%s4868 + $0x2c0] sm:$0xff]
    %v4958 = vld [vmem:[%s4868 + $0x2c8] sm:$0xff]
    %v4959 = vld [vmem:[%s4868 + $0x2d0] sm:$0xff]
    %v4960 = vld [vmem:[%s4868 + $0x2d8] sm:$0xff]
    %v4961 = vld [vmem:[%s4868 + $0x2e0] sm:$0xff]
    %v4962 = vld [vmem:[%s4868 + $0x2e8] sm:$0xff]
    %v4963 = vld [vmem:[%s4868 + $0x2f0] sm:$0xff]
    %v4964 = vld [vmem:[%s4868 + $0x2f8] sm:$0xff]
    %v4965 = vld [vmem:[%s4868 + $0x300] sm:$0xff]
    %v4966 = vld [vmem:[%s4868 + $0x308] sm:$0xff]
    %v4967 = vld [vmem:[%s4868 + $0x310] sm:$0xff]
    %v4968 = vld [vmem:[%s4868 + $0x318] sm:$0xff]
    %v4969 = vld [vmem:[%s4868 + $0x320] sm:$0xff]
    %v4970 = vld [vmem:[%s4868 + $0x328] sm:$0xff]
    %v4971 = vld [vmem:[%s4868 + $0x330] sm:$0xff]
    %v4972 = vld [vmem:[%s4868 + $0x338] sm:$0xff]
    %v4973 = vld [vmem:[%s4868 + $0x340] sm:$0xff]
    %v4974 = vld [vmem:[%s4868 + $0x348] sm:$0xff]
    %v4975 = vld [vmem:[%s4868 + $0x350] sm:$0xff]
    %v4976 = vld [vmem:[%s4868 + $0x358] sm:$0xff]
    %v4977 = vld [vmem:[%s4868 + $0x360] sm:$0xff]
    %v4978 = vld [vmem:[%s4868 + $0x368] sm:$0xff]
    %v4979 = vld [vmem:[%s4868 + $0x370] sm:$0xff]
    %v4980 = vld [vmem:[%s4868 + $0x378] sm:$0xff]
    %v4981 = vld [vmem:[%s4868 + $0x380] sm:$0xff]
    %v4982 = vld [vmem:[%s4868 + $0x388] sm:$0xff]
    %v4983 = vld [vmem:[%s4868 + $0x390] sm:$0xff]
    %v4984 = vld [vmem:[%s4868 + $0x398] sm:$0xff]
    %v4985 = vld [vmem:[%s4868 + $0x3a0] sm:$0xff]
    %v4986 = vld [vmem:[%s4868 + $0x3a8] sm:$0xff]
    %v4987 = vld [vmem:[%s4868 + $0x3b0] sm:$0xff]
    %v4988 = vld [vmem:[%s4868 + $0x3b8] sm:$0xff]
    %v4989 = vld [vmem:[%s4868 + $0x3c0] sm:$0xff]
    %v4990 = vld [vmem:[%s4868 + $0x3c8] sm:$0xff]
    %v4991 = vld [vmem:[%s4868 + $0x3d0] sm:$0xff]
    %v4992 = vld [vmem:[%s4868 + $0x3d8] sm:$0xff]
    %v4993 = vld [vmem:[%s4868 + $0x3e0] sm:$0xff]
    %v4994 = vld [vmem:[%s4868 + $0x3e8] sm:$0xff]
    %v4995 = vld [vmem:[%s4868 + $0x3f0] sm:$0xff]
    %v4996 = vld [vmem:[%s4868 + $0x3f8] sm:$0xff]
    %s4997 = scalar_lea.vmem [#allocation16], 24
    %v4998 = vld [vmem:[%s4997] sm:$0xff]
    %v5000 = vlaneseq
    %v5001 = vshrl.u32 %v5000, 7
    %v5002 = vsub.s32 0, %v5001
    %v5003 = vrot.slane %v4998, %v5002
    %v5004 = vlaneseq
    %v5005 = vshrl.u32 %v5004, 7
    %v5006 = vsub.s32 1, %v5005
    %v5007 = vrot.slane %v4998, %v5006
    %v5008 = vlaneseq
    %v5009 = vshrl.u32 %v5008, 7
    %v5010 = vsub.s32 2, %v5009
    %v5011 = vrot.slane %v4998, %v5010
    %v5012 = vlaneseq
    %v5013 = vshrl.u32 %v5012, 7
    %v5014 = vsub.s32 3, %v5013
    %v5015 = vrot.slane %v4998, %v5014
    %v5016 = vlaneseq
    %v5017 = vshrl.u32 %v5016, 7
    %v5018 = vsub.s32 4, %v5017
    %v5019 = vrot.slane %v4998, %v5018
    %v5020 = vlaneseq
    %v5021 = vshrl.u32 %v5020, 7
    %v5022 = vsub.s32 5, %v5021
    %v5023 = vrot.slane %v4998, %v5022
    %v5024 = vlaneseq
    %v5025 = vshrl.u32 %v5024, 7
    %v5026 = vsub.s32 6, %v5025
    %v5027 = vrot.slane %v4998, %v5026
    %v5028 = vlaneseq
    %v5029 = vshrl.u32 %v5028, 7
    %v5030 = vsub.s32 7, %v5029
    %v5031 = vrot.slane %v4998, %v5030
    %v5168 = vunpack.c.l.b16 %v4869
    %v5169 = vunpack.c.h.b16 %v4869
    %v5170 = vunpack.c.l.b16 %v4870
    %v5171 = vunpack.c.h.b16 %v4870
    %v5172 = vunpack.c.l.b16 %v4871
    %v5173 = vunpack.c.h.b16 %v4871
    %v5174 = vunpack.c.l.b16 %v4872
    %v5175 = vunpack.c.h.b16 %v4872
    %v5176 = vunpack.c.l.b16 %v4873
    %v5177 = vunpack.c.h.b16 %v4873
    %v5178 = vunpack.c.l.b16 %v4874
    %v5179 = vunpack.c.h.b16 %v4874
    %v5180 = vunpack.c.l.b16 %v4875
    %v5181 = vunpack.c.h.b16 %v4875
    %v5182 = vunpack.c.l.b16 %v4876
    %v5183 = vunpack.c.h.b16 %v4876
    %v5184 = vunpack.c.l.b16 %v4877
    %v5185 = vunpack.c.h.b16 %v4877
    %v5186 = vunpack.c.l.b16 %v4878
    %v5187 = vunpack.c.h.b16 %v4878
    %v5188 = vunpack.c.l.b16 %v4879
    %v5189 = vunpack.c.h.b16 %v4879
    %v5190 = vunpack.c.l.b16 %v4880
    %v5191 = vunpack.c.h.b16 %v4880
    %v5192 = vunpack.c.l.b16 %v4881
    %v5193 = vunpack.c.h.b16 %v4881
    %v5194 = vunpack.c.l.b16 %v4882
    %v5195 = vunpack.c.h.b16 %v4882
    %v5196 = vunpack.c.l.b16 %v4883
    %v5197 = vunpack.c.h.b16 %v4883
    %v5198 = vunpack.c.l.b16 %v4884
    %v5199 = vunpack.c.h.b16 %v4884
    %v5200 = vunpack.c.l.b16 %v4885
    %v5201 = vunpack.c.h.b16 %v4885
    %v5202 = vunpack.c.l.b16 %v4886
    %v5203 = vunpack.c.h.b16 %v4886
    %v5204 = vunpack.c.l.b16 %v4887
    %v5205 = vunpack.c.h.b16 %v4887
    %v5206 = vunpack.c.l.b16 %v4888
    %v5207 = vunpack.c.h.b16 %v4888
    %v5208 = vunpack.c.l.b16 %v4889
    %v5209 = vunpack.c.h.b16 %v4889
    %v5210 = vunpack.c.l.b16 %v4890
    %v5211 = vunpack.c.h.b16 %v4890
    %v5212 = vunpack.c.l.b16 %v4891
    %v5213 = vunpack.c.h.b16 %v4891
    %v5214 = vunpack.c.l.b16 %v4892
    %v5215 = vunpack.c.h.b16 %v4892
    %v5216 = vunpack.c.l.b16 %v4893
    %v5217 = vunpack.c.h.b16 %v4893
    %v5218 = vunpack.c.l.b16 %v4894
    %v5219 = vunpack.c.h.b16 %v4894
    %v5220 = vunpack.c.l.b16 %v4895
    %v5221 = vunpack.c.h.b16 %v4895
    %v5222 = vunpack.c.l.b16 %v4896
    %v5223 = vunpack.c.h.b16 %v4896
    %v5224 = vunpack.c.l.b16 %v4897
    %v5225 = vunpack.c.h.b16 %v4897
    %v5226 = vunpack.c.l.b16 %v4898
    %v5227 = vunpack.c.h.b16 %v4898
    %v5228 = vunpack.c.l.b16 %v4899
    %v5229 = vunpack.c.h.b16 %v4899
    %v5230 = vunpack.c.l.b16 %v4900
    %v5231 = vunpack.c.h.b16 %v4900
    %v5232 = vunpack.c.l.b16 %v4901
    %v5233 = vunpack.c.h.b16 %v4901
    %v5234 = vunpack.c.l.b16 %v4902
    %v5235 = vunpack.c.h.b16 %v4902
    %v5236 = vunpack.c.l.b16 %v4903
    %v5237 = vunpack.c.h.b16 %v4903
    %v5238 = vunpack.c.l.b16 %v4904
    %v5239 = vunpack.c.h.b16 %v4904
    %v5240 = vunpack.c.l.b16 %v4905
    %v5241 = vunpack.c.h.b16 %v4905
    %v5242 = vunpack.c.l.b16 %v4906
    %v5243 = vunpack.c.h.b16 %v4906
    %v5244 = vunpack.c.l.b16 %v4907
    %v5245 = vunpack.c.h.b16 %v4907
    %v5246 = vunpack.c.l.b16 %v4908
    %v5247 = vunpack.c.h.b16 %v4908
    %v5248 = vunpack.c.l.b16 %v4909
    %v5249 = vunpack.c.h.b16 %v4909
    %v5250 = vunpack.c.l.b16 %v4910
    %v5251 = vunpack.c.h.b16 %v4910
    %v5252 = vunpack.c.l.b16 %v4911
    %v5253 = vunpack.c.h.b16 %v4911
    %v5254 = vunpack.c.l.b16 %v4912
    %v5255 = vunpack.c.h.b16 %v4912
    %v5256 = vunpack.c.l.b16 %v4913
    %v5257 = vunpack.c.h.b16 %v4913
    %v5258 = vunpack.c.l.b16 %v4914
    %v5259 = vunpack.c.h.b16 %v4914
    %v5260 = vunpack.c.l.b16 %v4915
    %v5261 = vunpack.c.h.b16 %v4915
    %v5262 = vunpack.c.l.b16 %v4916
    %v5263 = vunpack.c.h.b16 %v4916
    %v5264 = vunpack.c.l.b16 %v4917
    %v5265 = vunpack.c.h.b16 %v4917
    %v5266 = vunpack.c.l.b16 %v4918
    %v5267 = vunpack.c.h.b16 %v4918
    %v5268 = vunpack.c.l.b16 %v4919
    %v5269 = vunpack.c.h.b16 %v4919
    %v5270 = vunpack.c.l.b16 %v4920
    %v5271 = vunpack.c.h.b16 %v4920
    %v5272 = vunpack.c.l.b16 %v4921
    %v5273 = vunpack.c.h.b16 %v4921
    %v5274 = vunpack.c.l.b16 %v4922
    %v5275 = vunpack.c.h.b16 %v4922
    %v5276 = vunpack.c.l.b16 %v4923
    %v5277 = vunpack.c.h.b16 %v4923
    %v5278 = vunpack.c.l.b16 %v4924
    %v5279 = vunpack.c.h.b16 %v4924
    %v5280 = vunpack.c.l.b16 %v4925
    %v5281 = vunpack.c.h.b16 %v4925
    %v5282 = vunpack.c.l.b16 %v4926
    %v5283 = vunpack.c.h.b16 %v4926
    %v5284 = vunpack.c.l.b16 %v4927
    %v5285 = vunpack.c.h.b16 %v4927
    %v5286 = vunpack.c.l.b16 %v4928
    %v5287 = vunpack.c.h.b16 %v4928
    %v5288 = vunpack.c.l.b16 %v4929
    %v5289 = vunpack.c.h.b16 %v4929
    %v5290 = vunpack.c.l.b16 %v4930
    %v5291 = vunpack.c.h.b16 %v4930
    %v5292 = vunpack.c.l.b16 %v4931
    %v5293 = vunpack.c.h.b16 %v4931
    %v5294 = vunpack.c.l.b16 %v4932
    %v5295 = vunpack.c.h.b16 %v4932
    %v5296 = vunpack.c.l.b16 %v4933
    %v5297 = vunpack.c.h.b16 %v4933
    %v5298 = vunpack.c.l.b16 %v4934
    %v5299 = vunpack.c.h.b16 %v4934
    %v5300 = vunpack.c.l.b16 %v4935
    %v5301 = vunpack.c.h.b16 %v4935
    %v5302 = vunpack.c.l.b16 %v4936
    %v5303 = vunpack.c.h.b16 %v4936
    %v5304 = vunpack.c.l.b16 %v4937
    %v5305 = vunpack.c.h.b16 %v4937
    %v5306 = vunpack.c.l.b16 %v4938
    %v5307 = vunpack.c.h.b16 %v4938
    %v5308 = vunpack.c.l.b16 %v4939
    %v5309 = vunpack.c.h.b16 %v4939
    %v5310 = vunpack.c.l.b16 %v4940
    %v5311 = vunpack.c.h.b16 %v4940
    %v5312 = vunpack.c.l.b16 %v4941
    %v5313 = vunpack.c.h.b16 %v4941
    %v5314 = vunpack.c.l.b16 %v4942
    %v5315 = vunpack.c.h.b16 %v4942
    %v5316 = vunpack.c.l.b16 %v4943
    %v5317 = vunpack.c.h.b16 %v4943
    %v5318 = vunpack.c.l.b16 %v4944
    %v5319 = vunpack.c.h.b16 %v4944
    %v5320 = vunpack.c.l.b16 %v4945
    %v5321 = vunpack.c.h.b16 %v4945
    %v5322 = vunpack.c.l.b16 %v4946
    %v5323 = vunpack.c.h.b16 %v4946
    %v5324 = vunpack.c.l.b16 %v4947
    %v5325 = vunpack.c.h.b16 %v4947
    %v5326 = vunpack.c.l.b16 %v4948
    %v5327 = vunpack.c.h.b16 %v4948
    %v5328 = vunpack.c.l.b16 %v4949
    %v5329 = vunpack.c.h.b16 %v4949
    %v5330 = vunpack.c.l.b16 %v4950
    %v5331 = vunpack.c.h.b16 %v4950
    %v5332 = vunpack.c.l.b16 %v4951
    %v5333 = vunpack.c.h.b16 %v4951
    %v5334 = vunpack.c.l.b16 %v4952
    %v5335 = vunpack.c.h.b16 %v4952
    %v5336 = vunpack.c.l.b16 %v4953
    %v5337 = vunpack.c.h.b16 %v4953
    %v5338 = vunpack.c.l.b16 %v4954
    %v5339 = vunpack.c.h.b16 %v4954
    %v5340 = vunpack.c.l.b16 %v4955
    %v5341 = vunpack.c.h.b16 %v4955
    %v5342 = vunpack.c.l.b16 %v4956
    %v5343 = vunpack.c.h.b16 %v4956
    %v5344 = vunpack.c.l.b16 %v4957
    %v5345 = vunpack.c.h.b16 %v4957
    %v5346 = vunpack.c.l.b16 %v4958
    %v5347 = vunpack.c.h.b16 %v4958
    %v5348 = vunpack.c.l.b16 %v4959
    %v5349 = vunpack.c.h.b16 %v4959
    %v5350 = vunpack.c.l.b16 %v4960
    %v5351 = vunpack.c.h.b16 %v4960
    %v5352 = vunpack.c.l.b16 %v4961
    %v5353 = vunpack.c.h.b16 %v4961
    %v5354 = vunpack.c.l.b16 %v4962
    %v5355 = vunpack.c.h.b16 %v4962
    %v5356 = vunpack.c.l.b16 %v4963
    %v5357 = vunpack.c.h.b16 %v4963
    %v5358 = vunpack.c.l.b16 %v4964
    %v5359 = vunpack.c.h.b16 %v4964
    %v5360 = vunpack.c.l.b16 %v4965
    %v5361 = vunpack.c.h.b16 %v4965
    %v5362 = vunpack.c.l.b16 %v4966
    %v5363 = vunpack.c.h.b16 %v4966
    %v5364 = vunpack.c.l.b16 %v4967
    %v5365 = vunpack.c.h.b16 %v4967
    %v5366 = vunpack.c.l.b16 %v4968
    %v5367 = vunpack.c.h.b16 %v4968
    %v5368 = vunpack.c.l.b16 %v4969
    %v5369 = vunpack.c.h.b16 %v4969
    %v5370 = vunpack.c.l.b16 %v4970
    %v5371 = vunpack.c.h.b16 %v4970
    %v5372 = vunpack.c.l.b16 %v4971
    %v5373 = vunpack.c.h.b16 %v4971
    %v5374 = vunpack.c.l.b16 %v4972
    %v5375 = vunpack.c.h.b16 %v4972
    %v5376 = vunpack.c.l.b16 %v4973
    %v5377 = vunpack.c.h.b16 %v4973
    %v5378 = vunpack.c.l.b16 %v4974
    %v5379 = vunpack.c.h.b16 %v4974
    %v5380 = vunpack.c.l.b16 %v4975
    %v5381 = vunpack.c.h.b16 %v4975
    %v5382 = vunpack.c.l.b16 %v4976
    %v5383 = vunpack.c.h.b16 %v4976
    %v5384 = vunpack.c.l.b16 %v4977
    %v5385 = vunpack.c.h.b16 %v4977
    %v5386 = vunpack.c.l.b16 %v4978
    %v5387 = vunpack.c.h.b16 %v4978
    %v5388 = vunpack.c.l.b16 %v4979
    %v5389 = vunpack.c.h.b16 %v4979
    %v5390 = vunpack.c.l.b16 %v4980
    %v5391 = vunpack.c.h.b16 %v4980
    %v5392 = vunpack.c.l.b16 %v4981
    %v5393 = vunpack.c.h.b16 %v4981
    %v5394 = vunpack.c.l.b16 %v4982
    %v5395 = vunpack.c.h.b16 %v4982
    %v5396 = vunpack.c.l.b16 %v4983
    %v5397 = vunpack.c.h.b16 %v4983
    %v5398 = vunpack.c.l.b16 %v4984
    %v5399 = vunpack.c.h.b16 %v4984
    %v5400 = vunpack.c.l.b16 %v4985
    %v5401 = vunpack.c.h.b16 %v4985
    %v5402 = vunpack.c.l.b16 %v4986
    %v5403 = vunpack.c.h.b16 %v4986
    %v5404 = vunpack.c.l.b16 %v4987
    %v5405 = vunpack.c.h.b16 %v4987
    %v5406 = vunpack.c.l.b16 %v4988
    %v5407 = vunpack.c.h.b16 %v4988
    %v5408 = vunpack.c.l.b16 %v4989
    %v5409 = vunpack.c.h.b16 %v4989
    %v5410 = vunpack.c.l.b16 %v4990
    %v5411 = vunpack.c.h.b16 %v4990
    %v5412 = vunpack.c.l.b16 %v4991
    %v5413 = vunpack.c.h.b16 %v4991
    %v5414 = vunpack.c.l.b16 %v4992
    %v5415 = vunpack.c.h.b16 %v4992
    %v5416 = vunpack.c.l.b16 %v4993
    %v5417 = vunpack.c.h.b16 %v4993
    %v5418 = vunpack.c.l.b16 %v4994
    %v5419 = vunpack.c.h.b16 %v4994
    %v5420 = vunpack.c.l.b16 %v4995
    %v5421 = vunpack.c.h.b16 %v4995
    %v5422 = vunpack.c.l.b16 %v4996
    %v5423 = vunpack.c.h.b16 %v4996
    %v5424 = vpack.c.b16 %v5176, %v5168
    %v5425 = vpack.c.b16 %v5177, %v5169
    %v5426 = vpack.c.b16 %v5178, %v5170
    %v5427 = vpack.c.b16 %v5179, %v5171
    %v5428 = vpack.c.b16 %v5180, %v5172
    %v5429 = vpack.c.b16 %v5181, %v5173
    %v5430 = vpack.c.b16 %v5182, %v5174
    %v5431 = vpack.c.b16 %v5183, %v5175
    %v5432 = vpack.c.b16 %v5192, %v5184
    %v5433 = vpack.c.b16 %v5193, %v5185
    %v5434 = vpack.c.b16 %v5194, %v5186
    %v5435 = vpack.c.b16 %v5195, %v5187
    %v5436 = vpack.c.b16 %v5196, %v5188
    %v5437 = vpack.c.b16 %v5197, %v5189
    %v5438 = vpack.c.b16 %v5198, %v5190
    %v5439 = vpack.c.b16 %v5199, %v5191
    %v5440 = vpack.c.b16 %v5208, %v5200
    %v5441 = vpack.c.b16 %v5209, %v5201
    %v5442 = vpack.c.b16 %v5210, %v5202
    %v5443 = vpack.c.b16 %v5211, %v5203
    %v5444 = vpack.c.b16 %v5212, %v5204
    %v5445 = vpack.c.b16 %v5213, %v5205
    %v5446 = vpack.c.b16 %v5214, %v5206
    %v5447 = vpack.c.b16 %v5215, %v5207
    %v5448 = vpack.c.b16 %v5224, %v5216
    %v5449 = vpack.c.b16 %v5225, %v5217
    %v5450 = vpack.c.b16 %v5226, %v5218
    %v5451 = vpack.c.b16 %v5227, %v5219
    %v5452 = vpack.c.b16 %v5228, %v5220
    %v5453 = vpack.c.b16 %v5229, %v5221
    %v5454 = vpack.c.b16 %v5230, %v5222
    %v5455 = vpack.c.b16 %v5231, %v5223
    %v5456 = vpack.c.b16 %v5240, %v5232
    %v5457 = vpack.c.b16 %v5241, %v5233
    %v5458 = vpack.c.b16 %v5242, %v5234
    %v5459 = vpack.c.b16 %v5243, %v5235
    %v5460 = vpack.c.b16 %v5244, %v5236
    %v5461 = vpack.c.b16 %v5245, %v5237
    %v5462 = vpack.c.b16 %v5246, %v5238
    %v5463 = vpack.c.b16 %v5247, %v5239
    %v5464 = vpack.c.b16 %v5256, %v5248
    %v5465 = vpack.c.b16 %v5257, %v5249
    %v5466 = vpack.c.b16 %v5258, %v5250
    %v5467 = vpack.c.b16 %v5259, %v5251
    %v5468 = vpack.c.b16 %v5260, %v5252
    %v5469 = vpack.c.b16 %v5261, %v5253
    %v5470 = vpack.c.b16 %v5262, %v5254
    %v5471 = vpack.c.b16 %v5263, %v5255
    %v5472 = vpack.c.b16 %v5272, %v5264
    %v5473 = vpack.c.b16 %v5273, %v5265
    %v5474 = vpack.c.b16 %v5274, %v5266
    %v5475 = vpack.c.b16 %v5275, %v5267
    %v5476 = vpack.c.b16 %v5276, %v5268
    %v5477 = vpack.c.b16 %v5277, %v5269
    %v5478 = vpack.c.b16 %v5278, %v5270
    %v5479 = vpack.c.b16 %v5279, %v5271
    %v5480 = vpack.c.b16 %v5288, %v5280
    %v5481 = vpack.c.b16 %v5289, %v5281
    %v5482 = vpack.c.b16 %v5290, %v5282
    %v5483 = vpack.c.b16 %v5291, %v5283
    %v5484 = vpack.c.b16 %v5292, %v5284
    %v5485 = vpack.c.b16 %v5293, %v5285
    %v5486 = vpack.c.b16 %v5294, %v5286
    %v5487 = vpack.c.b16 %v5295, %v5287
    %v5488 = vpack.c.b16 %v5304, %v5296
    %v5489 = vpack.c.b16 %v5305, %v5297
    %v5490 = vpack.c.b16 %v5306, %v5298
    %v5491 = vpack.c.b16 %v5307, %v5299
    %v5492 = vpack.c.b16 %v5308, %v5300
    %v5493 = vpack.c.b16 %v5309, %v5301
    %v5494 = vpack.c.b16 %v5310, %v5302
    %v5495 = vpack.c.b16 %v5311, %v5303
    %v5496 = vpack.c.b16 %v5320, %v5312
    %v5497 = vpack.c.b16 %v5321, %v5313
    %v5498 = vpack.c.b16 %v5322, %v5314
    %v5499 = vpack.c.b16 %v5323, %v5315
    %v5500 = vpack.c.b16 %v5324, %v5316
    %v5501 = vpack.c.b16 %v5325, %v5317
    %v5502 = vpack.c.b16 %v5326, %v5318
    %v5503 = vpack.c.b16 %v5327, %v5319
    %v5504 = vpack.c.b16 %v5336, %v5328
    %v5505 = vpack.c.b16 %v5337, %v5329
    %v5506 = vpack.c.b16 %v5338, %v5330
    %v5507 = vpack.c.b16 %v5339, %v5331
    %v5508 = vpack.c.b16 %v5340, %v5332
    %v5509 = vpack.c.b16 %v5341, %v5333
    %v5510 = vpack.c.b16 %v5342, %v5334
    %v5511 = vpack.c.b16 %v5343, %v5335
    %v5512 = vpack.c.b16 %v5352, %v5344
    %v5513 = vpack.c.b16 %v5353, %v5345
    %v5514 = vpack.c.b16 %v5354, %v5346
    %v5515 = vpack.c.b16 %v5355, %v5347
    %v5516 = vpack.c.b16 %v5356, %v5348
    %v5517 = vpack.c.b16 %v5357, %v5349
    %v5518 = vpack.c.b16 %v5358, %v5350
    %v5519 = vpack.c.b16 %v5359, %v5351
    %v5520 = vpack.c.b16 %v5368, %v5360
    %v5521 = vpack.c.b16 %v5369, %v5361
    %v5522 = vpack.c.b16 %v5370, %v5362
    %v5523 = vpack.c.b16 %v5371, %v5363
    %v5524 = vpack.c.b16 %v5372, %v5364
    %v5525 = vpack.c.b16 %v5373, %v5365
    %v5526 = vpack.c.b16 %v5374, %v5366
    %v5527 = vpack.c.b16 %v5375, %v5367
    %v5528 = vpack.c.b16 %v5384, %v5376
    %v5529 = vpack.c.b16 %v5385, %v5377
    %v5530 = vpack.c.b16 %v5386, %v5378
    %v5531 = vpack.c.b16 %v5387, %v5379
    %v5532 = vpack.c.b16 %v5388, %v5380
    %v5533 = vpack.c.b16 %v5389, %v5381
    %v5534 = vpack.c.b16 %v5390, %v5382
    %v5535 = vpack.c.b16 %v5391, %v5383
    %v5536 = vpack.c.b16 %v5400, %v5392
    %v5537 = vpack.c.b16 %v5401, %v5393
    %v5538 = vpack.c.b16 %v5402, %v5394
    %v5539 = vpack.c.b16 %v5403, %v5395
    %v5540 = vpack.c.b16 %v5404, %v5396
    %v5541 = vpack.c.b16 %v5405, %v5397
    %v5542 = vpack.c.b16 %v5406, %v5398
    %v5543 = vpack.c.b16 %v5407, %v5399
    %v5544 = vpack.c.b16 %v5416, %v5408
    %v5545 = vpack.c.b16 %v5417, %v5409
    %v5546 = vpack.c.b16 %v5418, %v5410
    %v5547 = vpack.c.b16 %v5419, %v5411
    %v5548 = vpack.c.b16 %v5420, %v5412
    %v5549 = vpack.c.b16 %v5421, %v5413
    %v5550 = vpack.c.b16 %v5422, %v5414
    %v5551 = vpack.c.b16 %v5423, %v5415
    %5680 = vmatprep.subr.bf16.mxu0 %v5425
    %5681 = vmatpush1.bf16.msra.mxu0 %v5424
    %5682 = vmatprep.subr.bf16.mxu0 %v5433
    %5683 = vmatpush1.bf16.msra.mxu0 %v5432
    %5684 = vmatprep.subr.bf16.mxu0 %v5441
    %5685 = vmatpush1.bf16.msra.mxu0 %v5440
    %5686 = vmatprep.subr.bf16.mxu0 %v5449
    %5687 = vmatpush1.bf16.msra.mxu0 %v5448
    %5688 = vmatprep.subr.bf16.mxu0 %v5457
    %5689 = vmatpush1.bf16.msra.mxu0 %v5456
    %5690 = vmatprep.subr.bf16.mxu0 %v5465
    %5691 = vmatpush1.bf16.msra.mxu0 %v5464
    %5692 = vmatprep.subr.bf16.mxu0 %v5473
    %5693 = vmatpush1.bf16.msra.mxu0 %v5472
    %5694 = vmatprep.subr.bf16.mxu0 %v5481
    %5695 = vmatpush1.bf16.msra.mxu0 %v5480
    %5696 = vmatprep.subr.bf16.mxu0 %v5489
    %5697 = vmatpush1.bf16.msra.mxu0 %v5488
    %5698 = vmatprep.subr.bf16.mxu0 %v5497
    %5699 = vmatpush1.bf16.msra.mxu0 %v5496
    %5700 = vmatprep.subr.bf16.mxu0 %v5505
    %5701 = vmatpush1.bf16.msra.mxu0 %v5504
    %5702 = vmatprep.subr.bf16.mxu0 %v5513
    %5703 = vmatpush1.bf16.msra.mxu0 %v5512
    %5704 = vmatprep.subr.bf16.mxu0 %v5521
    %5705 = vmatpush1.bf16.msra.mxu0 %v5520
    %5706 = vmatprep.subr.bf16.mxu0 %v5529
    %5707 = vmatpush1.bf16.msra.mxu0 %v5528
    %5708 = vmatprep.subr.bf16.mxu0 %v5537
    %5709 = vmatpush1.bf16.msra.mxu0 %v5536
    %5710 = vmatprep.subr.bf16.mxu0 %v5545
    %5711 = vmatpush1.bf16.msra.mxu0 %v5544
    %5712 = vmatprep.mubr.bf16.mxu0 %v4867
    %5713 = vmatmul.mubr.bf16.gmra.mrb[0].mxu0 %v4866
    %v5714 = vpop.f32.mrb[0].mxu0
    %v5715 = vadd.f32 %v5003, %v5714
    %v5716 = vpop.f32.mrb[0].mxu0
    %v5717 = vadd.f32 %v5007, %v5716
    %v5718 = vpop.f32.mrb[0].mxu0
    %v5719 = vadd.f32 %v5003, %v5718
    %v5720 = vpop.f32.mrb[0].mxu0
    %v5721 = vadd.f32 %v5007, %v5720
    %5722 = vdwg.mxu0
    %5723 = vmatprep.subr.bf16.mxu0 %v5427
    %5724 = vmatpush1.bf16.msra.mxu0 %v5426
    %5725 = vmatprep.subr.bf16.mxu0 %v5435
    %5726 = vmatpush1.bf16.msra.mxu0 %v5434
    %5727 = vmatprep.subr.bf16.mxu0 %v5443
    %5728 = vmatpush1.bf16.msra.mxu0 %v5442
    %5729 = vmatprep.subr.bf16.mxu0 %v5451
    %5730 = vmatpush1.bf16.msra.mxu0 %v5450
    %5731 = vmatprep.subr.bf16.mxu0 %v5459
    %5732 = vmatpush1.bf16.msra.mxu0 %v5458
    %5733 = vmatprep.subr.bf16.mxu0 %v5467
    %5734 = vmatpush1.bf16.msra.mxu0 %v5466
    %5735 = vmatprep.subr.bf16.mxu0 %v5475
    %5736 = vmatpush1.bf16.msra.mxu0 %v5474
    %5737 = vmatprep.subr.bf16.mxu0 %v5483
    %5738 = vmatpush1.bf16.msra.mxu0 %v5482
    %5739 = vmatprep.subr.bf16.mxu0 %v5491
    %5740 = vmatpush1.bf16.msra.mxu0 %v5490
    %5741 = vmatprep.subr.bf16.mxu0 %v5499
    %5742 = vmatpush1.bf16.msra.mxu0 %v5498
    %5743 = vmatprep.subr.bf16.mxu0 %v5507
    %5744 = vmatpush1.bf16.msra.mxu0 %v5506
    %5745 = vmatprep.subr.bf16.mxu0 %v5515
    %5746 = vmatpush1.bf16.msra.mxu0 %v5514
    %5747 = vmatprep.subr.bf16.mxu0 %v5523
    %5748 = vmatpush1.bf16.msra.mxu0 %v5522
    %5749 = vmatprep.subr.bf16.mxu0 %v5531
    %5750 = vmatpush1.bf16.msra.mxu0 %v5530
    %5751 = vmatprep.subr.bf16.mxu0 %v5539
    %5752 = vmatpush1.bf16.msra.mxu0 %v5538
    %5753 = vmatprep.subr.bf16.mxu0 %v5547
    %5754 = vmatpush1.bf16.msra.mxu0 %v5546
    %5755 = vmatprep.mubr.bf16.mxu0 %v4867
    %5756 = vmatmul.mubr.bf16.gmra.mrb[0].mxu0 %v4866
    %v5757 = vpop.f32.mrb[0].mxu0
    %v5758 = vadd.f32 %v5011, %v5757
    %v5759 = vpop.f32.mrb[0].mxu0
    %v5760 = vadd.f32 %v5015, %v5759
    %v5761 = vpop.f32.mrb[0].mxu0
    %v5762 = vadd.f32 %v5011, %v5761
    %v5763 = vpop.f32.mrb[0].mxu0
    %v5764 = vadd.f32 %v5015, %v5763
    %5765 = vdwg.mxu0
    %5766 = vmatprep.subr.bf16.mxu0 %v5429
    %5767 = vmatpush1.bf16.msra.mxu0 %v5428
    %5768 = vmatprep.subr.bf16.mxu0 %v5437
    %5769 = vmatpush1.bf16.msra.mxu0 %v5436
    %5770 = vmatprep.subr.bf16.mxu0 %v5445
    %5771 = vmatpush1.bf16.msra.mxu0 %v5444
    %5772 = vmatprep.subr.bf16.mxu0 %v5453
    %5773 = vmatpush1.bf16.msra.mxu0 %v5452
    %5774 = vmatprep.subr.bf16.mxu0 %v5461
    %5775 = vmatpush1.bf16.msra.mxu0 %v5460
    %5776 = vmatprep.subr.bf16.mxu0 %v5469
    %5777 = vmatpush1.bf16.msra.mxu0 %v5468
    %5778 = vmatprep.subr.bf16.mxu0 %v5477
    %5779 = vmatpush1.bf16.msra.mxu0 %v5476
    %5780 = vmatprep.subr.bf16.mxu0 %v5485
    %5781 = vmatpush1.bf16.msra.mxu0 %v5484
    %5782 = vmatprep.subr.bf16.mxu0 %v5493
    %5783 = vmatpush1.bf16.msra.mxu0 %v5492
    %5784 = vmatprep.subr.bf16.mxu0 %v5501
    %5785 = vmatpush1.bf16.msra.mxu0 %v5500
    %5786 = vmatprep.subr.bf16.mxu0 %v5509
    %5787 = vmatpush1.bf16.msra.mxu0 %v5508
    %5788 = vmatprep.subr.bf16.mxu0 %v5517
    %5789 = vmatpush1.bf16.msra.mxu0 %v5516
    %5790 = vmatprep.subr.bf16.mxu0 %v5525
    %5791 = vmatpush1.bf16.msra.mxu0 %v5524
    %5792 = vmatprep.subr.bf16.mxu0 %v5533
    %5793 = vmatpush1.bf16.msra.mxu0 %v5532
    %5794 = vmatprep.subr.bf16.mxu0 %v5541
    %5795 = vmatpush1.bf16.msra.mxu0 %v5540
    %5796 = vmatprep.subr.bf16.mxu0 %v5549
    %5797 = vmatpush1.bf16.msra.mxu0 %v5548
    %5798 = vmatprep.mubr.bf16.mxu0 %v4867
    %5799 = vmatmul.mubr.bf16.gmra.mrb[0].mxu0 %v4866
    %v5800 = vpop.f32.mrb[0].mxu0
    %v5801 = vadd.f32 %v5019, %v5800
    %v5802 = vpop.f32.mrb[0].mxu0
    %v5803 = vadd.f32 %v5023, %v5802
    %v5804 = vpop.f32.mrb[0].mxu0
    %v5805 = vadd.f32 %v5019, %v5804
    %v5806 = vpop.f32.mrb[0].mxu0
    %v5807 = vadd.f32 %v5023, %v5806
    %5808 = vdwg.mxu0
    %5809 = vmatprep.subr.bf16.mxu0 %v5431
    %5810 = vmatpush1.bf16.msra.mxu0 %v5430
    %5811 = vmatprep.subr.bf16.mxu0 %v5439
    %5812 = vmatpush1.bf16.msra.mxu0 %v5438
    %5813 = vmatprep.subr.bf16.mxu0 %v5447
    %5814 = vmatpush1.bf16.msra.mxu0 %v5446
    %5815 = vmatprep.subr.bf16.mxu0 %v5455
    %5816 = vmatpush1.bf16.msra.mxu0 %v5454
    %5817 = vmatprep.subr.bf16.mxu0 %v5463
    %5818 = vmatpush1.bf16.msra.mxu0 %v5462
    %5819 = vmatprep.subr.bf16.mxu0 %v5471
    %5820 = vmatpush1.bf16.msra.mxu0 %v5470
    %5821 = vmatprep.subr.bf16.mxu0 %v5479
    %5822 = vmatpush1.bf16.msra.mxu0 %v5478
    %5823 = vmatprep.subr.bf16.mxu0 %v5487
    %5824 = vmatpush1.bf16.msra.mxu0 %v5486
    %5825 = vmatprep.subr.bf16.mxu0 %v5495
    %5826 = vmatpush1.bf16.msra.mxu0 %v5494
    %5827 = vmatprep.subr.bf16.mxu0 %v5503
    %5828 = vmatpush1.bf16.msra.mxu0 %v5502
    %5829 = vmatprep.subr.bf16.mxu0 %v5511
    %5830 = vmatpush1.bf16.msra.mxu0 %v5510
    %5831 = vmatprep.subr.bf16.mxu0 %v5519
    %5832 = vmatpush1.bf16.msra.mxu0 %v5518
    %5833 = vmatprep.subr.bf16.mxu0 %v5527
    %5834 = vmatpush1.bf16.msra.mxu0 %v5526
    %5835 = vmatprep.subr.bf16.mxu0 %v5535
    %5836 = vmatpush1.bf16.msra.mxu0 %v5534
    %5837 = vmatprep.subr.bf16.mxu0 %v5543
    %5838 = vmatpush1.bf16.msra.mxu0 %v5542
    %5839 = vmatprep.subr.bf16.mxu0 %v5551
    %5840 = vmatpush1.bf16.msra.mxu0 %v5550
    %5841 = vmatprep.mubr.bf16.mxu0 %v4867
    %5842 = vmatmul.mubr.bf16.gmra.mrb[0].mxu0 %v4866
    %v5843 = vpop.f32.mrb[0].mxu0
    %v5844 = vadd.f32 %v5027, %v5843
    %v5845 = vpop.f32.mrb[0].mxu0
    %v5846 = vadd.f32 %v5031, %v5845
    %v5847 = vpop.f32.mrb[0].mxu0
    %v5848 = vadd.f32 %v5027, %v5847
    %v5849 = vpop.f32.mrb[0].mxu0
    %v5850 = vadd.f32 %v5031, %v5849
    %5851 = vdwg.mxu0
    %v5852 = vmax.f32 %v5715, 0.0
    %v5853 = vmax.f32 %v5717, 0.0
    %v5854 = vmax.f32 %v5758, 0.0
    %v5855 = vmax.f32 %v5760, 0.0
    %v5856 = vmax.f32 %v5801, 0.0
    %v5857 = vmax.f32 %v5803, 0.0
    %v5858 = vmax.f32 %v5844, 0.0
    %v5859 = vmax.f32 %v5846, 0.0
    %v5860 = vmax.f32 %v5719, 0.0
    %v5861 = vmax.f32 %v5721, 0.0
    %v5862 = vmax.f32 %v5762, 0.0
    %v5863 = vmax.f32 %v5764, 0.0
    %v5864 = vmax.f32 %v5805, 0.0
    %v5865 = vmax.f32 %v5807, 0.0
    %v5866 = vmax.f32 %v5848, 0.0
    %v5867 = vmax.f32 %v5850, 0.0
    %5868 = vst [vmem:[%s15] sm:$0xff] %v5852
    %5869 = vst [vmem:[%s15 + $0x8] sm:$0xff] %v5853
    %5870 = vst [vmem:[%s15 + $0x10] sm:$0xff] %v5854
    %5871 = vst [vmem:[%s15 + $0x18] sm:$0xff] %v5855
    %5872 = vst [vmem:[%s15 + $0x20] sm:$0xff] %v5856
    %5873 = vst [vmem:[%s15 + $0x28] sm:$0xff] %v5857
    %5874 = vst [vmem:[%s15 + $0x30] sm:$0xff] %v5858
    %5875 = vst [vmem:[%s15 + $0x38] sm:$0xff] %v5859
    %5876 = vst [vmem:[%s15 + $0x40] sm:$0xff] %v5860
    %5877 = vst [vmem:[%s15 + $0x48] sm:$0xff] %v5861
    %5878 = vst [vmem:[%s15 + $0x50] sm:$0xff] %v5862
    %5879 = vst [vmem:[%s15 + $0x58] sm:$0xff] %v5863
    %5880 = vst [vmem:[%s15 + $0x60] sm:$0xff] %v5864
    %5881 = vst [vmem:[%s15 + $0x68] sm:$0xff] %v5865
    %5882 = vst [vmem:[%s15 + $0x70] sm:$0xff] %v5866
    %5883 = vst [vmem:[%s15 + $0x78] sm:$0xff] %v5867
    // Predicated region
    $region90: #{_total_model_forward.1} parent=1 // pred_check
      _
    $region91: #{_total_model_forward.1} parent=1 // pred_check_branch
      %5885 = sbr.rel (0) target = $region93
    $region92: #{_total_model_forward.1} parent=1 // pred_region
      _
    $region93: #{_total_model_forward.1} parent=1 // pred_fallthru
      _
    // Predicated region
    $region94: #{_total_model_forward.1} parent=1 // pred_check
      _
    $region95: #{_total_model_forward.1} parent=1 // pred_check_branch
      %5887 = sbr.rel (0) target = $region97
    $region96: #{_total_model_forward.1} parent=1 // pred_region
      _
    $region97: #{_total_model_forward.1} parent=1 // pred_fallthru
      _
    // Predicated region
    $region98: #{_total_model_forward.1} parent=1 // pred_check
      _
    $region99: #{_total_model_forward.1} parent=1 // pred_check_branch
      %5889 = sbr.rel (0) target = $region101
    $region100: #{_total_model_forward.1} parent=1 // pred_region
      _
    $region101: #{_total_model_forward.1} parent=1 // pred_fallthru
      _
    // Predicated region
    $region102: #{_total_model_forward.1} parent=1 // pred_check
      _
    $region103: #{_total_model_forward.1} parent=1 // pred_check_branch
      %5891 = sbr.rel (0) target = $region105
    $region104: #{_total_model_forward.1} parent=1 // pred_region
      _
    $region105: #{_total_model_forward.1} parent=1 // pred_fallthru
      _
    // Predicated region
    $region106: #{_total_model_forward.1} parent=1 // pred_check
      _
    $region107: #{_total_model_forward.1} parent=1 // pred_check_branch
      %5893 = sbr.rel (0) target = $region109
    $region108: #{_total_model_forward.1} parent=1 // pred_region
      _
    $region109: #{_total_model_forward.1} parent=1 // pred_fallthru
      _
    // Predicated region
    $region110: #{_total_model_forward.1} parent=1 // pred_check
      _
    $region111: #{_total_model_forward.1} parent=1 // pred_check_branch
      %5895 = sbr.rel (0) target = $region113
    $region112: #{_total_model_forward.1} parent=1 // pred_region
      _
    $region113: #{_total_model_forward.1} parent=1 // pred_fallthru
      _
    // Predicated region
    $region114: #{_total_model_forward.1} parent=1 // pred_check
      _
    $region115: #{_total_model_forward.1} parent=1 // pred_check_branch
      %5897 = sbr.rel (0) target = $region117
    $region116: #{_total_model_forward.1} parent=1 // pred_region
      _
    $region117: #{_total_model_forward.1} parent=1 // pred_fallthru
      _
    // Predicated region
    $region118: #{_total_model_forward.1} parent=1 // pred_check
      _
    $region119: #{_total_model_forward.1} parent=1 // pred_check_branch
      %5899 = sbr.rel (0) target = $region121
    $region120: #{_total_model_forward.1} parent=1 // pred_region
      _
    $region121: #{_total_model_forward.1} parent=1 // pred_fallthru
      _
    %5900 = vsyncpa [#allocation3], 1
    %5901 = vsyncpa [#allocation5], 1
    %5902 = vsyncpa [#allocation8], 1
    %5903 = vsyncpa [#allocation11], 1
    %5904 = vsyncpa [#allocation14], 1
    %5905 = vsyncpa [#allocation17], 1

</llo_original>
